<compile_context>
chip_gen: v7x
topology: tpu7x:2x2x1
jax: 0.10.0
libtpu: 0.0.40
codegen_flags: <defaults>
</compile_context>

<pallas_src>
import functools

import jax
import jax.numpy as jnp
from jax import lax
from jax.experimental import pallas as pl
from jax.experimental.pallas import tpu as pltpu


# ---------------------------------------------------------------------------
# In-kernel helpers (operate on traced values; only slices/concats/elementwise)
# ---------------------------------------------------------------------------
def _layer_norm(x, gamma, beta, eps=1e-5):
    # x: [L, D] f32; gamma/beta: [1, D].  torch LayerNorm eps=1e-5.
    mean = jnp.mean(x, axis=-1, keepdims=True)
    var = jnp.mean(jnp.square(x - mean), axis=-1, keepdims=True)
    return (x - mean) * lax.rsqrt(var + eps) * gamma + beta


def _head_split(mat, num_heads):
    """torch `.view(B*H, -1, dph)` row-major head split for ONE batch element.

    mat: [L, D] -> list of H matrices [L, dph].  Implemented with static slices
    + concats only (no minor-dim reshape inside the kernel)."""
    L, D = mat.shape
    dph = D // num_heads
    cpr = D // dph               # head-rows produced per source row (== num_heads)
    rph = L // num_heads         # source rows per head
    heads = []
    for h in range(num_heads):
        rows = []
        for l2 in range(L):
            src_row = h * rph + l2 // cpr
            col0 = (l2 % cpr) * dph
            rows.append(mat[src_row:src_row + 1, col0:col0 + dph])  # [1, dph]
        heads.append(jnp.concatenate(rows, axis=0))                 # [L, dph]
    return heads


def _head_merge(heads):
    """Inverse of _head_split: list of H [L, dph] -> [L, D]
    (torch `context.view(B, -1, dph*H)` for one batch element)."""
    num_heads = len(heads)
    L, dph = heads[0].shape
    D = num_heads * dph
    cpr = D // dph
    rows = []
    for l in range(L):
        pieces = []
        for c in range(cpr):
            flat_row = l * cpr + c
            h = flat_row // L
            l2 = flat_row % L
            pieces.append(heads[h][l2:l2 + 1, :])                   # [1, dph]
        rows.append(jnp.concatenate(pieces, axis=1))                # [1, D]
    return jnp.concatenate(rows, axis=0)                            # [L, D]


# ---------------------------------------------------------------------------
# Fused decoder kernel: one program = (one batch element, one decoder layer)
# ---------------------------------------------------------------------------
def _decoder_kernel(
    # inputs
    x_in_ref, enc_ref, mask_ref,
    wkvq_ref, bkvq_ref, wf_ref, bf_ref, ln1g_ref, ln1b_ref,
    w1_ref, b1_ref, w2_ref, b2_ref, ln2g_ref, ln2b_ref,
    # outputs
    out_ref, sa_ref, ca_ref,
    # scratch
    x_sc,
    *, num_heads, batch_size):
    b = pl.program_id(0)        # batch element ("parallel")
    layer = pl.program_id(1)    # decoder layer ("arbitrary" / sequential)

    L, D = x_sc.shape
    dph = D // num_heads
    scale = float(dph) ** (-0.5)

    # Layer 0: pull this batch element's decoder input into the resident
    # activation scratch; it then stays in VMEM for all subsequent layers.
    @pl.when(layer == 0)
    def _():
        x_sc[...] = x_in_ref[0].astype(jnp.float32)

    # (1 - mask) slab per head, selected from the single shared [B, L, L] mask.
    # torch: attn_mask.repeat(H, 1, 1) => global head bh uses mask[bh % B].
    inv_mask = []
    for h in range(num_heads):
        idx = (b * num_heads + h) % batch_size
        inv_mask.append(1.0 - mask_ref[idx].astype(jnp.float32))    # [L, L]

    wkvq = wkvq_ref[0]          # [D, 3D]  pre-transposed, columns = [K | V | Q]
    bkvq = bkvq_ref[0]          # [1, 3D]
    wf = wf_ref[0]              # [D, D]
    bf = bf_ref[0]              # [1, D]
    ln1_g, ln1_b = ln1g_ref[0], ln1b_ref[0]

    def mha(kv_x, q_x, attn_out_ref, fuse_qkv):
        # Same attention weights for self- and cross-attention, exactly as in
        # the reference DecoderLayer.  kv_x / q_x: [L, D] f32.
        residual = q_x
        if fuse_qkv:                               # key == value == query
            kvq = jnp.dot(kv_x, wkvq, preferred_element_type=jnp.float32) + bkvq
            k, v, q = kvq[:, :D], kvq[:, D:2 * D], kvq[:, 2 * D:]
        else:                                      # key == value != query
            kv = (jnp.dot(kv_x, wkvq[:, :2 * D],
                          preferred_element_type=jnp.float32) + bkvq[:, :2 * D])
            k, v = kv[:, :D], kv[:, D:]
            q = (jnp.dot(q_x, wkvq[:, 2 * D:],
                         preferred_element_type=jnp.float32) + bkvq[:, 2 * D:])

        kh = _head_split(k, num_heads)
        vh = _head_split(v, num_heads)
        qh = _head_split(q, num_heads)

        ctx_heads = []
        for h in range(num_heads):
            # q @ k^T without materializing a transpose: contract on dph.
            s = lax.dot_general(qh[h], kh[h], (((1,), (1,)), ((), ())),
                                preferred_element_type=jnp.float32) * scale
            s = s * inv_mask[h]                    # pre-softmax multiplicative mask
            s = s - jnp.max(s, axis=-1, keepdims=True)
            e = jnp.exp(s)
            attn = e * pl.reciprocal(jnp.sum(e, axis=-1, keepdims=True),
                                     approx=True)
            attn = attn * inv_mask[h]              # post-softmax re-mask
            # TODO(synk): reference's `attention.clamp(min=1e-08)` is not in-place
            # and its result is discarded -> no-op, intentionally omitted.
            attn_out_ref[0, h] = attn.astype(attn_out_ref.dtype)
            ctx_heads.append(jnp.dot(attn, vh[h],
                                     preferred_element_type=jnp.float32))

        ctx = _head_merge(ctx_heads)               # [L, D]
        out = jnp.dot(ctx, wf, preferred_element_type=jnp.float32) + bf
        # dropout(p=0) == identity
        return _layer_norm(residual + out, ln1_g, ln1_b)

    x = x_sc[...]
    enc = enc_ref[0].astype(jnp.float32)

    out1 = mha(x, x, sa_ref, fuse_qkv=True)        # self-attention
    out2 = mha(enc, out1, ca_ref, fuse_qkv=False)  # encoder-decoder attention

    # Position-wise FFN: Conv1d(kernel_size=1) == per-position linear.
    h1 = jnp.maximum(
        jnp.dot(out2, w1_ref[0], preferred_element_type=jnp.float32) + b1_ref[0],
        0.0)
    ffn_out = jnp.dot(h1, w2_ref[0], preferred_element_type=jnp.float32) + b2_ref[0]
    out3 = _layer_norm(out2 + ffn_out, ln2g_ref[0], ln2b_ref[0])

    x_sc[...] = out3                               # feeds the next layer
    out_ref[0] = out3.astype(out_ref.dtype)        # resident across the layer axis


# ---------------------------------------------------------------------------
# Host-side wrapper
# ---------------------------------------------------------------------------
def decoder_forward(prepped, inputs, enc_output, masks, num_heads):
    B, L, D = inputs.shape
    NL = prepped["wkvq"].shape[0]
    F = prepped["w1"].shape[-1]
    H = num_heads
    assert D % H == 0
    # TODO(synk): slice-based head split needs L % H == 0 (holds for this model);
    # general case would need an in-kernel reshape.
    assert L % H == 0

    if masks is None:
        masks = jnp.zeros((B, L, L), inputs.dtype)

    def wspec(*tail):  # per-layer parameter: block = one layer's slice
        return pl.BlockSpec((1,) + tail, lambda b, l, _t=len(tail): (l,) + (0,) * _t)

    kernel = functools.partial(_decoder_kernel, num_heads=H, batch_size=B)

    out, sa, ca = pl.pallas_call(
        kernel,
        grid=(B, NL),
        in_specs=[
            pl.BlockSpec((1, L, D), lambda b, l: (b, 0, 0)),   # decoder inputs
            pl.BlockSpec((1, L, D), lambda b, l: (b, 0, 0)),   # encoder outputs
            pl.BlockSpec((B, L, L), lambda b, l: (0, 0, 0)),   # mask (shared, no H-tiling)
            wspec(D, 3 * D), wspec(1, 3 * D),                  # fused KVQ weight / bias
            wspec(D, D), wspec(1, D),                          # final linear
            wspec(1, D), wspec(1, D),                          # attn LayerNorm gamma/beta
            wspec(D, F), wspec(1, F),                          # FFN w1 / b1
            wspec(F, D), wspec(1, D),                          # FFN w2 / b2
            wspec(1, D), wspec(1, D),                          # FFN LayerNorm gamma/beta
        ],
        out_specs=(
            pl.BlockSpec((1, L, D), lambda b, l: (b, 0, 0)),       # final output
            pl.BlockSpec((1, H, L, L), lambda b, l: (l, b, 0, 0)),  # self-attn probs
            pl.BlockSpec((1, H, L, L), lambda b, l: (l, b, 0, 0)),  # cross-attn probs
        ),
        out_shape=(
            jax.ShapeDtypeStruct((B, L, D), inputs.dtype),
            jax.ShapeDtypeStruct((NL, B * H, L, L), jnp.float32),
            jax.ShapeDtypeStruct((NL, B * H, L, L), jnp.float32),
        ),
        scratch_shapes=[pltpu.VMEM((L, D), jnp.float32)],
        compiler_params=pltpu.CompilerParams(
            dimension_semantics=("parallel", "arbitrary")),
    )(inputs, enc_output, masks,
      prepped["wkvq"], prepped["bkvq"], prepped["wf"], prepped["bf"],
      prepped["ln1_g"], prepped["ln1_b"],
      prepped["w1"], prepped["b1"], prepped["w2"], prepped["b2"],
      prepped["ln2_g"], prepped["ln2_b"])

    self_attentions = [sa[i] for i in range(NL)]
    context_attentions = [ca[i] for i in range(NL)]
    return out, self_attentions, context_attentions


# ---------------------------------------------------------------------------
# Parameters: torch-layout init + one-time prep (stack layers, pre-transpose,
# fuse K/V/Q) so the forward pass never transposes/concatenates weights.
# ---------------------------------------------------------------------------
def init_params(key, num_layers, model_dim, ffn_dim):
    def w(k, shape, fan_in):
        return jax.random.normal(k, shape, jnp.float32) / jnp.sqrt(float(fan_in))

    params = []
    for layer in range(num_layers):
        ks = jax.random.split(jax.random.fold_in(key, layer), 6)
        attn = {
            "wk": w(ks[0], (model_dim, model_dim), model_dim),
            "bk": jnp.zeros((model_dim,), jnp.float32),
            "wv": w(ks[1], (model_dim, model_dim), model_dim),
            "bv": jnp.zeros((model_dim,), jnp.float32),
            "wq": w(ks[2], (model_dim, model_dim), model_dim),
            "bq": jnp.zeros((model_dim,), jnp.float32),
            "wf": w(ks[3], (model_dim, model_dim), model_dim),
            "bf": jnp.zeros((model_dim,), jnp.float32),
            "ln_g": jnp.ones((model_dim,), jnp.float32),
            "ln_b": jnp.zeros((model_dim,), jnp.float32),
        }
        ffn_p = {
            "w1": w(ks[4], (ffn_dim, model_dim), model_dim),
            "b1": jnp.zeros((ffn_dim,), jnp.float32),
            "w2": w(ks[5], (model_dim, ffn_dim), ffn_dim),
            "b2": jnp.zeros((model_dim,), jnp.float32),
            "ln_g": jnp.ones((model_dim,), jnp.float32),
            "ln_b": jnp.zeros((model_dim,), jnp.float32),
        }
        params.append({"attn": attn, "ffn": ffn_p})
    return params


def prepare_decoder_params(params):
    def stack(fn):
        return jnp.stack([fn(p) for p in params], axis=0)

    return {
        "wkvq": stack(lambda p: jnp.concatenate(
            [p["attn"]["wk"].T, p["attn"]["wv"].T, p["attn"]["wq"].T], axis=1)),
        "bkvq": stack(lambda p: jnp.concatenate(
            [p["attn"]["bk"], p["attn"]["bv"], p["attn"]["bq"]])[None, :]),
        "wf": stack(lambda p: p["attn"]["wf"].T),
        "bf": stack(lambda p: p["attn"]["bf"][None, :]),
        "ln1_g": stack(lambda p: p["attn"]["ln_g"][None, :]),
        "ln1_b": stack(lambda p: p["attn"]["ln_b"][None, :]),
        "w1": stack(lambda p: p["ffn"]["w1"].T),
        "b1": stack(lambda p: p["ffn"]["b1"][None, :]),
        "w2": stack(lambda p: p["ffn"]["w2"].T),
        "b2": stack(lambda p: p["ffn"]["b2"][None, :]),
        "ln2_g": stack(lambda p: p["ffn"]["ln_g"][None, :]),
        "ln2_b": stack(lambda p: p["ffn"]["ln_b"][None, :]),
    }


# ---------------------------------------------------------------------------
if __name__ == "__main__":
    NUM_LAYERS = 2
    MODEL_DIM = 32
    NUM_HEADS = 4
    FFN_DIM = 64
    B, L = 2, 8

    root = jax.random.PRNGKey(0)
    k_params, k_in, k_enc, k_mask = jax.random.split(root, 4)

    params = init_params(k_params, NUM_LAYERS, MODEL_DIM, FFN_DIM)
    prepped = prepare_decoder_params(params)          # one-time weight prep
    inputs = jax.random.normal(k_in, (B, L, MODEL_DIM), jnp.float32)
    enc_output = jax.random.normal(k_enc, (B, L, MODEL_DIM), jnp.float32)
    masks = jax.random.bernoulli(k_mask, 0.2, (B, L, L)).astype(jnp.float32)

    output, self_attns, ctx_attns = decoder_forward(
        prepped, inputs, enc_output, masks, NUM_HEADS)

    jax.block_until_ready(output)
    for a in self_attns + ctx_attns:
        jax.block_until_ready(a)

    assert output.shape == (B, L, MODEL_DIM)
    assert len(self_attns) == NUM_LAYERS and len(ctx_attns) == NUM_LAYERS
    assert self_attns[0].shape == (B * NUM_HEADS, L, L)
    print("KERNEL_OK")
</pallas_src>

<mosaic_0001>
module attributes {stable_mosaic.version = 11 : i64} {
  func.func @_decoder_kernel(%arg0: i32, %arg1: i32, %arg2: memref<1x8x32xf32, #tpu.memory_space<vmem>>, %arg3: memref<1x8x32xf32, #tpu.memory_space<vmem>>, %arg4: memref<2x8x8xf32, #tpu.memory_space<vmem>>, %arg5: memref<1x32x96xf32, #tpu.memory_space<vmem>>, %arg6: memref<1x1x96xf32, #tpu.memory_space<vmem>>, %arg7: memref<1x32x32xf32, #tpu.memory_space<vmem>>, %arg8: memref<1x1x32xf32, #tpu.memory_space<vmem>>, %arg9: memref<1x1x32xf32, #tpu.memory_space<vmem>>, %arg10: memref<1x1x32xf32, #tpu.memory_space<vmem>>, %arg11: memref<1x32x64xf32, #tpu.memory_space<vmem>>, %arg12: memref<1x1x64xf32, #tpu.memory_space<vmem>>, %arg13: memref<1x64x32xf32, #tpu.memory_space<vmem>>, %arg14: memref<1x1x32xf32, #tpu.memory_space<vmem>>, %arg15: memref<1x1x32xf32, #tpu.memory_space<vmem>>, %arg16: memref<1x1x32xf32, #tpu.memory_space<vmem>>, %arg17: memref<1x8x32xf32, #tpu.memory_space<vmem>>, %arg18: memref<1x4x8x8xf32, #tpu.memory_space<vmem>>, %arg19: memref<1x4x8x8xf32, #tpu.memory_space<vmem>>, %arg20: memref<8x32xf32, #tpu.memory_space<vmem>>) attributes {dimension_semantics = [#tpu.dimension_semantics<parallel>, #tpu.dimension_semantics<arbitrary>], iteration_bounds = array<i64: 2, 2>, scalar_prefetch = 0 : i64, scratch_operands = 1 : i64, tpu.core_type = #tpu.core_type<tc>, window_params = [{transform_indices = @transform_0, window_bounds = array<i64: 1, 8, 32>}, {transform_indices = @transform_1, window_bounds = array<i64: 1, 8, 32>}, {pipeline_mode = #tpu.pipeline_mode<synchronous>, transform_indices = @transform_2, window_bounds = array<i64: 2, 8, 8>}, {transform_indices = @transform_3, window_bounds = array<i64: 1, 32, 96>}, {transform_indices = @transform_4, window_bounds = array<i64: 1, 1, 96>}, {transform_indices = @transform_5, window_bounds = array<i64: 1, 32, 32>}, {transform_indices = @transform_6, window_bounds = array<i64: 1, 1, 32>}, {transform_indices = @transform_7, window_bounds = array<i64: 1, 1, 32>}, {transform_indices = @transform_8, window_bounds = array<i64: 1, 1, 32>}, {transform_indices = @transform_9, window_bounds = array<i64: 1, 32, 64>}, {transform_indices = @transform_10, window_bounds = array<i64: 1, 1, 64>}, {transform_indices = @transform_11, window_bounds = array<i64: 1, 64, 32>}, {transform_indices = @transform_12, window_bounds = array<i64: 1, 1, 32>}, {transform_indices = @transform_13, window_bounds = array<i64: 1, 1, 32>}, {transform_indices = @transform_14, window_bounds = array<i64: 1, 1, 32>}, {transform_indices = @transform_15, window_bounds = array<i64: 1, 8, 32>}, {transform_indices = @transform_16, window_bounds = array<i64: 1, 4, 8, 8>}, {transform_indices = @transform_17, window_bounds = array<i64: 1, 4, 8, 8>}]} {
    %c0_i32 = arith.constant 0 : i32
    %0 = arith.cmpi eq, %arg1, %c0_i32 : i32
    %1 = arith.extui %0 : i1 to i32
    %c0_i32_0 = arith.constant 0 : i32
    %2 = arith.cmpi ne, %1, %c0_i32_0 : i32
    scf.if %2 {
      %c0_177 = arith.constant 0 : index
      %c0_178 = arith.constant 0 : index
      %c0_179 = arith.constant 0 : index
      %653 = vector.load %arg2[%c0_177, %c0_178, %c0_179] : memref<1x8x32xf32, #tpu.memory_space<vmem>>, vector<1x8x32xf32>
      %654 = vector.shape_cast %653 : vector<1x8x32xf32> to vector<8x32xf32>
      %c0_180 = arith.constant 0 : index
      %c0_181 = arith.constant 0 : index
      %655 = vector.load %arg20[%c0_180, %c0_181] : memref<8x32xf32, #tpu.memory_space<vmem>>, vector<8x32xf32>
      tpu.vector_store %arg20[%c0_180, %c0_181], %654 {strides = array<i32>} : memref<8x32xf32, #tpu.memory_space<vmem>>, vector<8x32xf32>,
    } else {
    }
    %c4_i32 = arith.constant 4 : i32
    %3 = arith.muli %arg0, %c4_i32 : i32
    %c0_i32_1 = arith.constant 0 : i32
    %4 = arith.addi %3, %c0_i32_1 : i32
    %c2_i32 = arith.constant 2 : i32
    %c0_i32_2 = arith.constant 0 : i32
    %5 = arith.cmpi eq, %c2_i32, %c0_i32_2 : i32
    %c1_i32 = arith.constant 1 : i32
    %6 = arith.select %5, %c1_i32, %c2_i32 : i32
    %7 = arith.remsi %4, %6 : i32
    %c0_i32_3 = arith.constant 0 : i32
    %8 = arith.cmpi ne, %7, %c0_i32_3 : i32
    %c0_i32_4 = arith.constant 0 : i32
    %9 = arith.cmpi slt, %7, %c0_i32_4 : i32
    %c0_i32_5 = arith.constant 0 : i32
    %10 = arith.cmpi slt, %6, %c0_i32_5 : i32
    %11 = arith.xori %9, %10 : i1
    %12 = arith.andi %11, %8 : i1
    %13 = arith.addi %7, %6 : i32
    %14 = arith.select %12, %13, %7 : i32
    %15 = arith.index_cast %14 : i32 to index
    %c0 = arith.constant 0 : index
    %c0_6 = arith.constant 0 : index
    %16 = vector.load %arg4[%15, %c0, %c0_6] : memref<2x8x8xf32, #tpu.memory_space<vmem>>, vector<1x8x8xf32>
    %17 = vector.shape_cast %16 : vector<1x8x8xf32> to vector<8x8xf32>
    %cst = arith.constant 1.000000e+00 : f32
    %18 = vector.broadcast %cst : f32 to vector<8x8xf32>
    %19 = arith.subf %18, %17 : vector<8x8xf32>
    %c4_i32_7 = arith.constant 4 : i32
    %20 = arith.muli %arg0, %c4_i32_7 : i32
    %c1_i32_8 = arith.constant 1 : i32
    %21 = arith.addi %20, %c1_i32_8 : i32
    %c2_i32_9 = arith.constant 2 : i32
    %c0_i32_10 = arith.constant 0 : i32
    %22 = arith.cmpi eq, %c2_i32_9, %c0_i32_10 : i32
    %c1_i32_11 = arith.constant 1 : i32
    %23 = arith.select %22, %c1_i32_11, %c2_i32_9 : i32
    %24 = arith.remsi %21, %23 : i32
    %c0_i32_12 = arith.constant 0 : i32
    %25 = arith.cmpi ne, %24, %c0_i32_12 : i32
    %c0_i32_13 = arith.constant 0 : i32
    %26 = arith.cmpi slt, %24, %c0_i32_13 : i32
    %c0_i32_14 = arith.constant 0 : i32
    %27 = arith.cmpi slt, %23, %c0_i32_14 : i32
    %28 = arith.xori %26, %27 : i1
    %29 = arith.andi %28, %25 : i1
    %30 = arith.addi %24, %23 : i32
    %31 = arith.select %29, %30, %24 : i32
    %32 = arith.index_cast %31 : i32 to index
    %c0_15 = arith.constant 0 : index
    %c0_16 = arith.constant 0 : index
    %33 = vector.load %arg4[%32, %c0_15, %c0_16] : memref<2x8x8xf32, #tpu.memory_space<vmem>>, vector<1x8x8xf32>
    %34 = vector.shape_cast %33 : vector<1x8x8xf32> to vector<8x8xf32>
    %cst_17 = arith.constant 1.000000e+00 : f32
    %35 = vector.broadcast %cst_17 : f32 to vector<8x8xf32>
    %36 = arith.subf %35, %34 : vector<8x8xf32>
    %c4_i32_18 = arith.constant 4 : i32
    %37 = arith.muli %arg0, %c4_i32_18 : i32
    %c2_i32_19 = arith.constant 2 : i32
    %38 = arith.addi %37, %c2_i32_19 : i32
    %c2_i32_20 = arith.constant 2 : i32
    %c0_i32_21 = arith.constant 0 : i32
    %39 = arith.cmpi eq, %c2_i32_20, %c0_i32_21 : i32
    %c1_i32_22 = arith.constant 1 : i32
    %40 = arith.select %39, %c1_i32_22, %c2_i32_20 : i32
    %41 = arith.remsi %38, %40 : i32
    %c0_i32_23 = arith.constant 0 : i32
    %42 = arith.cmpi ne, %41, %c0_i32_23 : i32
    %c0_i32_24 = arith.constant 0 : i32
    %43 = arith.cmpi slt, %41, %c0_i32_24 : i32
    %c0_i32_25 = arith.constant 0 : i32
    %44 = arith.cmpi slt, %40, %c0_i32_25 : i32
    %45 = arith.xori %43, %44 : i1
    %46 = arith.andi %45, %42 : i1
    %47 = arith.addi %41, %40 : i32
    %48 = arith.select %46, %47, %41 : i32
    %49 = arith.index_cast %48 : i32 to index
    %c0_26 = arith.constant 0 : index
    %c0_27 = arith.constant 0 : index
    %50 = vector.load %arg4[%49, %c0_26, %c0_27] : memref<2x8x8xf32, #tpu.memory_space<vmem>>, vector<1x8x8xf32>
    %51 = vector.shape_cast %50 : vector<1x8x8xf32> to vector<8x8xf32>
    %cst_28 = arith.constant 1.000000e+00 : f32
    %52 = vector.broadcast %cst_28 : f32 to vector<8x8xf32>
    %53 = arith.subf %52, %51 : vector<8x8xf32>
    %c4_i32_29 = arith.constant 4 : i32
    %54 = arith.muli %arg0, %c4_i32_29 : i32
    %c3_i32 = arith.constant 3 : i32
    %55 = arith.addi %54, %c3_i32 : i32
    %c2_i32_30 = arith.constant 2 : i32
    %c0_i32_31 = arith.constant 0 : i32
    %56 = arith.cmpi eq, %c2_i32_30, %c0_i32_31 : i32
    %c1_i32_32 = arith.constant 1 : i32
    %57 = arith.select %56, %c1_i32_32, %c2_i32_30 : i32
    %58 = arith.remsi %55, %57 : i32
    %c0_i32_33 = arith.constant 0 : i32
    %59 = arith.cmpi ne, %58, %c0_i32_33 : i32
    %c0_i32_34 = arith.constant 0 : i32
    %60 = arith.cmpi slt, %58, %c0_i32_34 : i32
    %c0_i32_35 = arith.constant 0 : i32
    %61 = arith.cmpi slt, %57, %c0_i32_35 : i32
    %62 = arith.xori %60, %61 : i1
    %63 = arith.andi %62, %59 : i1
    %64 = arith.addi %58, %57 : i32
    %65 = arith.select %63, %64, %58 : i32
    %66 = arith.index_cast %65 : i32 to index
    %c0_36 = arith.constant 0 : index
    %c0_37 = arith.constant 0 : index
    %67 = vector.load %arg4[%66, %c0_36, %c0_37] : memref<2x8x8xf32, #tpu.memory_space<vmem>>, vector<1x8x8xf32>
    %68 = vector.shape_cast %67 : vector<1x8x8xf32> to vector<8x8xf32>
    %cst_38 = arith.constant 1.000000e+00 : f32
    %69 = vector.broadcast %cst_38 : f32 to vector<8x8xf32>
    %70 = arith.subf %69, %68 : vector<8x8xf32>
    %c0_39 = arith.constant 0 : index
    %c0_40 = arith.constant 0 : index
    %c0_41 = arith.constant 0 : index
    %71 = vector.load %arg5[%c0_39, %c0_40, %c0_41] : memref<1x32x96xf32, #tpu.memory_space<vmem>>, vector<1x32x96xf32>
    %72 = vector.shape_cast %71 : vector<1x32x96xf32> to vector<32x96xf32>
    %c0_42 = arith.constant 0 : index
    %c0_43 = arith.constant 0 : index
    %c0_44 = arith.constant 0 : index
    %73 = vector.load %arg6[%c0_42, %c0_43, %c0_44] : memref<1x1x96xf32, #tpu.memory_space<vmem>>, vector<1x1x96xf32>
    %74 = vector.shape_cast %73 : vector<1x1x96xf32> to vector<1x96xf32>
    %c0_45 = arith.constant 0 : index
    %c0_46 = arith.constant 0 : index
    %c0_47 = arith.constant 0 : index
    %75 = vector.load %arg7[%c0_45, %c0_46, %c0_47] : memref<1x32x32xf32, #tpu.memory_space<vmem>>, vector<1x32x32xf32>
    %76 = vector.shape_cast %75 : vector<1x32x32xf32> to vector<32x32xf32>
    %c0_48 = arith.constant 0 : index
    %c0_49 = arith.constant 0 : index
    %c0_50 = arith.constant 0 : index
    %77 = vector.load %arg8[%c0_48, %c0_49, %c0_50] : memref<1x1x32xf32, #tpu.memory_space<vmem>>, vector<1x1x32xf32>
    %78 = vector.shape_cast %77 : vector<1x1x32xf32> to vector<1x32xf32>
    %c0_51 = arith.constant 0 : index
    %c0_52 = arith.constant 0 : index
    %c0_53 = arith.constant 0 : index
    %79 = vector.load %arg9[%c0_51, %c0_52, %c0_53] : memref<1x1x32xf32, #tpu.memory_space<vmem>>, vector<1x1x32xf32>
    %80 = vector.shape_cast %79 : vector<1x1x32xf32> to vector<1x32xf32>
    %c0_54 = arith.constant 0 : index
    %c0_55 = arith.constant 0 : index
    %c0_56 = arith.constant 0 : index
    %81 = vector.load %arg10[%c0_54, %c0_55, %c0_56] : memref<1x1x32xf32, #tpu.memory_space<vmem>>, vector<1x1x32xf32>
    %82 = vector.shape_cast %81 : vector<1x1x32xf32> to vector<1x32xf32>
    %c0_57 = arith.constant 0 : index
    %c0_58 = arith.constant 0 : index
    %83 = vector.load %arg20[%c0_57, %c0_58] : memref<8x32xf32, #tpu.memory_space<vmem>>, vector<8x32xf32>
    %c0_59 = arith.constant 0 : index
    %c0_60 = arith.constant 0 : index
    %c0_61 = arith.constant 0 : index
    %84 = vector.load %arg3[%c0_59, %c0_60, %c0_61] : memref<1x8x32xf32, #tpu.memory_space<vmem>>, vector<1x8x32xf32>
    %85 = vector.shape_cast %84 : vector<1x8x32xf32> to vector<8x32xf32>
    %cst_62 = arith.constant dense<0.000000e+00> : vector<8x96xf32>
    %86 = tpu.matmul %83, %72, %cst_62 {dimension_numbers = #tpu.dot_dimension_numbers<[1], [0], [0], [1], [0, 0, 1, 1], [], []>} : vector<8x32xf32>, vector<32x96xf32>, vector<8x96xf32> -> vector<8x96xf32>
    %87 = vector.broadcast %74 : vector<1x96xf32> to vector<8x96xf32>
    %88 = arith.addf %86, %87 : vector<8x96xf32>
    %89 = vector.extract_strided_slice %88 {offsets = [0, 0], sizes = [8, 32], strides = [1, 1]} : vector<8x96xf32> to vector<8x32xf32>
    %90 = vector.extract_strided_slice %88 {offsets = [0, 32], sizes = [8, 32], strides = [1, 1]} : vector<8x96xf32> to vector<8x32xf32>
    %91 = vector.extract_strided_slice %88 {offsets = [0, 64], sizes = [8, 32], strides = [1, 1]} : vector<8x96xf32> to vector<8x32xf32>
    %92 = vector.extract_strided_slice %89 {offsets = [0, 0], sizes = [1, 8], strides = [1, 1]} : vector<8x32xf32> to vector<1x8xf32>
    %93 = vector.extract_strided_slice %89 {offsets = [0, 8], sizes = [1, 8], strides = [1, 1]} : vector<8x32xf32> to vector<1x8xf32>
    %94 = vector.extract_strided_slice %89 {offsets = [0, 16], sizes = [1, 8], strides = [1, 1]} : vector<8x32xf32> to vector<1x8xf32>
    %95 = vector.extract_strided_slice %89 {offsets = [0, 24], sizes = [1, 8], strides = [1, 1]} : vector<8x32xf32> to vector<1x8xf32>
    %96 = vector.extract_strided_slice %89 {offsets = [1, 0], sizes = [1, 8], strides = [1, 1]} : vector<8x32xf32> to vector<1x8xf32>
    %97 = vector.extract_strided_slice %89 {offsets = [1, 8], sizes = [1, 8], strides = [1, 1]} : vector<8x32xf32> to vector<1x8xf32>
    %98 = vector.extract_strided_slice %89 {offsets = [1, 16], sizes = [1, 8], strides = [1, 1]} : vector<8x32xf32> to vector<1x8xf32>
    %99 = vector.extract_strided_slice %89 {offsets = [1, 24], sizes = [1, 8], strides = [1, 1]} : vector<8x32xf32> to vector<1x8xf32>
    %100 = tpu.concatenate %92, %93, %94, %95, %96, %97, %98, %99 in 0 : vector<1x8xf32>, vector<1x8xf32>, vector<1x8xf32>, vector<1x8xf32>, vector<1x8xf32>, vector<1x8xf32>, vector<1x8xf32>, vector<1x8xf32> -> vector<8x8xf32>
    %101 = vector.extract_strided_slice %89 {offsets = [2, 0], sizes = [1, 8], strides = [1, 1]} : vector<8x32xf32> to vector<1x8xf32>
    %102 = vector.extract_strided_slice %89 {offsets = [2, 8], sizes = [1, 8], strides = [1, 1]} : vector<8x32xf32> to vector<1x8xf32>
    %103 = vector.extract_strided_slice %89 {offsets = [2, 16], sizes = [1, 8], strides = [1, 1]} : vector<8x32xf32> to vector<1x8xf32>
    %104 = vector.extract_strided_slice %89 {offsets = [2, 24], sizes = [1, 8], strides = [1, 1]} : vector<8x32xf32> to vector<1x8xf32>
    %105 = vector.extract_strided_slice %89 {offsets = [3, 0], sizes = [1, 8], strides = [1, 1]} : vector<8x32xf32> to vector<1x8xf32>
    %106 = vector.extract_strided_slice %89 {offsets = [3, 8], sizes = [1, 8], strides = [1, 1]} : vector<8x32xf32> to vector<1x8xf32>
    %107 = vector.extract_strided_slice %89 {offsets = [3, 16], sizes = [1, 8], strides = [1, 1]} : vector<8x32xf32> to vector<1x8xf32>
    %108 = vector.extract_strided_slice %89 {offsets = [3, 24], sizes = [1, 8], strides = [1, 1]} : vector<8x32xf32> to vector<1x8xf32>
    %109 = tpu.concatenate %101, %102, %103, %104, %105, %106, %107, %108 in 0 : vector<1x8xf32>, vector<1x8xf32>, vector<1x8xf32>, vector<1x8xf32>, vector<1x8xf32>, vector<1x8xf32>, vector<1x8xf32>, vector<1x8xf32> -> vector<8x8xf32>
    %110 = vector.extract_strided_slice %89 {offsets = [4, 0], sizes = [1, 8], strides = [1, 1]} : vector<8x32xf32> to vector<1x8xf32>
    %111 = vector.extract_strided_slice %89 {offsets = [4, 8], sizes = [1, 8], strides = [1, 1]} : vector<8x32xf32> to vector<1x8xf32>
    %112 = vector.extract_strided_slice %89 {offsets = [4, 16], sizes = [1, 8], strides = [1, 1]} : vector<8x32xf32> to vector<1x8xf32>
    %113 = vector.extract_strided_slice %89 {offsets = [4, 24], sizes = [1, 8], strides = [1, 1]} : vector<8x32xf32> to vector<1x8xf32>
    %114 = vector.extract_strided_slice %89 {offsets = [5, 0], sizes = [1, 8], strides = [1, 1]} : vector<8x32xf32> to vector<1x8xf32>
    %115 = vector.extract_strided_slice %89 {offsets = [5, 8], sizes = [1, 8], strides = [1, 1]} : vector<8x32xf32> to vector<1x8xf32>
    %116 = vector.extract_strided_slice %89 {offsets = [5, 16], sizes = [1, 8], strides = [1, 1]} : vector<8x32xf32> to vector<1x8xf32>
    %117 = vector.extract_strided_slice %89 {offsets = [5, 24], sizes = [1, 8], strides = [1, 1]} : vector<8x32xf32> to vector<1x8xf32>
    %118 = tpu.concatenate %110, %111, %112, %113, %114, %115, %116, %117 in 0 : vector<1x8xf32>, vector<1x8xf32>, vector<1x8xf32>, vector<1x8xf32>, vector<1x8xf32>, vector<1x8xf32>, vector<1x8xf32>, vector<1x8xf32> -> vector<8x8xf32>
    %119 = vector.extract_strided_slice %89 {offsets = [6, 0], sizes = [1, 8], strides = [1, 1]} : vector<8x32xf32> to vector<1x8xf32>
    %120 = vector.extract_strided_slice %89 {offsets = [6, 8], sizes = [1, 8], strides = [1, 1]} : vector<8x32xf32> to vector<1x8xf32>
    %121 = vector.extract_strided_slice %89 {offsets = [6, 16], sizes = [1, 8], strides = [1, 1]} : vector<8x32xf32> to vector<1x8xf32>
    %122 = vector.extract_strided_slice %89 {offsets = [6, 24], sizes = [1, 8], strides = [1, 1]} : vector<8x32xf32> to vector<1x8xf32>
    %123 = vector.extract_strided_slice %89 {offsets = [7, 0], sizes = [1, 8], strides = [1, 1]} : vector<8x32xf32> to vector<1x8xf32>
    %124 = vector.extract_strided_slice %89 {offsets = [7, 8], sizes = [1, 8], strides = [1, 1]} : vector<8x32xf32> to vector<1x8xf32>
    %125 = vector.extract_strided_slice %89 {offsets = [7, 16], sizes = [1, 8], strides = [1, 1]} : vector<8x32xf32> to vector<1x8xf32>
    %126 = vector.extract_strided_slice %89 {offsets = [7, 24], sizes = [1, 8], strides = [1, 1]} : vector<8x32xf32> to vector<1x8xf32>
    %127 = tpu.concatenate %119, %120, %121, %122, %123, %124, %125, %126 in 0 : vector<1x8xf32>, vector<1x8xf32>, vector<1x8xf32>, vector<1x8xf32>, vector<1x8xf32>, vector<1x8xf32>, vector<1x8xf32>, vector<1x8xf32> -> vector<8x8xf32>
    %128 = vector.extract_strided_slice %90 {offsets = [0, 0], sizes = [1, 8], strides = [1, 1]} : vector<8x32xf32> to vector<1x8xf32>
    %129 = vector.extract_strided_slice %90 {offsets = [0, 8], sizes = [1, 8], strides = [1, 1]} : vector<8x32xf32> to vector<1x8xf32>
    %130 = vector.extract_strided_slice %90 {offsets = [0, 16], sizes = [1, 8], strides = [1, 1]} : vector<8x32xf32> to vector<1x8xf32>
    %131 = vector.extract_strided_slice %90 {offsets = [0, 24], sizes = [1, 8], strides = [1, 1]} : vector<8x32xf32> to vector<1x8xf32>
    %132 = vector.extract_strided_slice %90 {offsets = [1, 0], sizes = [1, 8], strides = [1, 1]} : vector<8x32xf32> to vector<1x8xf32>
    %133 = vector.extract_strided_slice %90 {offsets = [1, 8], sizes = [1, 8], strides = [1, 1]} : vector<8x32xf32> to vector<1x8xf32>
    %134 = vector.extract_strided_slice %90 {offsets = [1, 16], sizes = [1, 8], strides = [1, 1]} : vector<8x32xf32> to vector<1x8xf32>
    %135 = vector.extract_strided_slice %90 {offsets = [1, 24], sizes = [1, 8], strides = [1, 1]} : vector<8x32xf32> to vector<1x8xf32>
    %136 = tpu.concatenate %128, %129, %130, %131, %132, %133, %134, %135 in 0 : vector<1x8xf32>, vector<1x8xf32>, vector<1x8xf32>, vector<1x8xf32>, vector<1x8xf32>, vector<1x8xf32>, vector<1x8xf32>, vector<1x8xf32> -> vector<8x8xf32>
    %137 = vector.extract_strided_slice %90 {offsets = [2, 0], sizes = [1, 8], strides = [1, 1]} : vector<8x32xf32> to vector<1x8xf32>
    %138 = vector.extract_strided_slice %90 {offsets = [2, 8], sizes = [1, 8], strides = [1, 1]} : vector<8x32xf32> to vector<1x8xf32>
    %139 = vector.extract_strided_slice %90 {offsets = [2, 16], sizes = [1, 8], strides = [1, 1]} : vector<8x32xf32> to vector<1x8xf32>
    %140 = vector.extract_strided_slice %90 {offsets = [2, 24], sizes = [1, 8], strides = [1, 1]} : vector<8x32xf32> to vector<1x8xf32>
    %141 = vector.extract_strided_slice %90 {offsets = [3, 0], sizes = [1, 8], strides = [1, 1]} : vector<8x32xf32> to vector<1x8xf32>
    %142 = vector.extract_strided_slice %90 {offsets = [3, 8], sizes = [1, 8], strides = [1, 1]} : vector<8x32xf32> to vector<1x8xf32>
    %143 = vector.extract_strided_slice %90 {offsets = [3, 16], sizes = [1, 8], strides = [1, 1]} : vector<8x32xf32> to vector<1x8xf32>
    %144 = vector.extract_strided_slice %90 {offsets = [3, 24], sizes = [1, 8], strides = [1, 1]} : vector<8x32xf32> to vector<1x8xf32>
    %145 = tpu.concatenate %137, %138, %139, %140, %141, %142, %143, %144 in 0 : vector<1x8xf32>, vector<1x8xf32>, vector<1x8xf32>, vector<1x8xf32>, vector<1x8xf32>, vector<1x8xf32>, vector<1x8xf32>, vector<1x8xf32> -> vector<8x8xf32>
    %146 = vector.extract_strided_slice %90 {offsets = [4, 0], sizes = [1, 8], strides = [1, 1]} : vector<8x32xf32> to vector<1x8xf32>
    %147 = vector.extract_strided_slice %90 {offsets = [4, 8], sizes = [1, 8], strides = [1, 1]} : vector<8x32xf32> to vector<1x8xf32>
    %148 = vector.extract_strided_slice %90 {offsets = [4, 16], sizes = [1, 8], strides = [1, 1]} : vector<8x32xf32> to vector<1x8xf32>
    %149 = vector.extract_strided_slice %90 {offsets = [4, 24], sizes = [1, 8], strides = [1, 1]} : vector<8x32xf32> to vector<1x8xf32>
    %150 = vector.extract_strided_slice %90 {offsets = [5, 0], sizes = [1, 8], strides = [1, 1]} : vector<8x32xf32> to vector<1x8xf32>
    %151 = vector.extract_strided_slice %90 {offsets = [5, 8], sizes = [1, 8], strides = [1, 1]} : vector<8x32xf32> to vector<1x8xf32>
    %152 = vector.extract_strided_slice %90 {offsets = [5, 16], sizes = [1, 8], strides = [1, 1]} : vector<8x32xf32> to vector<1x8xf32>
    %153 = vector.extract_strided_slice %90 {offsets = [5, 24], sizes = [1, 8], strides = [1, 1]} : vector<8x32xf32> to vector<1x8xf32>
    %154 = tpu.concatenate %146, %147, %148, %149, %150, %151, %152, %153 in 0 : vector<1x8xf32>, vector<1x8xf32>, vector<1x8xf32>, vector<1x8xf32>, vector<1x8xf32>, vector<1x8xf32>, vector<1x8xf32>, vector<1x8xf32> -> vector<8x8xf32>
    %155 = vector.extract_strided_slice %90 {offsets = [6, 0], sizes = [1, 8], strides = [1, 1]} : vector<8x32xf32> to vector<1x8xf32>
    %156 = vector.extract_strided_slice %90 {offsets = [6, 8], sizes = [1, 8], strides = [1, 1]} : vector<8x32xf32> to vector<1x8xf32>
    %157 = vector.extract_strided_slice %90 {offsets = [6, 16], sizes = [1, 8], strides = [1, 1]} : vector<8x32xf32> to vector<1x8xf32>
    %158 = vector.extract_strided_slice %90 {offsets = [6, 24], sizes = [1, 8], strides = [1, 1]} : vector<8x32xf32> to vector<1x8xf32>
    %159 = vector.extract_strided_slice %90 {offsets = [7, 0], sizes = [1, 8], strides = [1, 1]} : vector<8x32xf32> to vector<1x8xf32>
    %160 = vector.extract_strided_slice %90 {offsets = [7, 8], sizes = [1, 8], strides = [1, 1]} : vector<8x32xf32> to vector<1x8xf32>
    %161 = vector.extract_strided_slice %90 {offsets = [7, 16], sizes = [1, 8], strides = [1, 1]} : vector<8x32xf32> to vector<1x8xf32>
    %162 = vector.extract_strided_slice %90 {offsets = [7, 24], sizes = [1, 8], strides = [1, 1]} : vector<8x32xf32> to vector<1x8xf32>
    %163 = tpu.concatenate %155, %156, %157, %158, %159, %160, %161, %162 in 0 : vector<1x8xf32>, vector<1x8xf32>, vector<1x8xf32>, vector<1x8xf32>, vector<1x8xf32>, vector<1x8xf32>, vector<1x8xf32>, vector<1x8xf32> -> vector<8x8xf32>
    %164 = vector.extract_strided_slice %91 {offsets = [0, 0], sizes = [1, 8], strides = [1, 1]} : vector<8x32xf32> to vector<1x8xf32>
    %165 = vector.extract_strided_slice %91 {offsets = [0, 8], sizes = [1, 8], strides = [1, 1]} : vector<8x32xf32> to vector<1x8xf32>
    %166 = vector.extract_strided_slice %91 {offsets = [0, 16], sizes = [1, 8], strides = [1, 1]} : vector<8x32xf32> to vector<1x8xf32>
    %167 = vector.extract_strided_slice %91 {offsets = [0, 24], sizes = [1, 8], strides = [1, 1]} : vector<8x32xf32> to vector<1x8xf32>
    %168 = vector.extract_strided_slice %91 {offsets = [1, 0], sizes = [1, 8], strides = [1, 1]} : vector<8x32xf32> to vector<1x8xf32>
    %169 = vector.extract_strided_slice %91 {offsets = [1, 8], sizes = [1, 8], strides = [1, 1]} : vector<8x32xf32> to vector<1x8xf32>
    %170 = vector.extract_strided_slice %91 {offsets = [1, 16], sizes = [1, 8], strides = [1, 1]} : vector<8x32xf32> to vector<1x8xf32>
    %171 = vector.extract_strided_slice %91 {offsets = [1, 24], sizes = [1, 8], strides = [1, 1]} : vector<8x32xf32> to vector<1x8xf32>
    %172 = tpu.concatenate %164, %165, %166, %167, %168, %169, %170, %171 in 0 : vector<1x8xf32>, vector<1x8xf32>, vector<1x8xf32>, vector<1x8xf32>, vector<1x8xf32>, vector<1x8xf32>, vector<1x8xf32>, vector<1x8xf32> -> vector<8x8xf32>
    %173 = vector.extract_strided_slice %91 {offsets = [2, 0], sizes = [1, 8], strides = [1, 1]} : vector<8x32xf32> to vector<1x8xf32>
    %174 = vector.extract_strided_slice %91 {offsets = [2, 8], sizes = [1, 8], strides = [1, 1]} : vector<8x32xf32> to vector<1x8xf32>
    %175 = vector.extract_strided_slice %91 {offsets = [2, 16], sizes = [1, 8], strides = [1, 1]} : vector<8x32xf32> to vector<1x8xf32>
    %176 = vector.extract_strided_slice %91 {offsets = [2, 24], sizes = [1, 8], strides = [1, 1]} : vector<8x32xf32> to vector<1x8xf32>
    %177 = vector.extract_strided_slice %91 {offsets = [3, 0], sizes = [1, 8], strides = [1, 1]} : vector<8x32xf32> to vector<1x8xf32>
    %178 = vector.extract_strided_slice %91 {offsets = [3, 8], sizes = [1, 8], strides = [1, 1]} : vector<8x32xf32> to vector<1x8xf32>
    %179 = vector.extract_strided_slice %91 {offsets = [3, 16], sizes = [1, 8], strides = [1, 1]} : vector<8x32xf32> to vector<1x8xf32>
    %180 = vector.extract_strided_slice %91 {offsets = [3, 24], sizes = [1, 8], strides = [1, 1]} : vector<8x32xf32> to vector<1x8xf32>
    %181 = tpu.concatenate %173, %174, %175, %176, %177, %178, %179, %180 in 0 : vector<1x8xf32>, vector<1x8xf32>, vector<1x8xf32>, vector<1x8xf32>, vector<1x8xf32>, vector<1x8xf32>, vector<1x8xf32>, vector<1x8xf32> -> vector<8x8xf32>
    %182 = vector.extract_strided_slice %91 {offsets = [4, 0], sizes = [1, 8], strides = [1, 1]} : vector<8x32xf32> to vector<1x8xf32>
    %183 = vector.extract_strided_slice %91 {offsets = [4, 8], sizes = [1, 8], strides = [1, 1]} : vector<8x32xf32> to vector<1x8xf32>
    %184 = vector.extract_strided_slice %91 {offsets = [4, 16], sizes = [1, 8], strides = [1, 1]} : vector<8x32xf32> to vector<1x8xf32>
    %185 = vector.extract_strided_slice %91 {offsets = [4, 24], sizes = [1, 8], strides = [1, 1]} : vector<8x32xf32> to vector<1x8xf32>
    %186 = vector.extract_strided_slice %91 {offsets = [5, 0], sizes = [1, 8], strides = [1, 1]} : vector<8x32xf32> to vector<1x8xf32>
    %187 = vector.extract_strided_slice %91 {offsets = [5, 8], sizes = [1, 8], strides = [1, 1]} : vector<8x32xf32> to vector<1x8xf32>
    %188 = vector.extract_strided_slice %91 {offsets = [5, 16], sizes = [1, 8], strides = [1, 1]} : vector<8x32xf32> to vector<1x8xf32>
    %189 = vector.extract_strided_slice %91 {offsets = [5, 24], sizes = [1, 8], strides = [1, 1]} : vector<8x32xf32> to vector<1x8xf32>
    %190 = tpu.concatenate %182, %183, %184, %185, %186, %187, %188, %189 in 0 : vector<1x8xf32>, vector<1x8xf32>, vector<1x8xf32>, vector<1x8xf32>, vector<1x8xf32>, vector<1x8xf32>, vector<1x8xf32>, vector<1x8xf32> -> vector<8x8xf32>
    %191 = vector.extract_strided_slice %91 {offsets = [6, 0], sizes = [1, 8], strides = [1, 1]} : vector<8x32xf32> to vector<1x8xf32>
    %192 = vector.extract_strided_slice %91 {offsets = [6, 8], sizes = [1, 8], strides = [1, 1]} : vector<8x32xf32> to vector<1x8xf32>
    %193 = vector.extract_strided_slice %91 {offsets = [6, 16], sizes = [1, 8], strides = [1, 1]} : vector<8x32xf32> to vector<1x8xf32>
    %194 = vector.extract_strided_slice %91 {offsets = [6, 24], sizes = [1, 8], strides = [1, 1]} : vector<8x32xf32> to vector<1x8xf32>
    %195 = vector.extract_strided_slice %91 {offsets = [7, 0], sizes = [1, 8], strides = [1, 1]} : vector<8x32xf32> to vector<1x8xf32>
    %196 = vector.extract_strided_slice %91 {offsets = [7, 8], sizes = [1, 8], strides = [1, 1]} : vector<8x32xf32> to vector<1x8xf32>
    %197 = vector.extract_strided_slice %91 {offsets = [7, 16], sizes = [1, 8], strides = [1, 1]} : vector<8x32xf32> to vector<1x8xf32>
    %198 = vector.extract_strided_slice %91 {offsets = [7, 24], sizes = [1, 8], strides = [1, 1]} : vector<8x32xf32> to vector<1x8xf32>
    %199 = tpu.concatenate %191, %192, %193, %194, %195, %196, %197, %198 in 0 : vector<1x8xf32>, vector<1x8xf32>, vector<1x8xf32>, vector<1x8xf32>, vector<1x8xf32>, vector<1x8xf32>, vector<1x8xf32>, vector<1x8xf32> -> vector<8x8xf32>
    %cst_63 = arith.constant dense<0.000000e+00> : vector<8x8xf32>
    %200 = tpu.matmul %172, %100, %cst_63 {dimension_numbers = #tpu.dot_dimension_numbers<[1], [1], [0], [0], [0, 0, 1, 0], [], []>} : vector<8x8xf32>, vector<8x8xf32>, vector<8x8xf32> -> vector<8x8xf32>
    %cst_64 = arith.constant 0.353553385 : f32
    %201 = vector.broadcast %cst_64 : f32 to vector<8x8xf32>
    %202 = arith.mulf %200, %201 : vector<8x8xf32>
    %203 = arith.mulf %202, %19 : vector<8x8xf32>
    %cst_65 = arith.constant dense<0xFF800000> : vector<8xf32>
    %204 = vector.multi_reduction <maximumf>, %203, %cst_65 [1] : vector<8x8xf32> to vector<8xf32>
    %205 = vector.shape_cast %204 : vector<8xf32> to vector<8x1xf32>
    %206 = vector.broadcast %205 : vector<8x1xf32> to vector<8x8xf32>
    %207 = arith.subf %203, %206 : vector<8x8xf32>
    %208 = math.exp %207 : vector<8x8xf32>
    %cst_66 = arith.constant dense<0.000000e+00> : vector<8xf32>
    %209 = vector.multi_reduction <add>, %208, %cst_66 [1] : vector<8x8xf32> to vector<8xf32>
    %210 = vector.shape_cast %209 : vector<8xf32> to vector<8x1xf32>
    %211 = tpu.reciprocal %210 {approx = true} : vector<8x1xf32> -> vector<8x1xf32>
    %212 = vector.broadcast %211 : vector<8x1xf32> to vector<8x8xf32>
    %213 = arith.mulf %208, %212 : vector<8x8xf32>
    %214 = arith.mulf %213, %19 : vector<8x8xf32>
    %c0_67 = arith.constant 0 : index
    %c0_68 = arith.constant 0 : index
    %c0_69 = arith.constant 0 : index
    %c0_70 = arith.constant 0 : index
    %215 = vector.load %arg18[%c0_67, %c0_68, %c0_69, %c0_70] : memref<1x4x8x8xf32, #tpu.memory_space<vmem>>, vector<1x1x8x8xf32>
    %216 = vector.shape_cast %215 : vector<1x1x8x8xf32> to vector<8x8xf32>
    %217 = vector.shape_cast %214 : vector<8x8xf32> to vector<1x1x8x8xf32>
    tpu.vector_store %arg18[%c0_67, %c0_68, %c0_69, %c0_70], %217 {strides = array<i32>} : memref<1x4x8x8xf32, #tpu.memory_space<vmem>>, vector<1x1x8x8xf32>,
    %cst_71 = arith.constant dense<0.000000e+00> : vector<8x8xf32>
    %218 = tpu.matmul %214, %136, %cst_71 {dimension_numbers = #tpu.dot_dimension_numbers<[1], [0], [0], [1], [0, 0, 1, 1], [], []>} : vector<8x8xf32>, vector<8x8xf32>, vector<8x8xf32> -> vector<8x8xf32>
    %cst_72 = arith.constant dense<0.000000e+00> : vector<8x8xf32>
    %219 = tpu.matmul %181, %109, %cst_72 {dimension_numbers = #tpu.dot_dimension_numbers<[1], [1], [0], [0], [0, 0, 1, 0], [], []>} : vector<8x8xf32>, vector<8x8xf32>, vector<8x8xf32> -> vector<8x8xf32>
    %cst_73 = arith.constant 0.353553385 : f32
    %220 = vector.broadcast %cst_73 : f32 to vector<8x8xf32>
    %221 = arith.mulf %219, %220 : vector<8x8xf32>
    %222 = arith.mulf %221, %36 : vector<8x8xf32>
    %cst_74 = arith.constant dense<0xFF800000> : vector<8xf32>
    %223 = vector.multi_reduction <maximumf>, %222, %cst_74 [1] : vector<8x8xf32> to vector<8xf32>
    %224 = vector.shape_cast %223 : vector<8xf32> to vector<8x1xf32>
    %225 = vector.broadcast %224 : vector<8x1xf32> to vector<8x8xf32>
    %226 = arith.subf %222, %225 : vector<8x8xf32>
    %227 = math.exp %226 : vector<8x8xf32>
    %cst_75 = arith.constant dense<0.000000e+00> : vector<8xf32>
    %228 = vector.multi_reduction <add>, %227, %cst_75 [1] : vector<8x8xf32> to vector<8xf32>
    %229 = vector.shape_cast %228 : vector<8xf32> to vector<8x1xf32>
    %230 = tpu.reciprocal %229 {approx = true} : vector<8x1xf32> -> vector<8x1xf32>
    %231 = vector.broadcast %230 : vector<8x1xf32> to vector<8x8xf32>
    %232 = arith.mulf %227, %231 : vector<8x8xf32>
    %233 = arith.mulf %232, %36 : vector<8x8xf32>
    %c0_76 = arith.constant 0 : index
    %c1 = arith.constant 1 : index
    %c0_77 = arith.constant 0 : index
    %c0_78 = arith.constant 0 : index
    %234 = vector.load %arg18[%c0_76, %c1, %c0_77, %c0_78] : memref<1x4x8x8xf32, #tpu.memory_space<vmem>>, vector<1x1x8x8xf32>
    %235 = vector.shape_cast %234 : vector<1x1x8x8xf32> to vector<8x8xf32>
    %236 = vector.shape_cast %233 : vector<8x8xf32> to vector<1x1x8x8xf32>
    tpu.vector_store %arg18[%c0_76, %c1, %c0_77, %c0_78], %236 {strides = array<i32>} : memref<1x4x8x8xf32, #tpu.memory_space<vmem>>, vector<1x1x8x8xf32>,
    %cst_79 = arith.constant dense<0.000000e+00> : vector<8x8xf32>
    %237 = tpu.matmul %233, %145, %cst_79 {dimension_numbers = #tpu.dot_dimension_numbers<[1], [0], [0], [1], [0, 0, 1, 1], [], []>} : vector<8x8xf32>, vector<8x8xf32>, vector<8x8xf32> -> vector<8x8xf32>
    %cst_80 = arith.constant dense<0.000000e+00> : vector<8x8xf32>
    %238 = tpu.matmul %190, %118, %cst_80 {dimension_numbers = #tpu.dot_dimension_numbers<[1], [1], [0], [0], [0, 0, 1, 0], [], []>} : vector<8x8xf32>, vector<8x8xf32>, vector<8x8xf32> -> vector<8x8xf32>
    %cst_81 = arith.constant 0.353553385 : f32
    %239 = vector.broadcast %cst_81 : f32 to vector<8x8xf32>
    %240 = arith.mulf %238, %239 : vector<8x8xf32>
    %241 = arith.mulf %240, %53 : vector<8x8xf32>
    %cst_82 = arith.constant dense<0xFF800000> : vector<8xf32>
    %242 = vector.multi_reduction <maximumf>, %241, %cst_82 [1] : vector<8x8xf32> to vector<8xf32>
    %243 = vector.shape_cast %242 : vector<8xf32> to vector<8x1xf32>
    %244 = vector.broadcast %243 : vector<8x1xf32> to vector<8x8xf32>
    %245 = arith.subf %241, %244 : vector<8x8xf32>
    %246 = math.exp %245 : vector<8x8xf32>
    %cst_83 = arith.constant dense<0.000000e+00> : vector<8xf32>
    %247 = vector.multi_reduction <add>, %246, %cst_83 [1] : vector<8x8xf32> to vector<8xf32>
    %248 = vector.shape_cast %247 : vector<8xf32> to vector<8x1xf32>
    %249 = tpu.reciprocal %248 {approx = true} : vector<8x1xf32> -> vector<8x1xf32>
    %250 = vector.broadcast %249 : vector<8x1xf32> to vector<8x8xf32>
    %251 = arith.mulf %246, %250 : vector<8x8xf32>
    %252 = arith.mulf %251, %53 : vector<8x8xf32>
    %c0_84 = arith.constant 0 : index
    %c2 = arith.constant 2 : index
    %c0_85 = arith.constant 0 : index
    %c0_86 = arith.constant 0 : index
    %253 = vector.load %arg18[%c0_84, %c2, %c0_85, %c0_86] : memref<1x4x8x8xf32, #tpu.memory_space<vmem>>, vector<1x1x8x8xf32>
    %254 = vector.shape_cast %253 : vector<1x1x8x8xf32> to vector<8x8xf32>
    %255 = vector.shape_cast %252 : vector<8x8xf32> to vector<1x1x8x8xf32>
    tpu.vector_store %arg18[%c0_84, %c2, %c0_85, %c0_86], %255 {strides = array<i32>} : memref<1x4x8x8xf32, #tpu.memory_space<vmem>>, vector<1x1x8x8xf32>,
    %cst_87 = arith.constant dense<0.000000e+00> : vector<8x8xf32>
    %256 = tpu.matmul %252, %154, %cst_87 {dimension_numbers = #tpu.dot_dimension_numbers<[1], [0], [0], [1], [0, 0, 1, 1], [], []>} : vector<8x8xf32>, vector<8x8xf32>, vector<8x8xf32> -> vector<8x8xf32>
    %cst_88 = arith.constant dense<0.000000e+00> : vector<8x8xf32>
    %257 = tpu.matmul %199, %127, %cst_88 {dimension_numbers = #tpu.dot_dimension_numbers<[1], [1], [0], [0], [0, 0, 1, 0], [], []>} : vector<8x8xf32>, vector<8x8xf32>, vector<8x8xf32> -> vector<8x8xf32>
    %cst_89 = arith.constant 0.353553385 : f32
    %258 = vector.broadcast %cst_89 : f32 to vector<8x8xf32>
    %259 = arith.mulf %257, %258 : vector<8x8xf32>
    %260 = arith.mulf %259, %70 : vector<8x8xf32>
    %cst_90 = arith.constant dense<0xFF800000> : vector<8xf32>
    %261 = vector.multi_reduction <maximumf>, %260, %cst_90 [1] : vector<8x8xf32> to vector<8xf32>
    %262 = vector.shape_cast %261 : vector<8xf32> to vector<8x1xf32>
    %263 = vector.broadcast %262 : vector<8x1xf32> to vector<8x8xf32>
    %264 = arith.subf %260, %263 : vector<8x8xf32>
    %265 = math.exp %264 : vector<8x8xf32>
    %cst_91 = arith.constant dense<0.000000e+00> : vector<8xf32>
    %266 = vector.multi_reduction <add>, %265, %cst_91 [1] : vector<8x8xf32> to vector<8xf32>
    %267 = vector.shape_cast %266 : vector<8xf32> to vector<8x1xf32>
    %268 = tpu.reciprocal %267 {approx = true} : vector<8x1xf32> -> vector<8x1xf32>
    %269 = vector.broadcast %268 : vector<8x1xf32> to vector<8x8xf32>
    %270 = arith.mulf %265, %269 : vector<8x8xf32>
    %271 = arith.mulf %270, %70 : vector<8x8xf32>
    %c0_92 = arith.constant 0 : index
    %c3 = arith.constant 3 : index
    %c0_93 = arith.constant 0 : index
    %c0_94 = arith.constant 0 : index
    %272 = vector.load %arg18[%c0_92, %c3, %c0_93, %c0_94] : memref<1x4x8x8xf32, #tpu.memory_space<vmem>>, vector<1x1x8x8xf32>
    %273 = vector.shape_cast %272 : vector<1x1x8x8xf32> to vector<8x8xf32>
    %274 = vector.shape_cast %271 : vector<8x8xf32> to vector<1x1x8x8xf32>
    tpu.vector_store %arg18[%c0_92, %c3, %c0_93, %c0_94], %274 {strides = array<i32>} : memref<1x4x8x8xf32, #tpu.memory_space<vmem>>, vector<1x1x8x8xf32>,
    %cst_95 = arith.constant dense<0.000000e+00> : vector<8x8xf32>
    %275 = tpu.matmul %271, %163, %cst_95 {dimension_numbers = #tpu.dot_dimension_numbers<[1], [0], [0], [1], [0, 0, 1, 1], [], []>} : vector<8x8xf32>, vector<8x8xf32>, vector<8x8xf32> -> vector<8x8xf32>
    %276 = vector.extract_strided_slice %218 {offsets = [0, 0], sizes = [1, 8], strides = [1, 1]} : vector<8x8xf32> to vector<1x8xf32>
    %277 = vector.extract_strided_slice %218 {offsets = [1, 0], sizes = [1, 8], strides = [1, 1]} : vector<8x8xf32> to vector<1x8xf32>
    %278 = vector.extract_strided_slice %218 {offsets = [2, 0], sizes = [1, 8], strides = [1, 1]} : vector<8x8xf32> to vector<1x8xf32>
    %279 = vector.extract_strided_slice %218 {offsets = [3, 0], sizes = [1, 8], strides = [1, 1]} : vector<8x8xf32> to vector<1x8xf32>
    %280 = tpu.concatenate %276, %277, %278, %279 in 1 : vector<1x8xf32>, vector<1x8xf32>, vector<1x8xf32>, vector<1x8xf32> -> vector<1x32xf32>
    %281 = vector.extract_strided_slice %218 {offsets = [4, 0], sizes = [1, 8], strides = [1, 1]} : vector<8x8xf32> to vector<1x8xf32>
    %282 = vector.extract_strided_slice %218 {offsets = [5, 0], sizes = [1, 8], strides = [1, 1]} : vector<8x8xf32> to vector<1x8xf32>
    %283 = vector.extract_strided_slice %218 {offsets = [6, 0], sizes = [1, 8], strides = [1, 1]} : vector<8x8xf32> to vector<1x8xf32>
    %284 = vector.extract_strided_slice %218 {offsets = [7, 0], sizes = [1, 8], strides = [1, 1]} : vector<8x8xf32> to vector<1x8xf32>
    %285 = tpu.concatenate %281, %282, %283, %284 in 1 : vector<1x8xf32>, vector<1x8xf32>, vector<1x8xf32>, vector<1x8xf32> -> vector<1x32xf32>
    %286 = vector.extract_strided_slice %237 {offsets = [0, 0], sizes = [1, 8], strides = [1, 1]} : vector<8x8xf32> to vector<1x8xf32>
    %287 = vector.extract_strided_slice %237 {offsets = [1, 0], sizes = [1, 8], strides = [1, 1]} : vector<8x8xf32> to vector<1x8xf32>
    %288 = vector.extract_strided_slice %237 {offsets = [2, 0], sizes = [1, 8], strides = [1, 1]} : vector<8x8xf32> to vector<1x8xf32>
    %289 = vector.extract_strided_slice %237 {offsets = [3, 0], sizes = [1, 8], strides = [1, 1]} : vector<8x8xf32> to vector<1x8xf32>
    %290 = tpu.concatenate %286, %287, %288, %289 in 1 : vector<1x8xf32>, vector<1x8xf32>, vector<1x8xf32>, vector<1x8xf32> -> vector<1x32xf32>
    %291 = vector.extract_strided_slice %237 {offsets = [4, 0], sizes = [1, 8], strides = [1, 1]} : vector<8x8xf32> to vector<1x8xf32>
    %292 = vector.extract_strided_slice %237 {offsets = [5, 0], sizes = [1, 8], strides = [1, 1]} : vector<8x8xf32> to vector<1x8xf32>
    %293 = vector.extract_strided_slice %237 {offsets = [6, 0], sizes = [1, 8], strides = [1, 1]} : vector<8x8xf32> to vector<1x8xf32>
    %294 = vector.extract_strided_slice %237 {offsets = [7, 0], sizes = [1, 8], strides = [1, 1]} : vector<8x8xf32> to vector<1x8xf32>
    %295 = tpu.concatenate %291, %292, %293, %294 in 1 : vector<1x8xf32>, vector<1x8xf32>, vector<1x8xf32>, vector<1x8xf32> -> vector<1x32xf32>
    %296 = vector.extract_strided_slice %256 {offsets = [0, 0], sizes = [1, 8], strides = [1, 1]} : vector<8x8xf32> to vector<1x8xf32>
    %297 = vector.extract_strided_slice %256 {offsets = [1, 0], sizes = [1, 8], strides = [1, 1]} : vector<8x8xf32> to vector<1x8xf32>
    %298 = vector.extract_strided_slice %256 {offsets = [2, 0], sizes = [1, 8], strides = [1, 1]} : vector<8x8xf32> to vector<1x8xf32>
    %299 = vector.extract_strided_slice %256 {offsets = [3, 0], sizes = [1, 8], strides = [1, 1]} : vector<8x8xf32> to vector<1x8xf32>
    %300 = tpu.concatenate %296, %297, %298, %299 in 1 : vector<1x8xf32>, vector<1x8xf32>, vector<1x8xf32>, vector<1x8xf32> -> vector<1x32xf32>
    %301 = vector.extract_strided_slice %256 {offsets = [4, 0], sizes = [1, 8], strides = [1, 1]} : vector<8x8xf32> to vector<1x8xf32>
    %302 = vector.extract_strided_slice %256 {offsets = [5, 0], sizes = [1, 8], strides = [1, 1]} : vector<8x8xf32> to vector<1x8xf32>
    %303 = vector.extract_strided_slice %256 {offsets = [6, 0], sizes = [1, 8], strides = [1, 1]} : vector<8x8xf32> to vector<1x8xf32>
    %304 = vector.extract_strided_slice %256 {offsets = [7, 0], sizes = [1, 8], strides = [1, 1]} : vector<8x8xf32> to vector<1x8xf32>
    %305 = tpu.concatenate %301, %302, %303, %304 in 1 : vector<1x8xf32>, vector<1x8xf32>, vector<1x8xf32>, vector<1x8xf32> -> vector<1x32xf32>
    %306 = vector.extract_strided_slice %275 {offsets = [0, 0], sizes = [1, 8], strides = [1, 1]} : vector<8x8xf32> to vector<1x8xf32>
    %307 = vector.extract_strided_slice %275 {offsets = [1, 0], sizes = [1, 8], strides = [1, 1]} : vector<8x8xf32> to vector<1x8xf32>
    %308 = vector.extract_strided_slice %275 {offsets = [2, 0], sizes = [1, 8], strides = [1, 1]} : vector<8x8xf32> to vector<1x8xf32>
    %309 = vector.extract_strided_slice %275 {offsets = [3, 0], sizes = [1, 8], strides = [1, 1]} : vector<8x8xf32> to vector<1x8xf32>
    %310 = tpu.concatenate %306, %307, %308, %309 in 1 : vector<1x8xf32>, vector<1x8xf32>, vector<1x8xf32>, vector<1x8xf32> -> vector<1x32xf32>
    %311 = vector.extract_strided_slice %275 {offsets = [4, 0], sizes = [1, 8], strides = [1, 1]} : vector<8x8xf32> to vector<1x8xf32>
    %312 = vector.extract_strided_slice %275 {offsets = [5, 0], sizes = [1, 8], strides = [1, 1]} : vector<8x8xf32> to vector<1x8xf32>
    %313 = vector.extract_strided_slice %275 {offsets = [6, 0], sizes = [1, 8], strides = [1, 1]} : vector<8x8xf32> to vector<1x8xf32>
    %314 = vector.extract_strided_slice %275 {offsets = [7, 0], sizes = [1, 8], strides = [1, 1]} : vector<8x8xf32> to vector<1x8xf32>
    %315 = tpu.concatenate %311, %312, %313, %314 in 1 : vector<1x8xf32>, vector<1x8xf32>, vector<1x8xf32>, vector<1x8xf32> -> vector<1x32xf32>
    %316 = tpu.concatenate %280, %285, %290, %295, %300, %305, %310, %315 in 0 : vector<1x32xf32>, vector<1x32xf32>, vector<1x32xf32>, vector<1x32xf32>, vector<1x32xf32>, vector<1x32xf32>, vector<1x32xf32>, vector<1x32xf32> -> vector<8x32xf32>
    %cst_96 = arith.constant dense<0.000000e+00> : vector<8x32xf32>
    %317 = tpu.matmul %316, %76, %cst_96 {dimension_numbers = #tpu.dot_dimension_numbers<[1], [0], [0], [1], [0, 0, 1, 1], [], []>} : vector<8x32xf32>, vector<32x32xf32>, vector<8x32xf32> -> vector<8x32xf32>
    %318 = vector.broadcast %78 : vector<1x32xf32> to vector<8x32xf32>
    %319 = arith.addf %317, %318 : vector<8x32xf32>
    %320 = arith.addf %83, %319 : vector<8x32xf32>
    %cst_97 = arith.constant dense<0.000000e+00> : vector<8xf32>
    %321 = vector.multi_reduction <add>, %320, %cst_97 [1] : vector<8x32xf32> to vector<8xf32>
    %322 = vector.shape_cast %321 : vector<8xf32> to vector<8x1xf32>
    %cst_98 = arith.constant 3.200000e+01 : f32
    %323 = vector.broadcast %cst_98 : f32 to vector<8x1xf32>
    %324 = arith.divf %322, %323 : vector<8x1xf32>
    %325 = vector.broadcast %324 : vector<8x1xf32> to vector<8x32xf32>
    %326 = arith.subf %320, %325 : vector<8x32xf32>
    %327 = arith.mulf %326, %326 : vector<8x32xf32>
    %cst_99 = arith.constant dense<0.000000e+00> : vector<8xf32>
    %328 = vector.multi_reduction <add>, %327, %cst_99 [1] : vector<8x32xf32> to vector<8xf32>
    %329 = vector.shape_cast %328 : vector<8xf32> to vector<8x1xf32>
    %cst_100 = arith.constant 3.200000e+01 : f32
    %330 = vector.broadcast %cst_100 : f32 to vector<8x1xf32>
    %331 = arith.divf %329, %330 : vector<8x1xf32>
    %332 = vector.broadcast %324 : vector<8x1xf32> to vector<8x32xf32>
    %333 = arith.subf %320, %332 : vector<8x32xf32>
    %cst_101 = arith.constant 9.99999974E-6 : f32
    %334 = vector.broadcast %cst_101 : f32 to vector<8x1xf32>
    %335 = arith.addf %331, %334 : vector<8x1xf32>
    %336 = math.rsqrt %335 : vector<8x1xf32>
    %337 = vector.broadcast %336 : vector<8x1xf32> to vector<8x32xf32>
    %338 = arith.mulf %333, %337 : vector<8x32xf32>
    %339 = vector.broadcast %80 : vector<1x32xf32> to vector<8x32xf32>
    %340 = arith.mulf %338, %339 : vector<8x32xf32>
    %341 = vector.broadcast %82 : vector<1x32xf32> to vector<8x32xf32>
    %342 = arith.addf %340, %341 : vector<8x32xf32>
    %343 = vector.extract_strided_slice %72 {offsets = [0, 0], sizes = [32, 64], strides = [1, 1]} : vector<32x96xf32> to vector<32x64xf32>
    %cst_102 = arith.constant dense<0.000000e+00> : vector<8x64xf32>
    %344 = tpu.matmul %85, %343, %cst_102 {dimension_numbers = #tpu.dot_dimension_numbers<[1], [0], [0], [1], [0, 0, 1, 1], [], []>} : vector<8x32xf32>, vector<32x64xf32>, vector<8x64xf32> -> vector<8x64xf32>
    %345 = vector.extract_strided_slice %74 {offsets = [0, 0], sizes = [1, 64], strides = [1, 1]} : vector<1x96xf32> to vector<1x64xf32>
    %346 = vector.broadcast %345 : vector<1x64xf32> to vector<8x64xf32>
    %347 = arith.addf %344, %346 : vector<8x64xf32>
    %348 = vector.extract_strided_slice %347 {offsets = [0, 0], sizes = [8, 32], strides = [1, 1]} : vector<8x64xf32> to vector<8x32xf32>
    %349 = vector.extract_strided_slice %347 {offsets = [0, 32], sizes = [8, 32], strides = [1, 1]} : vector<8x64xf32> to vector<8x32xf32>
    %350 = vector.extract_strided_slice %72 {offsets = [0, 64], sizes = [32, 32], strides = [1, 1]} : vector<32x96xf32> to vector<32x32xf32>
    %cst_103 = arith.constant dense<0.000000e+00> : vector<8x32xf32>
    %351 = tpu.matmul %342, %350, %cst_103 {dimension_numbers = #tpu.dot_dimension_numbers<[1], [0], [0], [1], [0, 0, 1, 1], [], []>} : vector<8x32xf32>, vector<32x32xf32>, vector<8x32xf32> -> vector<8x32xf32>
    %352 = vector.extract_strided_slice %74 {offsets = [0, 64], sizes = [1, 32], strides = [1, 1]} : vector<1x96xf32> to vector<1x32xf32>
    %353 = vector.broadcast %352 : vector<1x32xf32> to vector<8x32xf32>
    %354 = arith.addf %351, %353 : vector<8x32xf32>
    %355 = vector.extract_strided_slice %348 {offsets = [0, 0], sizes = [1, 8], strides = [1, 1]} : vector<8x32xf32> to vector<1x8xf32>
    %356 = vector.extract_strided_slice %348 {offsets = [0, 8], sizes = [1, 8], strides = [1, 1]} : vector<8x32xf32> to vector<1x8xf32>
    %357 = vector.extract_strided_slice %348 {offsets = [0, 16], sizes = [1, 8], strides = [1, 1]} : vector<8x32xf32> to vector<1x8xf32>
    %358 = vector.extract_strided_slice %348 {offsets = [0, 24], sizes = [1, 8], strides = [1, 1]} : vector<8x32xf32> to vector<1x8xf32>
    %359 = vector.extract_strided_slice %348 {offsets = [1, 0], sizes = [1, 8], strides = [1, 1]} : vector<8x32xf32> to vector<1x8xf32>
    %360 = vector.extract_strided_slice %348 {offsets = [1, 8], sizes = [1, 8], strides = [1, 1]} : vector<8x32xf32> to vector<1x8xf32>
    %361 = vector.extract_strided_slice %348 {offsets = [1, 16], sizes = [1, 8], strides = [1, 1]} : vector<8x32xf32> to vector<1x8xf32>
    %362 = vector.extract_strided_slice %348 {offsets = [1, 24], sizes = [1, 8], strides = [1, 1]} : vector<8x32xf32> to vector<1x8xf32>
    %363 = tpu.concatenate %355, %356, %357, %358, %359, %360, %361, %362 in 0 : vector<1x8xf32>, vector<1x8xf32>, vector<1x8xf32>, vector<1x8xf32>, vector<1x8xf32>, vector<1x8xf32>, vector<1x8xf32>, vector<1x8xf32> -> vector<8x8xf32>
    %364 = vector.extract_strided_slice %348 {offsets = [2, 0], sizes = [1, 8], strides = [1, 1]} : vector<8x32xf32> to vector<1x8xf32>
    %365 = vector.extract_strided_slice %348 {offsets = [2, 8], sizes = [1, 8], strides = [1, 1]} : vector<8x32xf32> to vector<1x8xf32>
    %366 = vector.extract_strided_slice %348 {offsets = [2, 16], sizes = [1, 8], strides = [1, 1]} : vector<8x32xf32> to vector<1x8xf32>
    %367 = vector.extract_strided_slice %348 {offsets = [2, 24], sizes = [1, 8], strides = [1, 1]} : vector<8x32xf32> to vector<1x8xf32>
    %368 = vector.extract_strided_slice %348 {offsets = [3, 0], sizes = [1, 8], strides = [1, 1]} : vector<8x32xf32> to vector<1x8xf32>
    %369 = vector.extract_strided_slice %348 {offsets = [3, 8], sizes = [1, 8], strides = [1, 1]} : vector<8x32xf32> to vector<1x8xf32>
    %370 = vector.extract_strided_slice %348 {offsets = [3, 16], sizes = [1, 8], strides = [1, 1]} : vector<8x32xf32> to vector<1x8xf32>
    %371 = vector.extract_strided_slice %348 {offsets = [3, 24], sizes = [1, 8], strides = [1, 1]} : vector<8x32xf32> to vector<1x8xf32>
    %372 = tpu.concatenate %364, %365, %366, %367, %368, %369, %370, %371 in 0 : vector<1x8xf32>, vector<1x8xf32>, vector<1x8xf32>, vector<1x8xf32>, vector<1x8xf32>, vector<1x8xf32>, vector<1x8xf32>, vector<1x8xf32> -> vector<8x8xf32>
    %373 = vector.extract_strided_slice %348 {offsets = [4, 0], sizes = [1, 8], strides = [1, 1]} : vector<8x32xf32> to vector<1x8xf32>
    %374 = vector.extract_strided_slice %348 {offsets = [4, 8], sizes = [1, 8], strides = [1, 1]} : vector<8x32xf32> to vector<1x8xf32>
    %375 = vector.extract_strided_slice %348 {offsets = [4, 16], sizes = [1, 8], strides = [1, 1]} : vector<8x32xf32> to vector<1x8xf32>
    %376 = vector.extract_strided_slice %348 {offsets = [4, 24], sizes = [1, 8], strides = [1, 1]} : vector<8x32xf32> to vector<1x8xf32>
    %377 = vector.extract_strided_slice %348 {offsets = [5, 0], sizes = [1, 8], strides = [1, 1]} : vector<8x32xf32> to vector<1x8xf32>
    %378 = vector.extract_strided_slice %348 {offsets = [5, 8], sizes = [1, 8], strides = [1, 1]} : vector<8x32xf32> to vector<1x8xf32>
    %379 = vector.extract_strided_slice %348 {offsets = [5, 16], sizes = [1, 8], strides = [1, 1]} : vector<8x32xf32> to vector<1x8xf32>
    %380 = vector.extract_strided_slice %348 {offsets = [5, 24], sizes = [1, 8], strides = [1, 1]} : vector<8x32xf32> to vector<1x8xf32>
    %381 = tpu.concatenate %373, %374, %375, %376, %377, %378, %379, %380 in 0 : vector<1x8xf32>, vector<1x8xf32>, vector<1x8xf32>, vector<1x8xf32>, vector<1x8xf32>, vector<1x8xf32>, vector<1x8xf32>, vector<1x8xf32> -> vector<8x8xf32>
    %382 = vector.extract_strided_slice %348 {offsets = [6, 0], sizes = [1, 8], strides = [1, 1]} : vector<8x32xf32> to vector<1x8xf32>
    %383 = vector.extract_strided_slice %348 {offsets = [6, 8], sizes = [1, 8], strides = [1, 1]} : vector<8x32xf32> to vector<1x8xf32>
    %384 = vector.extract_strided_slice %348 {offsets = [6, 16], sizes = [1, 8], strides = [1, 1]} : vector<8x32xf32> to vector<1x8xf32>
    %385 = vector.extract_strided_slice %348 {offsets = [6, 24], sizes = [1, 8], strides = [1, 1]} : vector<8x32xf32> to vector<1x8xf32>
    %386 = vector.extract_strided_slice %348 {offsets = [7, 0], sizes = [1, 8], strides = [1, 1]} : vector<8x32xf32> to vector<1x8xf32>
    %387 = vector.extract_strided_slice %348 {offsets = [7, 8], sizes = [1, 8], strides = [1, 1]} : vector<8x32xf32> to vector<1x8xf32>
    %388 = vector.extract_strided_slice %348 {offsets = [7, 16], sizes = [1, 8], strides = [1, 1]} : vector<8x32xf32> to vector<1x8xf32>
    %389 = vector.extract_strided_slice %348 {offsets = [7, 24], sizes = [1, 8], strides = [1, 1]} : vector<8x32xf32> to vector<1x8xf32>
    %390 = tpu.concatenate %382, %383, %384, %385, %386, %387, %388, %389 in 0 : vector<1x8xf32>, vector<1x8xf32>, vector<1x8xf32>, vector<1x8xf32>, vector<1x8xf32>, vector<1x8xf32>, vector<1x8xf32>, vector<1x8xf32> -> vector<8x8xf32>
    %391 = vector.extract_strided_slice %349 {offsets = [0, 0], sizes = [1, 8], strides = [1, 1]} : vector<8x32xf32> to vector<1x8xf32>
    %392 = vector.extract_strided_slice %349 {offsets = [0, 8], sizes = [1, 8], strides = [1, 1]} : vector<8x32xf32> to vector<1x8xf32>
    %393 = vector.extract_strided_slice %349 {offsets = [0, 16], sizes = [1, 8], strides = [1, 1]} : vector<8x32xf32> to vector<1x8xf32>
    %394 = vector.extract_strided_slice %349 {offsets = [0, 24], sizes = [1, 8], strides = [1, 1]} : vector<8x32xf32> to vector<1x8xf32>
    %395 = vector.extract_strided_slice %349 {offsets = [1, 0], sizes = [1, 8], strides = [1, 1]} : vector<8x32xf32> to vector<1x8xf32>
    %396 = vector.extract_strided_slice %349 {offsets = [1, 8], sizes = [1, 8], strides = [1, 1]} : vector<8x32xf32> to vector<1x8xf32>
    %397 = vector.extract_strided_slice %349 {offsets = [1, 16], sizes = [1, 8], strides = [1, 1]} : vector<8x32xf32> to vector<1x8xf32>
    %398 = vector.extract_strided_slice %349 {offsets = [1, 24], sizes = [1, 8], strides = [1, 1]} : vector<8x32xf32> to vector<1x8xf32>
    %399 = tpu.concatenate %391, %392, %393, %394, %395, %396, %397, %398 in 0 : vector<1x8xf32>, vector<1x8xf32>, vector<1x8xf32>, vector<1x8xf32>, vector<1x8xf32>, vector<1x8xf32>, vector<1x8xf32>, vector<1x8xf32> -> vector<8x8xf32>
    %400 = vector.extract_strided_slice %349 {offsets = [2, 0], sizes = [1, 8], strides = [1, 1]} : vector<8x32xf32> to vector<1x8xf32>
    %401 = vector.extract_strided_slice %349 {offsets = [2, 8], sizes = [1, 8], strides = [1, 1]} : vector<8x32xf32> to vector<1x8xf32>
    %402 = vector.extract_strided_slice %349 {offsets = [2, 16], sizes = [1, 8], strides = [1, 1]} : vector<8x32xf32> to vector<1x8xf32>
    %403 = vector.extract_strided_slice %349 {offsets = [2, 24], sizes = [1, 8], strides = [1, 1]} : vector<8x32xf32> to vector<1x8xf32>
    %404 = vector.extract_strided_slice %349 {offsets = [3, 0], sizes = [1, 8], strides = [1, 1]} : vector<8x32xf32> to vector<1x8xf32>
    %405 = vector.extract_strided_slice %349 {offsets = [3, 8], sizes = [1, 8], strides = [1, 1]} : vector<8x32xf32> to vector<1x8xf32>
    %406 = vector.extract_strided_slice %349 {offsets = [3, 16], sizes = [1, 8], strides = [1, 1]} : vector<8x32xf32> to vector<1x8xf32>
    %407 = vector.extract_strided_slice %349 {offsets = [3, 24], sizes = [1, 8], strides = [1, 1]} : vector<8x32xf32> to vector<1x8xf32>
    %408 = tpu.concatenate %400, %401, %402, %403, %404, %405, %406, %407 in 0 : vector<1x8xf32>, vector<1x8xf32>, vector<1x8xf32>, vector<1x8xf32>, vector<1x8xf32>, vector<1x8xf32>, vector<1x8xf32>, vector<1x8xf32> -> vector<8x8xf32>
    %409 = vector.extract_strided_slice %349 {offsets = [4, 0], sizes = [1, 8], strides = [1, 1]} : vector<8x32xf32> to vector<1x8xf32>
    %410 = vector.extract_strided_slice %349 {offsets = [4, 8], sizes = [1, 8], strides = [1, 1]} : vector<8x32xf32> to vector<1x8xf32>
    %411 = vector.extract_strided_slice %349 {offsets = [4, 16], sizes = [1, 8], strides = [1, 1]} : vector<8x32xf32> to vector<1x8xf32>
    %412 = vector.extract_strided_slice %349 {offsets = [4, 24], sizes = [1, 8], strides = [1, 1]} : vector<8x32xf32> to vector<1x8xf32>
    %413 = vector.extract_strided_slice %349 {offsets = [5, 0], sizes = [1, 8], strides = [1, 1]} : vector<8x32xf32> to vector<1x8xf32>
    %414 = vector.extract_strided_slice %349 {offsets = [5, 8], sizes = [1, 8], strides = [1, 1]} : vector<8x32xf32> to vector<1x8xf32>
    %415 = vector.extract_strided_slice %349 {offsets = [5, 16], sizes = [1, 8], strides = [1, 1]} : vector<8x32xf32> to vector<1x8xf32>
    %416 = vector.extract_strided_slice %349 {offsets = [5, 24], sizes = [1, 8], strides = [1, 1]} : vector<8x32xf32> to vector<1x8xf32>
    %417 = tpu.concatenate %409, %410, %411, %412, %413, %414, %415, %416 in 0 : vector<1x8xf32>, vector<1x8xf32>, vector<1x8xf32>, vector<1x8xf32>, vector<1x8xf32>, vector<1x8xf32>, vector<1x8xf32>, vector<1x8xf32> -> vector<8x8xf32>
    %418 = vector.extract_strided_slice %349 {offsets = [6, 0], sizes = [1, 8], strides = [1, 1]} : vector<8x32xf32> to vector<1x8xf32>
    %419 = vector.extract_strided_slice %349 {offsets = [6, 8], sizes = [1, 8], strides = [1, 1]} : vector<8x32xf32> to vector<1x8xf32>
    %420 = vector.extract_strided_slice %349 {offsets = [6, 16], sizes = [1, 8], strides = [1, 1]} : vector<8x32xf32> to vector<1x8xf32>
    %421 = vector.extract_strided_slice %349 {offsets = [6, 24], sizes = [1, 8], strides = [1, 1]} : vector<8x32xf32> to vector<1x8xf32>
    %422 = vector.extract_strided_slice %349 {offsets = [7, 0], sizes = [1, 8], strides = [1, 1]} : vector<8x32xf32> to vector<1x8xf32>
    %423 = vector.extract_strided_slice %349 {offsets = [7, 8], sizes = [1, 8], strides = [1, 1]} : vector<8x32xf32> to vector<1x8xf32>
    %424 = vector.extract_strided_slice %349 {offsets = [7, 16], sizes = [1, 8], strides = [1, 1]} : vector<8x32xf32> to vector<1x8xf32>
    %425 = vector.extract_strided_slice %349 {offsets = [7, 24], sizes = [1, 8], strides = [1, 1]} : vector<8x32xf32> to vector<1x8xf32>
    %426 = tpu.concatenate %418, %419, %420, %421, %422, %423, %424, %425 in 0 : vector<1x8xf32>, vector<1x8xf32>, vector<1x8xf32>, vector<1x8xf32>, vector<1x8xf32>, vector<1x8xf32>, vector<1x8xf32>, vector<1x8xf32> -> vector<8x8xf32>
    %427 = vector.extract_strided_slice %354 {offsets = [0, 0], sizes = [1, 8], strides = [1, 1]} : vector<8x32xf32> to vector<1x8xf32>
    %428 = vector.extract_strided_slice %354 {offsets = [0, 8], sizes = [1, 8], strides = [1, 1]} : vector<8x32xf32> to vector<1x8xf32>
    %429 = vector.extract_strided_slice %354 {offsets = [0, 16], sizes = [1, 8], strides = [1, 1]} : vector<8x32xf32> to vector<1x8xf32>
    %430 = vector.extract_strided_slice %354 {offsets = [0, 24], sizes = [1, 8], strides = [1, 1]} : vector<8x32xf32> to vector<1x8xf32>
    %431 = vector.extract_strided_slice %354 {offsets = [1, 0], sizes = [1, 8], strides = [1, 1]} : vector<8x32xf32> to vector<1x8xf32>
    %432 = vector.extract_strided_slice %354 {offsets = [1, 8], sizes = [1, 8], strides = [1, 1]} : vector<8x32xf32> to vector<1x8xf32>
    %433 = vector.extract_strided_slice %354 {offsets = [1, 16], sizes = [1, 8], strides = [1, 1]} : vector<8x32xf32> to vector<1x8xf32>
    %434 = vector.extract_strided_slice %354 {offsets = [1, 24], sizes = [1, 8], strides = [1, 1]} : vector<8x32xf32> to vector<1x8xf32>
    %435 = tpu.concatenate %427, %428, %429, %430, %431, %432, %433, %434 in 0 : vector<1x8xf32>, vector<1x8xf32>, vector<1x8xf32>, vector<1x8xf32>, vector<1x8xf32>, vector<1x8xf32>, vector<1x8xf32>, vector<1x8xf32> -> vector<8x8xf32>
    %436 = vector.extract_strided_slice %354 {offsets = [2, 0], sizes = [1, 8], strides = [1, 1]} : vector<8x32xf32> to vector<1x8xf32>
    %437 = vector.extract_strided_slice %354 {offsets = [2, 8], sizes = [1, 8], strides = [1, 1]} : vector<8x32xf32> to vector<1x8xf32>
    %438 = vector.extract_strided_slice %354 {offsets = [2, 16], sizes = [1, 8], strides = [1, 1]} : vector<8x32xf32> to vector<1x8xf32>
    %439 = vector.extract_strided_slice %354 {offsets = [2, 24], sizes = [1, 8], strides = [1, 1]} : vector<8x32xf32> to vector<1x8xf32>
    %440 = vector.extract_strided_slice %354 {offsets = [3, 0], sizes = [1, 8], strides = [1, 1]} : vector<8x32xf32> to vector<1x8xf32>
    %441 = vector.extract_strided_slice %354 {offsets = [3, 8], sizes = [1, 8], strides = [1, 1]} : vector<8x32xf32> to vector<1x8xf32>
    %442 = vector.extract_strided_slice %354 {offsets = [3, 16], sizes = [1, 8], strides = [1, 1]} : vector<8x32xf32> to vector<1x8xf32>
    %443 = vector.extract_strided_slice %354 {offsets = [3, 24], sizes = [1, 8], strides = [1, 1]} : vector<8x32xf32> to vector<1x8xf32>
    %444 = tpu.concatenate %436, %437, %438, %439, %440, %441, %442, %443 in 0 : vector<1x8xf32>, vector<1x8xf32>, vector<1x8xf32>, vector<1x8xf32>, vector<1x8xf32>, vector<1x8xf32>, vector<1x8xf32>, vector<1x8xf32> -> vector<8x8xf32>
    %445 = vector.extract_strided_slice %354 {offsets = [4, 0], sizes = [1, 8], strides = [1, 1]} : vector<8x32xf32> to vector<1x8xf32>
    %446 = vector.extract_strided_slice %354 {offsets = [4, 8], sizes = [1, 8], strides = [1, 1]} : vector<8x32xf32> to vector<1x8xf32>
    %447 = vector.extract_strided_slice %354 {offsets = [4, 16], sizes = [1, 8], strides = [1, 1]} : vector<8x32xf32> to vector<1x8xf32>
    %448 = vector.extract_strided_slice %354 {offsets = [4, 24], sizes = [1, 8], strides = [1, 1]} : vector<8x32xf32> to vector<1x8xf32>
    %449 = vector.extract_strided_slice %354 {offsets = [5, 0], sizes = [1, 8], strides = [1, 1]} : vector<8x32xf32> to vector<1x8xf32>
    %450 = vector.extract_strided_slice %354 {offsets = [5, 8], sizes = [1, 8], strides = [1, 1]} : vector<8x32xf32> to vector<1x8xf32>
    %451 = vector.extract_strided_slice %354 {offsets = [5, 16], sizes = [1, 8], strides = [1, 1]} : vector<8x32xf32> to vector<1x8xf32>
    %452 = vector.extract_strided_slice %354 {offsets = [5, 24], sizes = [1, 8], strides = [1, 1]} : vector<8x32xf32> to vector<1x8xf32>
    %453 = tpu.concatenate %445, %446, %447, %448, %449, %450, %451, %452 in 0 : vector<1x8xf32>, vector<1x8xf32>, vector<1x8xf32>, vector<1x8xf32>, vector<1x8xf32>, vector<1x8xf32>, vector<1x8xf32>, vector<1x8xf32> -> vector<8x8xf32>
    %454 = vector.extract_strided_slice %354 {offsets = [6, 0], sizes = [1, 8], strides = [1, 1]} : vector<8x32xf32> to vector<1x8xf32>
    %455 = vector.extract_strided_slice %354 {offsets = [6, 8], sizes = [1, 8], strides = [1, 1]} : vector<8x32xf32> to vector<1x8xf32>
    %456 = vector.extract_strided_slice %354 {offsets = [6, 16], sizes = [1, 8], strides = [1, 1]} : vector<8x32xf32> to vector<1x8xf32>
    %457 = vector.extract_strided_slice %354 {offsets = [6, 24], sizes = [1, 8], strides = [1, 1]} : vector<8x32xf32> to vector<1x8xf32>
    %458 = vector.extract_strided_slice %354 {offsets = [7, 0], sizes = [1, 8], strides = [1, 1]} : vector<8x32xf32> to vector<1x8xf32>
    %459 = vector.extract_strided_slice %354 {offsets = [7, 8], sizes = [1, 8], strides = [1, 1]} : vector<8x32xf32> to vector<1x8xf32>
    %460 = vector.extract_strided_slice %354 {offsets = [7, 16], sizes = [1, 8], strides = [1, 1]} : vector<8x32xf32> to vector<1x8xf32>
    %461 = vector.extract_strided_slice %354 {offsets = [7, 24], sizes = [1, 8], strides = [1, 1]} : vector<8x32xf32> to vector<1x8xf32>
    %462 = tpu.concatenate %454, %455, %456, %457, %458, %459, %460, %461 in 0 : vector<1x8xf32>, vector<1x8xf32>, vector<1x8xf32>, vector<1x8xf32>, vector<1x8xf32>, vector<1x8xf32>, vector<1x8xf32>, vector<1x8xf32> -> vector<8x8xf32>
    %cst_104 = arith.constant dense<0.000000e+00> : vector<8x8xf32>
    %463 = tpu.matmul %435, %363, %cst_104 {dimension_numbers = #tpu.dot_dimension_numbers<[1], [1], [0], [0], [0, 0, 1, 0], [], []>} : vector<8x8xf32>, vector<8x8xf32>, vector<8x8xf32> -> vector<8x8xf32>
    %cst_105 = arith.constant 0.353553385 : f32
    %464 = vector.broadcast %cst_105 : f32 to vector<8x8xf32>
    %465 = arith.mulf %463, %464 : vector<8x8xf32>
    %466 = arith.mulf %465, %19 : vector<8x8xf32>
    %cst_106 = arith.constant dense<0xFF800000> : vector<8xf32>
    %467 = vector.multi_reduction <maximumf>, %466, %cst_106 [1] : vector<8x8xf32> to vector<8xf32>
    %468 = vector.shape_cast %467 : vector<8xf32> to vector<8x1xf32>
    %469 = vector.broadcast %468 : vector<8x1xf32> to vector<8x8xf32>
    %470 = arith.subf %466, %469 : vector<8x8xf32>
    %471 = math.exp %470 : vector<8x8xf32>
    %cst_107 = arith.constant dense<0.000000e+00> : vector<8xf32>
    %472 = vector.multi_reduction <add>, %471, %cst_107 [1] : vector<8x8xf32> to vector<8xf32>
    %473 = vector.shape_cast %472 : vector<8xf32> to vector<8x1xf32>
    %474 = tpu.reciprocal %473 {approx = true} : vector<8x1xf32> -> vector<8x1xf32>
    %475 = vector.broadcast %474 : vector<8x1xf32> to vector<8x8xf32>
    %476 = arith.mulf %471, %475 : vector<8x8xf32>
    %477 = arith.mulf %476, %19 : vector<8x8xf32>
    %c0_108 = arith.constant 0 : index
    %c0_109 = arith.constant 0 : index
    %c0_110 = arith.constant 0 : index
    %c0_111 = arith.constant 0 : index
    %478 = vector.load %arg19[%c0_108, %c0_109, %c0_110, %c0_111] : memref<1x4x8x8xf32, #tpu.memory_space<vmem>>, vector<1x1x8x8xf32>
    %479 = vector.shape_cast %478 : vector<1x1x8x8xf32> to vector<8x8xf32>
    %480 = vector.shape_cast %477 : vector<8x8xf32> to vector<1x1x8x8xf32>
    tpu.vector_store %arg19[%c0_108, %c0_109, %c0_110, %c0_111], %480 {strides = array<i32>} : memref<1x4x8x8xf32, #tpu.memory_space<vmem>>, vector<1x1x8x8xf32>,
    %cst_112 = arith.constant dense<0.000000e+00> : vector<8x8xf32>
    %481 = tpu.matmul %477, %399, %cst_112 {dimension_numbers = #tpu.dot_dimension_numbers<[1], [0], [0], [1], [0, 0, 1, 1], [], []>} : vector<8x8xf32>, vector<8x8xf32>, vector<8x8xf32> -> vector<8x8xf32>
    %cst_113 = arith.constant dense<0.000000e+00> : vector<8x8xf32>
    %482 = tpu.matmul %444, %372, %cst_113 {dimension_numbers = #tpu.dot_dimension_numbers<[1], [1], [0], [0], [0, 0, 1, 0], [], []>} : vector<8x8xf32>, vector<8x8xf32>, vector<8x8xf32> -> vector<8x8xf32>
    %cst_114 = arith.constant 0.353553385 : f32
    %483 = vector.broadcast %cst_114 : f32 to vector<8x8xf32>
    %484 = arith.mulf %482, %483 : vector<8x8xf32>
    %485 = arith.mulf %484, %36 : vector<8x8xf32>
    %cst_115 = arith.constant dense<0xFF800000> : vector<8xf32>
    %486 = vector.multi_reduction <maximumf>, %485, %cst_115 [1] : vector<8x8xf32> to vector<8xf32>
    %487 = vector.shape_cast %486 : vector<8xf32> to vector<8x1xf32>
    %488 = vector.broadcast %487 : vector<8x1xf32> to vector<8x8xf32>
    %489 = arith.subf %485, %488 : vector<8x8xf32>
    %490 = math.exp %489 : vector<8x8xf32>
    %cst_116 = arith.constant dense<0.000000e+00> : vector<8xf32>
    %491 = vector.multi_reduction <add>, %490, %cst_116 [1] : vector<8x8xf32> to vector<8xf32>
    %492 = vector.shape_cast %491 : vector<8xf32> to vector<8x1xf32>
    %493 = tpu.reciprocal %492 {approx = true} : vector<8x1xf32> -> vector<8x1xf32>
    %494 = vector.broadcast %493 : vector<8x1xf32> to vector<8x8xf32>
    %495 = arith.mulf %490, %494 : vector<8x8xf32>
    %496 = arith.mulf %495, %36 : vector<8x8xf32>
    %c0_117 = arith.constant 0 : index
    %c1_118 = arith.constant 1 : index
    %c0_119 = arith.constant 0 : index
    %c0_120 = arith.constant 0 : index
    %497 = vector.load %arg19[%c0_117, %c1_118, %c0_119, %c0_120] : memref<1x4x8x8xf32, #tpu.memory_space<vmem>>, vector<1x1x8x8xf32>
    %498 = vector.shape_cast %497 : vector<1x1x8x8xf32> to vector<8x8xf32>
    %499 = vector.shape_cast %496 : vector<8x8xf32> to vector<1x1x8x8xf32>
    tpu.vector_store %arg19[%c0_117, %c1_118, %c0_119, %c0_120], %499 {strides = array<i32>} : memref<1x4x8x8xf32, #tpu.memory_space<vmem>>, vector<1x1x8x8xf32>,
    %cst_121 = arith.constant dense<0.000000e+00> : vector<8x8xf32>
    %500 = tpu.matmul %496, %408, %cst_121 {dimension_numbers = #tpu.dot_dimension_numbers<[1], [0], [0], [1], [0, 0, 1, 1], [], []>} : vector<8x8xf32>, vector<8x8xf32>, vector<8x8xf32> -> vector<8x8xf32>
    %cst_122 = arith.constant dense<0.000000e+00> : vector<8x8xf32>
    %501 = tpu.matmul %453, %381, %cst_122 {dimension_numbers = #tpu.dot_dimension_numbers<[1], [1], [0], [0], [0, 0, 1, 0], [], []>} : vector<8x8xf32>, vector<8x8xf32>, vector<8x8xf32> -> vector<8x8xf32>
    %cst_123 = arith.constant 0.353553385 : f32
    %502 = vector.broadcast %cst_123 : f32 to vector<8x8xf32>
    %503 = arith.mulf %501, %502 : vector<8x8xf32>
    %504 = arith.mulf %503, %53 : vector<8x8xf32>
    %cst_124 = arith.constant dense<0xFF800000> : vector<8xf32>
    %505 = vector.multi_reduction <maximumf>, %504, %cst_124 [1] : vector<8x8xf32> to vector<8xf32>
    %506 = vector.shape_cast %505 : vector<8xf32> to vector<8x1xf32>
    %507 = vector.broadcast %506 : vector<8x1xf32> to vector<8x8xf32>
    %508 = arith.subf %504, %507 : vector<8x8xf32>
    %509 = math.exp %508 : vector<8x8xf32>
    %cst_125 = arith.constant dense<0.000000e+00> : vector<8xf32>
    %510 = vector.multi_reduction <add>, %509, %cst_125 [1] : vector<8x8xf32> to vector<8xf32>
    %511 = vector.shape_cast %510 : vector<8xf32> to vector<8x1xf32>
    %512 = tpu.reciprocal %511 {approx = true} : vector<8x1xf32> -> vector<8x1xf32>
    %513 = vector.broadcast %512 : vector<8x1xf32> to vector<8x8xf32>
    %514 = arith.mulf %509, %513 : vector<8x8xf32>
    %515 = arith.mulf %514, %53 : vector<8x8xf32>
    %c0_126 = arith.constant 0 : index
    %c2_127 = arith.constant 2 : index
    %c0_128 = arith.constant 0 : index
    %c0_129 = arith.constant 0 : index
    %516 = vector.load %arg19[%c0_126, %c2_127, %c0_128, %c0_129] : memref<1x4x8x8xf32, #tpu.memory_space<vmem>>, vector<1x1x8x8xf32>
    %517 = vector.shape_cast %516 : vector<1x1x8x8xf32> to vector<8x8xf32>
    %518 = vector.shape_cast %515 : vector<8x8xf32> to vector<1x1x8x8xf32>
    tpu.vector_store %arg19[%c0_126, %c2_127, %c0_128, %c0_129], %518 {strides = array<i32>} : memref<1x4x8x8xf32, #tpu.memory_space<vmem>>, vector<1x1x8x8xf32>,
    %cst_130 = arith.constant dense<0.000000e+00> : vector<8x8xf32>
    %519 = tpu.matmul %515, %417, %cst_130 {dimension_numbers = #tpu.dot_dimension_numbers<[1], [0], [0], [1], [0, 0, 1, 1], [], []>} : vector<8x8xf32>, vector<8x8xf32>, vector<8x8xf32> -> vector<8x8xf32>
    %cst_131 = arith.constant dense<0.000000e+00> : vector<8x8xf32>
    %520 = tpu.matmul %462, %390, %cst_131 {dimension_numbers = #tpu.dot_dimension_numbers<[1], [1], [0], [0], [0, 0, 1, 0], [], []>} : vector<8x8xf32>, vector<8x8xf32>, vector<8x8xf32> -> vector<8x8xf32>
    %cst_132 = arith.constant 0.353553385 : f32
    %521 = vector.broadcast %cst_132 : f32 to vector<8x8xf32>
    %522 = arith.mulf %520, %521 : vector<8x8xf32>
    %523 = arith.mulf %522, %70 : vector<8x8xf32>
    %cst_133 = arith.constant dense<0xFF800000> : vector<8xf32>
    %524 = vector.multi_reduction <maximumf>, %523, %cst_133 [1] : vector<8x8xf32> to vector<8xf32>
    %525 = vector.shape_cast %524 : vector<8xf32> to vector<8x1xf32>
    %526 = vector.broadcast %525 : vector<8x1xf32> to vector<8x8xf32>
    %527 = arith.subf %523, %526 : vector<8x8xf32>
    %528 = math.exp %527 : vector<8x8xf32>
    %cst_134 = arith.constant dense<0.000000e+00> : vector<8xf32>
    %529 = vector.multi_reduction <add>, %528, %cst_134 [1] : vector<8x8xf32> to vector<8xf32>
    %530 = vector.shape_cast %529 : vector<8xf32> to vector<8x1xf32>
    %531 = tpu.reciprocal %530 {approx = true} : vector<8x1xf32> -> vector<8x1xf32>
    %532 = vector.broadcast %531 : vector<8x1xf32> to vector<8x8xf32>
    %533 = arith.mulf %528, %532 : vector<8x8xf32>
    %534 = arith.mulf %533, %70 : vector<8x8xf32>
    %c0_135 = arith.constant 0 : index
    %c3_136 = arith.constant 3 : index
    %c0_137 = arith.constant 0 : index
    %c0_138 = arith.constant 0 : index
    %535 = vector.load %arg19[%c0_135, %c3_136, %c0_137, %c0_138] : memref<1x4x8x8xf32, #tpu.memory_space<vmem>>, vector<1x1x8x8xf32>
    %536 = vector.shape_cast %535 : vector<1x1x8x8xf32> to vector<8x8xf32>
    %537 = vector.shape_cast %534 : vector<8x8xf32> to vector<1x1x8x8xf32>
    tpu.vector_store %arg19[%c0_135, %c3_136, %c0_137, %c0_138], %537 {strides = array<i32>} : memref<1x4x8x8xf32, #tpu.memory_space<vmem>>, vector<1x1x8x8xf32>,
    %cst_139 = arith.constant dense<0.000000e+00> : vector<8x8xf32>
    %538 = tpu.matmul %534, %426, %cst_139 {dimension_numbers = #tpu.dot_dimension_numbers<[1], [0], [0], [1], [0, 0, 1, 1], [], []>} : vector<8x8xf32>, vector<8x8xf32>, vector<8x8xf32> -> vector<8x8xf32>
    %539 = vector.extract_strided_slice %481 {offsets = [0, 0], sizes = [1, 8], strides = [1, 1]} : vector<8x8xf32> to vector<1x8xf32>
    %540 = vector.extract_strided_slice %481 {offsets = [1, 0], sizes = [1, 8], strides = [1, 1]} : vector<8x8xf32> to vector<1x8xf32>
    %541 = vector.extract_strided_slice %481 {offsets = [2, 0], sizes = [1, 8], strides = [1, 1]} : vector<8x8xf32> to vector<1x8xf32>
    %542 = vector.extract_strided_slice %481 {offsets = [3, 0], sizes = [1, 8], strides = [1, 1]} : vector<8x8xf32> to vector<1x8xf32>
    %543 = tpu.concatenate %539, %540, %541, %542 in 1 : vector<1x8xf32>, vector<1x8xf32>, vector<1x8xf32>, vector<1x8xf32> -> vector<1x32xf32>
    %544 = vector.extract_strided_slice %481 {offsets = [4, 0], sizes = [1, 8], strides = [1, 1]} : vector<8x8xf32> to vector<1x8xf32>
    %545 = vector.extract_strided_slice %481 {offsets = [5, 0], sizes = [1, 8], strides = [1, 1]} : vector<8x8xf32> to vector<1x8xf32>
    %546 = vector.extract_strided_slice %481 {offsets = [6, 0], sizes = [1, 8], strides = [1, 1]} : vector<8x8xf32> to vector<1x8xf32>
    %547 = vector.extract_strided_slice %481 {offsets = [7, 0], sizes = [1, 8], strides = [1, 1]} : vector<8x8xf32> to vector<1x8xf32>
    %548 = tpu.concatenate %544, %545, %546, %547 in 1 : vector<1x8xf32>, vector<1x8xf32>, vector<1x8xf32>, vector<1x8xf32> -> vector<1x32xf32>
    %549 = vector.extract_strided_slice %500 {offsets = [0, 0], sizes = [1, 8], strides = [1, 1]} : vector<8x8xf32> to vector<1x8xf32>
    %550 = vector.extract_strided_slice %500 {offsets = [1, 0], sizes = [1, 8], strides = [1, 1]} : vector<8x8xf32> to vector<1x8xf32>
    %551 = vector.extract_strided_slice %500 {offsets = [2, 0], sizes = [1, 8], strides = [1, 1]} : vector<8x8xf32> to vector<1x8xf32>
    %552 = vector.extract_strided_slice %500 {offsets = [3, 0], sizes = [1, 8], strides = [1, 1]} : vector<8x8xf32> to vector<1x8xf32>
    %553 = tpu.concatenate %549, %550, %551, %552 in 1 : vector<1x8xf32>, vector<1x8xf32>, vector<1x8xf32>, vector<1x8xf32> -> vector<1x32xf32>
    %554 = vector.extract_strided_slice %500 {offsets = [4, 0], sizes = [1, 8], strides = [1, 1]} : vector<8x8xf32> to vector<1x8xf32>
    %555 = vector.extract_strided_slice %500 {offsets = [5, 0], sizes = [1, 8], strides = [1, 1]} : vector<8x8xf32> to vector<1x8xf32>
    %556 = vector.extract_strided_slice %500 {offsets = [6, 0], sizes = [1, 8], strides = [1, 1]} : vector<8x8xf32> to vector<1x8xf32>
    %557 = vector.extract_strided_slice %500 {offsets = [7, 0], sizes = [1, 8], strides = [1, 1]} : vector<8x8xf32> to vector<1x8xf32>
    %558 = tpu.concatenate %554, %555, %556, %557 in 1 : vector<1x8xf32>, vector<1x8xf32>, vector<1x8xf32>, vector<1x8xf32> -> vector<1x32xf32>
    %559 = vector.extract_strided_slice %519 {offsets = [0, 0], sizes = [1, 8], strides = [1, 1]} : vector<8x8xf32> to vector<1x8xf32>
    %560 = vector.extract_strided_slice %519 {offsets = [1, 0], sizes = [1, 8], strides = [1, 1]} : vector<8x8xf32> to vector<1x8xf32>
    %561 = vector.extract_strided_slice %519 {offsets = [2, 0], sizes = [1, 8], strides = [1, 1]} : vector<8x8xf32> to vector<1x8xf32>
    %562 = vector.extract_strided_slice %519 {offsets = [3, 0], sizes = [1, 8], strides = [1, 1]} : vector<8x8xf32> to vector<1x8xf32>
    %563 = tpu.concatenate %559, %560, %561, %562 in 1 : vector<1x8xf32>, vector<1x8xf32>, vector<1x8xf32>, vector<1x8xf32> -> vector<1x32xf32>
    %564 = vector.extract_strided_slice %519 {offsets = [4, 0], sizes = [1, 8], strides = [1, 1]} : vector<8x8xf32> to vector<1x8xf32>
    %565 = vector.extract_strided_slice %519 {offsets = [5, 0], sizes = [1, 8], strides = [1, 1]} : vector<8x8xf32> to vector<1x8xf32>
    %566 = vector.extract_strided_slice %519 {offsets = [6, 0], sizes = [1, 8], strides = [1, 1]} : vector<8x8xf32> to vector<1x8xf32>
    %567 = vector.extract_strided_slice %519 {offsets = [7, 0], sizes = [1, 8], strides = [1, 1]} : vector<8x8xf32> to vector<1x8xf32>
    %568 = tpu.concatenate %564, %565, %566, %567 in 1 : vector<1x8xf32>, vector<1x8xf32>, vector<1x8xf32>, vector<1x8xf32> -> vector<1x32xf32>
    %569 = vector.extract_strided_slice %538 {offsets = [0, 0], sizes = [1, 8], strides = [1, 1]} : vector<8x8xf32> to vector<1x8xf32>
    %570 = vector.extract_strided_slice %538 {offsets = [1, 0], sizes = [1, 8], strides = [1, 1]} : vector<8x8xf32> to vector<1x8xf32>
    %571 = vector.extract_strided_slice %538 {offsets = [2, 0], sizes = [1, 8], strides = [1, 1]} : vector<8x8xf32> to vector<1x8xf32>
    %572 = vector.extract_strided_slice %538 {offsets = [3, 0], sizes = [1, 8], strides = [1, 1]} : vector<8x8xf32> to vector<1x8xf32>
    %573 = tpu.concatenate %569, %570, %571, %572 in 1 : vector<1x8xf32>, vector<1x8xf32>, vector<1x8xf32>, vector<1x8xf32> -> vector<1x32xf32>
    %574 = vector.extract_strided_slice %538 {offsets = [4, 0], sizes = [1, 8], strides = [1, 1]} : vector<8x8xf32> to vector<1x8xf32>
    %575 = vector.extract_strided_slice %538 {offsets = [5, 0], sizes = [1, 8], strides = [1, 1]} : vector<8x8xf32> to vector<1x8xf32>
    %576 = vector.extract_strided_slice %538 {offsets = [6, 0], sizes = [1, 8], strides = [1, 1]} : vector<8x8xf32> to vector<1x8xf32>
    %577 = vector.extract_strided_slice %538 {offsets = [7, 0], sizes = [1, 8], strides = [1, 1]} : vector<8x8xf32> to vector<1x8xf32>
    %578 = tpu.concatenate %574, %575, %576, %577 in 1 : vector<1x8xf32>, vector<1x8xf32>, vector<1x8xf32>, vector<1x8xf32> -> vector<1x32xf32>
    %579 = tpu.concatenate %543, %548, %553, %558, %563, %568, %573, %578 in 0 : vector<1x32xf32>, vector<1x32xf32>, vector<1x32xf32>, vector<1x32xf32>, vector<1x32xf32>, vector<1x32xf32>, vector<1x32xf32>, vector<1x32xf32> -> vector<8x32xf32>
    %cst_140 = arith.constant dense<0.000000e+00> : vector<8x32xf32>
    %580 = tpu.matmul %579, %76, %cst_140 {dimension_numbers = #tpu.dot_dimension_numbers<[1], [0], [0], [1], [0, 0, 1, 1], [], []>} : vector<8x32xf32>, vector<32x32xf32>, vector<8x32xf32> -> vector<8x32xf32>
    %581 = vector.broadcast %78 : vector<1x32xf32> to vector<8x32xf32>
    %582 = arith.addf %580, %581 : vector<8x32xf32>
    %583 = arith.addf %342, %582 : vector<8x32xf32>
    %cst_141 = arith.constant dense<0.000000e+00> : vector<8xf32>
    %584 = vector.multi_reduction <add>, %583, %cst_141 [1] : vector<8x32xf32> to vector<8xf32>
    %585 = vector.shape_cast %584 : vector<8xf32> to vector<8x1xf32>
    %cst_142 = arith.constant 3.200000e+01 : f32
    %586 = vector.broadcast %cst_142 : f32 to vector<8x1xf32>
    %587 = arith.divf %585, %586 : vector<8x1xf32>
    %588 = vector.broadcast %587 : vector<8x1xf32> to vector<8x32xf32>
    %589 = arith.subf %583, %588 : vector<8x32xf32>
    %590 = arith.mulf %589, %589 : vector<8x32xf32>
    %cst_143 = arith.constant dense<0.000000e+00> : vector<8xf32>
    %591 = vector.multi_reduction <add>, %590, %cst_143 [1] : vector<8x32xf32> to vector<8xf32>
    %592 = vector.shape_cast %591 : vector<8xf32> to vector<8x1xf32>
    %cst_144 = arith.constant 3.200000e+01 : f32
    %593 = vector.broadcast %cst_144 : f32 to vector<8x1xf32>
    %594 = arith.divf %592, %593 : vector<8x1xf32>
    %595 = vector.broadcast %587 : vector<8x1xf32> to vector<8x32xf32>
    %596 = arith.subf %583, %595 : vector<8x32xf32>
    %cst_145 = arith.constant 9.99999974E-6 : f32
    %597 = vector.broadcast %cst_145 : f32 to vector<8x1xf32>
    %598 = arith.addf %594, %597 : vector<8x1xf32>
    %599 = math.rsqrt %598 : vector<8x1xf32>
    %600 = vector.broadcast %599 : vector<8x1xf32> to vector<8x32xf32>
    %601 = arith.mulf %596, %600 : vector<8x32xf32>
    %602 = vector.broadcast %80 : vector<1x32xf32> to vector<8x32xf32>
    %603 = arith.mulf %601, %602 : vector<8x32xf32>
    %604 = vector.broadcast %82 : vector<1x32xf32> to vector<8x32xf32>
    %605 = arith.addf %603, %604 : vector<8x32xf32>
    %c0_146 = arith.constant 0 : index
    %c0_147 = arith.constant 0 : index
    %c0_148 = arith.constant 0 : index
    %606 = vector.load %arg11[%c0_146, %c0_147, %c0_148] : memref<1x32x64xf32, #tpu.memory_space<vmem>>, vector<1x32x64xf32>
    %607 = vector.shape_cast %606 : vector<1x32x64xf32> to vector<32x64xf32>
    %cst_149 = arith.constant dense<0.000000e+00> : vector<8x64xf32>
    %608 = tpu.matmul %605, %607, %cst_149 {dimension_numbers = #tpu.dot_dimension_numbers<[1], [0], [0], [1], [0, 0, 1, 1], [], []>} : vector<8x32xf32>, vector<32x64xf32>, vector<8x64xf32> -> vector<8x64xf32>
    %c0_150 = arith.constant 0 : index
    %c0_151 = arith.constant 0 : index
    %c0_152 = arith.constant 0 : index
    %609 = vector.load %arg12[%c0_150, %c0_151, %c0_152] : memref<1x1x64xf32, #tpu.memory_space<vmem>>, vector<1x1x64xf32>
    %610 = vector.shape_cast %609 : vector<1x1x64xf32> to vector<1x64xf32>
    %611 = vector.broadcast %610 : vector<1x64xf32> to vector<8x64xf32>
    %612 = arith.addf %608, %611 : vector<8x64xf32>
    %cst_153 = arith.constant 0.000000e+00 : f32
    %613 = vector.broadcast %cst_153 : f32 to vector<8x64xf32>
    %614 = arith.maximumf %612, %613 : vector<8x64xf32>
    %c0_154 = arith.constant 0 : index
    %c0_155 = arith.constant 0 : index
    %c0_156 = arith.constant 0 : index
    %615 = vector.load %arg13[%c0_154, %c0_155, %c0_156] : memref<1x64x32xf32, #tpu.memory_space<vmem>>, vector<1x64x32xf32>
    %616 = vector.shape_cast %615 : vector<1x64x32xf32> to vector<64x32xf32>
    %cst_157 = arith.constant dense<0.000000e+00> : vector<8x32xf32>
    %617 = tpu.matmul %614, %616, %cst_157 {dimension_numbers = #tpu.dot_dimension_numbers<[1], [0], [0], [1], [0, 0, 1, 1], [], []>} : vector<8x64xf32>, vector<64x32xf32>, vector<8x32xf32> -> vector<8x32xf32>
    %c0_158 = arith.constant 0 : index
    %c0_159 = arith.constant 0 : index
    %c0_160 = arith.constant 0 : index
    %618 = vector.load %arg14[%c0_158, %c0_159, %c0_160] : memref<1x1x32xf32, #tpu.memory_space<vmem>>, vector<1x1x32xf32>
    %619 = vector.shape_cast %618 : vector<1x1x32xf32> to vector<1x32xf32>
    %620 = vector.broadcast %619 : vector<1x32xf32> to vector<8x32xf32>
    %621 = arith.addf %617, %620 : vector<8x32xf32>
    %622 = arith.addf %605, %621 : vector<8x32xf32>
    %c0_161 = arith.constant 0 : index
    %c0_162 = arith.constant 0 : index
    %c0_163 = arith.constant 0 : index
    %623 = vector.load %arg15[%c0_161, %c0_162, %c0_163] : memref<1x1x32xf32, #tpu.memory_space<vmem>>, vector<1x1x32xf32>
    %624 = vector.shape_cast %623 : vector<1x1x32xf32> to vector<1x32xf32>
    %c0_164 = arith.constant 0 : index
    %c0_165 = arith.constant 0 : index
    %c0_166 = arith.constant 0 : index
    %625 = vector.load %arg16[%c0_164, %c0_165, %c0_166] : memref<1x1x32xf32, #tpu.memory_space<vmem>>, vector<1x1x32xf32>
    %626 = vector.shape_cast %625 : vector<1x1x32xf32> to vector<1x32xf32>
    %cst_167 = arith.constant dense<0.000000e+00> : vector<8xf32>
    %627 = vector.multi_reduction <add>, %622, %cst_167 [1] : vector<8x32xf32> to vector<8xf32>
    %628 = vector.shape_cast %627 : vector<8xf32> to vector<8x1xf32>
    %cst_168 = arith.constant 3.200000e+01 : f32
    %629 = vector.broadcast %cst_168 : f32 to vector<8x1xf32>
    %630 = arith.divf %628, %629 : vector<8x1xf32>
    %631 = vector.broadcast %630 : vector<8x1xf32> to vector<8x32xf32>
    %632 = arith.subf %622, %631 : vector<8x32xf32>
    %633 = arith.mulf %632, %632 : vector<8x32xf32>
    %cst_169 = arith.constant dense<0.000000e+00> : vector<8xf32>
    %634 = vector.multi_reduction <add>, %633, %cst_169 [1] : vector<8x32xf32> to vector<8xf32>
    %635 = vector.shape_cast %634 : vector<8xf32> to vector<8x1xf32>
    %cst_170 = arith.constant 3.200000e+01 : f32
    %636 = vector.broadcast %cst_170 : f32 to vector<8x1xf32>
    %637 = arith.divf %635, %636 : vector<8x1xf32>
    %638 = vector.broadcast %630 : vector<8x1xf32> to vector<8x32xf32>
    %639 = arith.subf %622, %638 : vector<8x32xf32>
    %cst_171 = arith.constant 9.99999974E-6 : f32
    %640 = vector.broadcast %cst_171 : f32 to vector<8x1xf32>
    %641 = arith.addf %637, %640 : vector<8x1xf32>
    %642 = math.rsqrt %641 : vector<8x1xf32>
    %643 = vector.broadcast %642 : vector<8x1xf32> to vector<8x32xf32>
    %644 = arith.mulf %639, %643 : vector<8x32xf32>
    %645 = vector.broadcast %624 : vector<1x32xf32> to vector<8x32xf32>
    %646 = arith.mulf %644, %645 : vector<8x32xf32>
    %647 = vector.broadcast %626 : vector<1x32xf32> to vector<8x32xf32>
    %648 = arith.addf %646, %647 : vector<8x32xf32>
    %c0_172 = arith.constant 0 : index
    %c0_173 = arith.constant 0 : index
    %649 = vector.load %arg20[%c0_172, %c0_173] : memref<8x32xf32, #tpu.memory_space<vmem>>, vector<8x32xf32>
    tpu.vector_store %arg20[%c0_172, %c0_173], %648 {strides = array<i32>} : memref<8x32xf32, #tpu.memory_space<vmem>>, vector<8x32xf32>,
    %c0_174 = arith.constant 0 : index
    %c0_175 = arith.constant 0 : index
    %c0_176 = arith.constant 0 : index
    %650 = vector.load %arg17[%c0_174, %c0_175, %c0_176] : memref<1x8x32xf32, #tpu.memory_space<vmem>>, vector<1x8x32xf32>
    %651 = vector.shape_cast %650 : vector<1x8x32xf32> to vector<8x32xf32>
    %652 = vector.shape_cast %648 : vector<8x32xf32> to vector<1x8x32xf32>
    tpu.vector_store %arg17[%c0_174, %c0_175, %c0_176], %652 {strides = array<i32>} : memref<1x8x32xf32, #tpu.memory_space<vmem>>, vector<1x8x32xf32>,
    return
  }
  func.func @transform_0(%arg0: i32, %arg1: i32) -> (i32, i32, i32) {
    %c0_i32 = arith.constant 0 : i32
    %c0_i32_0 = arith.constant 0 : i32
    %c0_i32_1 = arith.constant 0 : i32
    return %arg0, %c0_i32, %c0_i32_0 : i32, i32, i32
  }
  func.func @transform_1(%arg0: i32, %arg1: i32) -> (i32, i32, i32) {
    %c0_i32 = arith.constant 0 : i32
    %c0_i32_0 = arith.constant 0 : i32
    %c0_i32_1 = arith.constant 0 : i32
    return %arg0, %c0_i32, %c0_i32_0 : i32, i32, i32
  }
  func.func @transform_2(%arg0: i32, %arg1: i32) -> (i32, i32, i32) {
    %c0_i32 = arith.constant 0 : i32
    %c0_i32_0 = arith.constant 0 : i32
    %c0_i32_1 = arith.constant 0 : i32
    %c0_i32_2 = arith.constant 0 : i32
    return %c0_i32, %c0_i32_0, %c0_i32_1 : i32, i32, i32
  }
  func.func @transform_3(%arg0: i32, %arg1: i32) -> (i32, i32, i32) {
    %c0_i32 = arith.constant 0 : i32
    %c0_i32_0 = arith.constant 0 : i32
    %c0_i32_1 = arith.constant 0 : i32
    return %arg1, %c0_i32, %c0_i32_0 : i32, i32, i32
  }
  func.func @transform_4(%arg0: i32, %arg1: i32) -> (i32, i32, i32) {
    %c0_i32 = arith.constant 0 : i32
    %c0_i32_0 = arith.constant 0 : i32
    %c0_i32_1 = arith.constant 0 : i32
    return %arg1, %c0_i32, %c0_i32_0 : i32, i32, i32
  }
  func.func @transform_5(%arg0: i32, %arg1: i32) -> (i32, i32, i32) {
    %c0_i32 = arith.constant 0 : i32
    %c0_i32_0 = arith.constant 0 : i32
    %c0_i32_1 = arith.constant 0 : i32
    return %arg1, %c0_i32, %c0_i32_0 : i32, i32, i32
  }
  func.func @transform_6(%arg0: i32, %arg1: i32) -> (i32, i32, i32) {
    %c0_i32 = arith.constant 0 : i32
    %c0_i32_0 = arith.constant 0 : i32
    %c0_i32_1 = arith.constant 0 : i32
    return %arg1, %c0_i32, %c0_i32_0 : i32, i32, i32
  }
  func.func @transform_7(%arg0: i32, %arg1: i32) -> (i32, i32, i32) {
    %c0_i32 = arith.constant 0 : i32
    %c0_i32_0 = arith.constant 0 : i32
    %c0_i32_1 = arith.constant 0 : i32
    return %arg1, %c0_i32, %c0_i32_0 : i32, i32, i32
  }
  func.func @transform_8(%arg0: i32, %arg1: i32) -> (i32, i32, i32) {
    %c0_i32 = arith.constant 0 : i32
    %c0_i32_0 = arith.constant 0 : i32
    %c0_i32_1 = arith.constant 0 : i32
    return %arg1, %c0_i32, %c0_i32_0 : i32, i32, i32
  }
  func.func @transform_9(%arg0: i32, %arg1: i32) -> (i32, i32, i32) {
    %c0_i32 = arith.constant 0 : i32
    %c0_i32_0 = arith.constant 0 : i32
    %c0_i32_1 = arith.constant 0 : i32
    return %arg1, %c0_i32, %c0_i32_0 : i32, i32, i32
  }
  func.func @transform_10(%arg0: i32, %arg1: i32) -> (i32, i32, i32) {
    %c0_i32 = arith.constant 0 : i32
    %c0_i32_0 = arith.constant 0 : i32
    %c0_i32_1 = arith.constant 0 : i32
    return %arg1, %c0_i32, %c0_i32_0 : i32, i32, i32
  }
  func.func @transform_11(%arg0: i32, %arg1: i32) -> (i32, i32, i32) {
    %c0_i32 = arith.constant 0 : i32
    %c0_i32_0 = arith.constant 0 : i32
    %c0_i32_1 = arith.constant 0 : i32
    return %arg1, %c0_i32, %c0_i32_0 : i32, i32, i32
  }
  func.func @transform_12(%arg0: i32, %arg1: i32) -> (i32, i32, i32) {
    %c0_i32 = arith.constant 0 : i32
    %c0_i32_0 = arith.constant 0 : i32
    %c0_i32_1 = arith.constant 0 : i32
    return %arg1, %c0_i32, %c0_i32_0 : i32, i32, i32
  }
  func.func @transform_13(%arg0: i32, %arg1: i32) -> (i32, i32, i32) {
    %c0_i32 = arith.constant 0 : i32
    %c0_i32_0 = arith.constant 0 : i32
    %c0_i32_1 = arith.constant 0 : i32
    return %arg1, %c0_i32, %c0_i32_0 : i32, i32, i32
  }
  func.func @transform_14(%arg0: i32, %arg1: i32) -> (i32, i32, i32) {
    %c0_i32 = arith.constant 0 : i32
    %c0_i32_0 = arith.constant 0 : i32
    %c0_i32_1 = arith.constant 0 : i32
    return %arg1, %c0_i32, %c0_i32_0 : i32, i32, i32
  }
  func.func @transform_15(%arg0: i32, %arg1: i32) -> (i32, i32, i32) {
    %c0_i32 = arith.constant 0 : i32
    %c0_i32_0 = arith.constant 0 : i32
    %c0_i32_1 = arith.constant 0 : i32
    return %arg0, %c0_i32, %c0_i32_0 : i32, i32, i32
  }
  func.func @transform_16(%arg0: i32, %arg1: i32) -> (i32, i32, i32, i32) {
    %c0_i32 = arith.constant 0 : i32
    %c0_i32_0 = arith.constant 0 : i32
    %c0_i32_1 = arith.constant 0 : i32
    return %arg1, %arg0, %c0_i32, %c0_i32_0 : i32, i32, i32, i32
  }
  func.func @transform_17(%arg0: i32, %arg1: i32) -> (i32, i32, i32, i32) {
    %c0_i32 = arith.constant 0 : i32
    %c0_i32_0 = arith.constant 0 : i32
    %c0_i32_1 = arith.constant 0 : i32
    return %arg1, %arg0, %c0_i32, %c0_i32_0 : i32, i32, i32, i32
  }
}

</mosaic_0001>

<llo_original>
// kernel: tpu_custom_call.1
$region0: #{tpu_custom_call.1}
  #allocation0 [shape = 'u32[]', space=smem, size = 0x4, offset = 0x4, fixed_abs, tag = 'smem constant byte address 0x4 - core index']
  #allocation1 [shape = 'u32[144,128]{1,0:T(1,128)}', space=vmem, size = 0x12000, scoped, tag = 'internal scratch']
  #allocation2 [shape = 'f32[8,32]{1,0:T(8,128)}', space=vmem, size = 0x1000, scoped, tag = 'scratch operand']
  %s0 = inlined_call_operand.hbm [shape: f32[2,8,32], index: 0, kind: input, shape index: {}]
  %s1 = inlined_call_operand.hbm [shape: f32[2,8,32], index: 1, kind: input, shape index: {}]
  %s2 = inlined_call_operand.hbm [shape: f32[2,8,8], index: 2, kind: input, shape index: {}]
  %s3 = inlined_call_operand.vmem [shape: f32[2,32,96], index: 3, kind: input, shape index: {}]
  %s4 = inlined_call_operand.vmem [shape: f32[2,1,96], index: 4, kind: input, shape index: {}]
  %s5 = inlined_call_operand.vmem [shape: f32[2,32,32], index: 5, kind: input, shape index: {}]
  %s6 = inlined_call_operand.vmem [shape: f32[2,1,32], index: 6, kind: input, shape index: {}]
  %s7 = inlined_call_operand.vmem [shape: f32[2,1,32], index: 7, kind: input, shape index: {}]
  %s8 = inlined_call_operand.vmem [shape: f32[2,1,32], index: 8, kind: input, shape index: {}]
  %s9 = inlined_call_operand.vmem [shape: f32[2,32,64], index: 9, kind: input, shape index: {}]
  %s10 = inlined_call_operand.vmem [shape: f32[2,1,64], index: 10, kind: input, shape index: {}]
  %s11 = inlined_call_operand.vmem [shape: f32[2,64,32], index: 11, kind: input, shape index: {}]
  %s12 = inlined_call_operand.vmem [shape: f32[2,1,32], index: 12, kind: input, shape index: {}]
  %s13 = inlined_call_operand.vmem [shape: f32[2,1,32], index: 13, kind: input, shape index: {}]
  %s14 = inlined_call_operand.vmem [shape: f32[2,1,32], index: 14, kind: input, shape index: {}]
  %s15 = inlined_call_operand.hbm [shape: f32[2,8,32], index: 15, kind: output, shape index: {0}]
  %s16 = inlined_call_operand.hbm [shape: f32[2,8,8,8], index: 16, kind: output, shape index: {1}]
  %s17 = inlined_call_operand.hbm [shape: f32[2,8,8,8], index: 17, kind: output, shape index: {2}]
  %18 = xla_tuple %s15, %s16, %s17
  %s19 = sld [smem:[#allocation0]]
  $region125: #{tpu_custom_call.1} parent=0
    _
  %s21 = ssub.s32 1, %s19
  %s22 = scalar_select 0, %s21, %s19
  $region1: #{tpu_custom_call.1} parent=0
    #allocation3 [shape = 'u8[8192]{0}', space=vmem, size = 0x2000, scoped, tag = 'input window, operand 0']
    #allocation4 [shape = 's32[2]{0}', space=sflag, size = 0x8, scoped, tag = 'scoped memory for tpu_custom_call.1']
    #allocation5 [shape = 's32[2]{0}', space=sflag, size = 0x8, scoped, tag = 'scoped memory for tpu_custom_call.1']
    #allocation6 [shape = 'u8[8192]{0}', space=vmem, size = 0x2000, scoped, tag = 'input window, operand 1']
    #allocation7 [shape = 's32[2]{0}', space=sflag, size = 0x8, scoped, tag = 'scoped memory for tpu_custom_call.1']
    #allocation8 [shape = 'u8[8192]{0}', space=vmem, size = 0x2000, scoped, tag = 'input window, operand 2, single buffered']
    #allocation9 [shape = 'u8[8192]{0}', space=vmem, size = 0x2000, scoped, tag = 'output window, operand 0']
    #allocation10 [shape = 'u8[32768]{0}', space=vmem, size = 0x8000, scoped, tag = 'output window, operand 1']
    #allocation11 [shape = 's32[2]{0}', space=sflag, size = 0x8, scoped, tag = 'scoped memory for tpu_custom_call.1']
    #allocation12 [shape = 'u8[32768]{0}', space=vmem, size = 0x8000, scoped, tag = 'output window, operand 2']
    %23 = vsyncpa [#allocation4], 0
    %s24 = scalar_lea.sflag [#allocation4], 1
    %25 = vsyncpa %s24, 0
    %26 = vsyncpa [#allocation7], 0
    %s27 = scalar_lea.sflag [#allocation7], 1
    %28 = vsyncpa %s27, 0
    %29 = vsyncpa [#allocation5], 0
    %s30 = scalar_lea.sflag [#allocation5], 1
    %31 = vsyncpa %s30, 0
    %32 = vsyncpa [#allocation11], 0
    %s33 = scalar_lea.sflag [#allocation11], 1
    %34 = vsyncpa %s33, 0
    loop: start=0, step=1, limit=6
    $region2: #{tpu_custom_call.1} parent=1 // loop_pre_header
      _
    $region3: #{tpu_custom_call.1} parent=1 // loop_header
      %s36 = sphi 0, %s40
      %p37 = scmp.ge.s32.totalorder %s36, 6
      %s43 = sphi 0, %s55
      %s44 = sphi 0, %s51
      %s45 = sphi 0, %s43
      %s46 = sphi 0, %s44
      %s47 = sphi 0, %s45
      %s48 = sphi 0, %s46
      %s58 = sphi 0, %s60
      %s61 = sphi 0, %s58
      %s62 = sphi 0, %s61
      %s78 = sphi 0, %s62
      %s84 = sphi 0, %s86
      %s87 = sphi 0, %s84
      %s88 = sphi 0, %s87
      %s104 = sphi 0, %s88
      %s108 = sphi 0, %s108
      %s110 = sphi 0, %s108
      %s111 = sphi 0, %s110
      %s125 = sphi 0, %s111
      %s131 = sphi 0, %s133
      %s134 = sphi 0, %s131
      %s135 = sphi 0, %s134
      %s151 = sphi 0, %s135
      %s157 = sphi 0, %s159
      %s160 = sphi 0, %s157
      %s161 = sphi 0, %s160
      %s177 = sphi 0, %s161
      %s183 = sphi 0, %s185
      %s186 = sphi 0, %s183
      %s187 = sphi 0, %s186
      %s203 = sphi 0, %s187
      %s209 = sphi 0, %s211
      %s212 = sphi 0, %s209
      %s213 = sphi 0, %s212
      %s229 = sphi 0, %s213
      %s235 = sphi 0, %s237
      %s238 = sphi 0, %s235
      %s239 = sphi 0, %s238
      %s255 = sphi 0, %s239
      %s261 = sphi 0, %s263
      %s264 = sphi 0, %s261
      %s265 = sphi 0, %s264
      %s281 = sphi 0, %s265
      %s287 = sphi 0, %s289
      %s290 = sphi 0, %s287
      %s291 = sphi 0, %s290
      %s307 = sphi 0, %s291
      %s313 = sphi 0, %s315
      %s316 = sphi 0, %s313
      %s317 = sphi 0, %s316
      %s333 = sphi 0, %s317
      %s339 = sphi 0, %s341
      %s342 = sphi 0, %s339
      %s343 = sphi 0, %s342
      %s359 = sphi 0, %s343
      %s365 = sphi 0, %s367
      %s368 = sphi 0, %s365
      %s369 = sphi 0, %s368
      %s385 = sphi 0, %s369
      %s391 = sphi 0, %s393
      %s394 = sphi 0, %s391
      %s395 = sphi 0, %s394
      %s411 = sphi 0, %s395
      %s417 = sphi 0, %s419
      %s420 = sphi 0, %s417
      %s421 = sphi 0, %s420
      %s437 = sphi 0, %s421
      %s443 = sphi 0, %s445
      %s446 = sphi 0, %s443
      %s447 = sphi 0, %s446
      %s463 = sphi 0, %s447
      %s471 = sphi 0, %s473
      %s474 = sphi 0, %s471
      %s475 = sphi 0, %s474
      %s491 = sphi 0, %s475
      %s499 = sphi 0, %s501
      %s502 = sphi 0, %s499
      %s503 = sphi 0, %s502
      %s519 = sphi 0, %s503
    $region4: #{tpu_custom_call.1} parent=1 // loop_header_branch
      %39 = sbr.rel (%p37) target = $region8
    $region5: #{tpu_custom_call.1} parent=1 // loop_body
      %s41 = ssub.s32 %s36, 1
      %s42 = ssub.s32 %s36, 2
      %s49 = sadd.s32 1, %s44
      %p50 = scmp.ge.s32.totalorder %s49, 2
      %s51 = scalar_select %p50, 0, %s49
      %s52 = sadd.s32 1, %s43
      %s53 = scalar_select %p50, %s52, %s43
      %p54 = scmp.ge.s32.totalorder %s53, 2
      %s55 = scalar_select %p54, 0, %s53
      %s56 = ssub.s32 %s43, %s55
      %p57 = scmp.eq.s32.totalorder %s56, 0
      %s59 = sadd.s32 %s58, 1
      %s60 = scalar_select %p57, %s58, %s59
      %p63 = pneg %p57
      %p64 = scmp.eq.s32.totalorder %s36, 3
      %p65 = por %p63, %p64
      %p66 = scmp.ne.s32.totalorder %s58, %s61
      %p67 = scmp.eq.s32.totalorder %s36, 0
      %p68 = por %p66, %p67
      %p69 = scmp.ne.s32.totalorder %s58, %s61
      %p70 = scmp.eq.s32.totalorder %s41, 3
      %p71 = por %p69, %p70
      %p72 = scmp.ne.s32.totalorder %s61, %s62
      %p73 = scmp.eq.s32.totalorder %s41, 0
      %p74 = por %p72, %p73
      %p75 = scmp.ne.s32.totalorder %s61, %s62
      %p76 = scmp.eq.s32.totalorder %s42, 3
      %p77 = por %p75, %p76
      %p79 = scmp.ne.s32.totalorder %s62, %s78
      %p80 = scmp.eq.s32.totalorder %s42, 0
      %p81 = por %p79, %p80
      %s82 = ssub.s32 %s43, %s55
      %p83 = scmp.eq.s32.totalorder %s82, 0
      %s85 = sadd.s32 %s84, 1
      %s86 = scalar_select %p83, %s84, %s85
      %p89 = pneg %p83
      %p90 = scmp.eq.s32.totalorder %s36, 3
      %p91 = por %p89, %p90
      %p92 = scmp.ne.s32.totalorder %s84, %s87
      %p93 = scmp.eq.s32.totalorder %s36, 0
      %p94 = por %p92, %p93
      %p95 = scmp.ne.s32.totalorder %s84, %s87
      %p96 = scmp.eq.s32.totalorder %s41, 3
      %p97 = por %p95, %p96
      %p98 = scmp.ne.s32.totalorder %s87, %s88
      %p99 = scmp.eq.s32.totalorder %s41, 0
      %p100 = por %p98, %p99
      %p101 = scmp.ne.s32.totalorder %s87, %s88
      %p102 = scmp.eq.s32.totalorder %s42, 3
      %p103 = por %p101, %p102
      %p105 = scmp.ne.s32.totalorder %s88, %s104
      %p106 = scmp.eq.s32.totalorder %s42, 0
      %p107 = por %p105, %p106
      %s109 = sadd.s32 %s108, 1
      %p112 = scmp.eq.s32.totalorder %s36, 3
      %p113 = scmp.ne.s32.totalorder %s108, %s110
      %p114 = scmp.eq.s32.totalorder %s36, 0
      %p115 = por %p113, %p114
      %p116 = scmp.ne.s32.totalorder %s108, %s110
      %p117 = scmp.eq.s32.totalorder %s41, 3
      %p118 = por %p116, %p117
      %p119 = scmp.ne.s32.totalorder %s110, %s111
      %p120 = scmp.eq.s32.totalorder %s41, 0
      %p121 = por %p119, %p120
      %p122 = scmp.ne.s32.totalorder %s110, %s111
      %p123 = scmp.eq.s32.totalorder %s42, 3
      %p124 = por %p122, %p123
      %p126 = scmp.ne.s32.totalorder %s111, %s125
      %p127 = scmp.eq.s32.totalorder %s42, 0
      %p128 = por %p126, %p127
      %s129 = ssub.s32 %s44, %s51
      %p130 = scmp.eq.s32.totalorder %s129, 0
      %s132 = sadd.s32 %s131, 1
      %s133 = scalar_select %p130, %s131, %s132
      %p136 = pneg %p130
      %p137 = scmp.eq.s32.totalorder %s36, 3
      %p138 = por %p136, %p137
      %p139 = scmp.ne.s32.totalorder %s131, %s134
      %p140 = scmp.eq.s32.totalorder %s36, 0
      %p141 = por %p139, %p140
      %p142 = scmp.ne.s32.totalorder %s131, %s134
      %p143 = scmp.eq.s32.totalorder %s41, 3
      %p144 = por %p142, %p143
      %p145 = scmp.ne.s32.totalorder %s134, %s135
      %p146 = scmp.eq.s32.totalorder %s41, 0
      %p147 = por %p145, %p146
      %p148 = scmp.ne.s32.totalorder %s134, %s135
      %p149 = scmp.eq.s32.totalorder %s42, 3
      %p150 = por %p148, %p149
      %p152 = scmp.ne.s32.totalorder %s135, %s151
      %p153 = scmp.eq.s32.totalorder %s42, 0
      %p154 = por %p152, %p153
      %s155 = ssub.s32 %s44, %s51
      %p156 = scmp.eq.s32.totalorder %s155, 0
      %s158 = sadd.s32 %s157, 1
      %s159 = scalar_select %p156, %s157, %s158
      %p162 = pneg %p156
      %p163 = scmp.eq.s32.totalorder %s36, 3
      %p164 = por %p162, %p163
      %p165 = scmp.ne.s32.totalorder %s157, %s160
      %p166 = scmp.eq.s32.totalorder %s36, 0
      %p167 = por %p165, %p166
      %p168 = scmp.ne.s32.totalorder %s157, %s160
      %p169 = scmp.eq.s32.totalorder %s41, 3
      %p170 = por %p168, %p169
      %p171 = scmp.ne.s32.totalorder %s160, %s161
      %p172 = scmp.eq.s32.totalorder %s41, 0
      %p173 = por %p171, %p172
      %p174 = scmp.ne.s32.totalorder %s160, %s161
      %p175 = scmp.eq.s32.totalorder %s42, 3
      %p176 = por %p174, %p175
      %p178 = scmp.ne.s32.totalorder %s161, %s177
      %p179 = scmp.eq.s32.totalorder %s42, 0
      %p180 = por %p178, %p179
      %s181 = ssub.s32 %s44, %s51
      %p182 = scmp.eq.s32.totalorder %s181, 0
      %s184 = sadd.s32 %s183, 1
      %s185 = scalar_select %p182, %s183, %s184
      %p188 = pneg %p182
      %p189 = scmp.eq.s32.totalorder %s36, 3
      %p190 = por %p188, %p189
      %p191 = scmp.ne.s32.totalorder %s183, %s186
      %p192 = scmp.eq.s32.totalorder %s36, 0
      %p193 = por %p191, %p192
      %p194 = scmp.ne.s32.totalorder %s183, %s186
      %p195 = scmp.eq.s32.totalorder %s41, 3
      %p196 = por %p194, %p195
      %p197 = scmp.ne.s32.totalorder %s186, %s187
      %p198 = scmp.eq.s32.totalorder %s41, 0
      %p199 = por %p197, %p198
      %p200 = scmp.ne.s32.totalorder %s186, %s187
      %p201 = scmp.eq.s32.totalorder %s42, 3
      %p202 = por %p200, %p201
      %p204 = scmp.ne.s32.totalorder %s187, %s203
      %p205 = scmp.eq.s32.totalorder %s42, 0
      %p206 = por %p204, %p205
      %s207 = ssub.s32 %s44, %s51
      %p208 = scmp.eq.s32.totalorder %s207, 0
      %s210 = sadd.s32 %s209, 1
      %s211 = scalar_select %p208, %s209, %s210
      %p214 = pneg %p208
      %p215 = scmp.eq.s32.totalorder %s36, 3
      %p216 = por %p214, %p215
      %p217 = scmp.ne.s32.totalorder %s209, %s212
      %p218 = scmp.eq.s32.totalorder %s36, 0
      %p219 = por %p217, %p218
      %p220 = scmp.ne.s32.totalorder %s209, %s212
      %p221 = scmp.eq.s32.totalorder %s41, 3
      %p222 = por %p220, %p221
      %p223 = scmp.ne.s32.totalorder %s212, %s213
      %p224 = scmp.eq.s32.totalorder %s41, 0
      %p225 = por %p223, %p224
      %p226 = scmp.ne.s32.totalorder %s212, %s213
      %p227 = scmp.eq.s32.totalorder %s42, 3
      %p228 = por %p226, %p227
      %p230 = scmp.ne.s32.totalorder %s213, %s229
      %p231 = scmp.eq.s32.totalorder %s42, 0
      %p232 = por %p230, %p231
      %s233 = ssub.s32 %s44, %s51
      %p234 = scmp.eq.s32.totalorder %s233, 0
      %s236 = sadd.s32 %s235, 1
      %s237 = scalar_select %p234, %s235, %s236
      %p240 = pneg %p234
      %p241 = scmp.eq.s32.totalorder %s36, 3
      %p242 = por %p240, %p241
      %p243 = scmp.ne.s32.totalorder %s235, %s238
      %p244 = scmp.eq.s32.totalorder %s36, 0
      %p245 = por %p243, %p244
      %p246 = scmp.ne.s32.totalorder %s235, %s238
      %p247 = scmp.eq.s32.totalorder %s41, 3
      %p248 = por %p246, %p247
      %p249 = scmp.ne.s32.totalorder %s238, %s239
      %p250 = scmp.eq.s32.totalorder %s41, 0
      %p251 = por %p249, %p250
      %p252 = scmp.ne.s32.totalorder %s238, %s239
      %p253 = scmp.eq.s32.totalorder %s42, 3
      %p254 = por %p252, %p253
      %p256 = scmp.ne.s32.totalorder %s239, %s255
      %p257 = scmp.eq.s32.totalorder %s42, 0
      %p258 = por %p256, %p257
      %s259 = ssub.s32 %s44, %s51
      %p260 = scmp.eq.s32.totalorder %s259, 0
      %s262 = sadd.s32 %s261, 1
      %s263 = scalar_select %p260, %s261, %s262
      %p266 = pneg %p260
      %p267 = scmp.eq.s32.totalorder %s36, 3
      %p268 = por %p266, %p267
      %p269 = scmp.ne.s32.totalorder %s261, %s264
      %p270 = scmp.eq.s32.totalorder %s36, 0
      %p271 = por %p269, %p270
      %p272 = scmp.ne.s32.totalorder %s261, %s264
      %p273 = scmp.eq.s32.totalorder %s41, 3
      %p274 = por %p272, %p273
      %p275 = scmp.ne.s32.totalorder %s264, %s265
      %p276 = scmp.eq.s32.totalorder %s41, 0
      %p277 = por %p275, %p276
      %p278 = scmp.ne.s32.totalorder %s264, %s265
      %p279 = scmp.eq.s32.totalorder %s42, 3
      %p280 = por %p278, %p279
      %p282 = scmp.ne.s32.totalorder %s265, %s281
      %p283 = scmp.eq.s32.totalorder %s42, 0
      %p284 = por %p282, %p283
      %s285 = ssub.s32 %s44, %s51
      %p286 = scmp.eq.s32.totalorder %s285, 0
      %s288 = sadd.s32 %s287, 1
      %s289 = scalar_select %p286, %s287, %s288
      %p292 = pneg %p286
      %p293 = scmp.eq.s32.totalorder %s36, 3
      %p294 = por %p292, %p293
      %p295 = scmp.ne.s32.totalorder %s287, %s290
      %p296 = scmp.eq.s32.totalorder %s36, 0
      %p297 = por %p295, %p296
      %p298 = scmp.ne.s32.totalorder %s287, %s290
      %p299 = scmp.eq.s32.totalorder %s41, 3
      %p300 = por %p298, %p299
      %p301 = scmp.ne.s32.totalorder %s290, %s291
      %p302 = scmp.eq.s32.totalorder %s41, 0
      %p303 = por %p301, %p302
      %p304 = scmp.ne.s32.totalorder %s290, %s291
      %p305 = scmp.eq.s32.totalorder %s42, 3
      %p306 = por %p304, %p305
      %p308 = scmp.ne.s32.totalorder %s291, %s307
      %p309 = scmp.eq.s32.totalorder %s42, 0
      %p310 = por %p308, %p309
      %s311 = ssub.s32 %s44, %s51
      %p312 = scmp.eq.s32.totalorder %s311, 0
      %s314 = sadd.s32 %s313, 1
      %s315 = scalar_select %p312, %s313, %s314
      %p318 = pneg %p312
      %p319 = scmp.eq.s32.totalorder %s36, 3
      %p320 = por %p318, %p319
      %p321 = scmp.ne.s32.totalorder %s313, %s316
      %p322 = scmp.eq.s32.totalorder %s36, 0
      %p323 = por %p321, %p322
      %p324 = scmp.ne.s32.totalorder %s313, %s316
      %p325 = scmp.eq.s32.totalorder %s41, 3
      %p326 = por %p324, %p325
      %p327 = scmp.ne.s32.totalorder %s316, %s317
      %p328 = scmp.eq.s32.totalorder %s41, 0
      %p329 = por %p327, %p328
      %p330 = scmp.ne.s32.totalorder %s316, %s317
      %p331 = scmp.eq.s32.totalorder %s42, 3
      %p332 = por %p330, %p331
      %p334 = scmp.ne.s32.totalorder %s317, %s333
      %p335 = scmp.eq.s32.totalorder %s42, 0
      %p336 = por %p334, %p335
      %s337 = ssub.s32 %s44, %s51
      %p338 = scmp.eq.s32.totalorder %s337, 0
      %s340 = sadd.s32 %s339, 1
      %s341 = scalar_select %p338, %s339, %s340
      %p344 = pneg %p338
      %p345 = scmp.eq.s32.totalorder %s36, 3
      %p346 = por %p344, %p345
      %p347 = scmp.ne.s32.totalorder %s339, %s342
      %p348 = scmp.eq.s32.totalorder %s36, 0
      %p349 = por %p347, %p348
      %p350 = scmp.ne.s32.totalorder %s339, %s342
      %p351 = scmp.eq.s32.totalorder %s41, 3
      %p352 = por %p350, %p351
      %p353 = scmp.ne.s32.totalorder %s342, %s343
      %p354 = scmp.eq.s32.totalorder %s41, 0
      %p355 = por %p353, %p354
      %p356 = scmp.ne.s32.totalorder %s342, %s343
      %p357 = scmp.eq.s32.totalorder %s42, 3
      %p358 = por %p356, %p357
      %p360 = scmp.ne.s32.totalorder %s343, %s359
      %p361 = scmp.eq.s32.totalorder %s42, 0
      %p362 = por %p360, %p361
      %s363 = ssub.s32 %s44, %s51
      %p364 = scmp.eq.s32.totalorder %s363, 0
      %s366 = sadd.s32 %s365, 1
      %s367 = scalar_select %p364, %s365, %s366
      %p370 = pneg %p364
      %p371 = scmp.eq.s32.totalorder %s36, 3
      %p372 = por %p370, %p371
      %p373 = scmp.ne.s32.totalorder %s365, %s368
      %p374 = scmp.eq.s32.totalorder %s36, 0
      %p375 = por %p373, %p374
      %p376 = scmp.ne.s32.totalorder %s365, %s368
      %p377 = scmp.eq.s32.totalorder %s41, 3
      %p378 = por %p376, %p377
      %p379 = scmp.ne.s32.totalorder %s368, %s369
      %p380 = scmp.eq.s32.totalorder %s41, 0
      %p381 = por %p379, %p380
      %p382 = scmp.ne.s32.totalorder %s368, %s369
      %p383 = scmp.eq.s32.totalorder %s42, 3
      %p384 = por %p382, %p383
      %p386 = scmp.ne.s32.totalorder %s369, %s385
      %p387 = scmp.eq.s32.totalorder %s42, 0
      %p388 = por %p386, %p387
      %s389 = ssub.s32 %s44, %s51
      %p390 = scmp.eq.s32.totalorder %s389, 0
      %s392 = sadd.s32 %s391, 1
      %s393 = scalar_select %p390, %s391, %s392
      %p396 = pneg %p390
      %p397 = scmp.eq.s32.totalorder %s36, 3
      %p398 = por %p396, %p397
      %p399 = scmp.ne.s32.totalorder %s391, %s394
      %p400 = scmp.eq.s32.totalorder %s36, 0
      %p401 = por %p399, %p400
      %p402 = scmp.ne.s32.totalorder %s391, %s394
      %p403 = scmp.eq.s32.totalorder %s41, 3
      %p404 = por %p402, %p403
      %p405 = scmp.ne.s32.totalorder %s394, %s395
      %p406 = scmp.eq.s32.totalorder %s41, 0
      %p407 = por %p405, %p406
      %p408 = scmp.ne.s32.totalorder %s394, %s395
      %p409 = scmp.eq.s32.totalorder %s42, 3
      %p410 = por %p408, %p409
      %p412 = scmp.ne.s32.totalorder %s395, %s411
      %p413 = scmp.eq.s32.totalorder %s42, 0
      %p414 = por %p412, %p413
      %s415 = ssub.s32 %s44, %s51
      %p416 = scmp.eq.s32.totalorder %s415, 0
      %s418 = sadd.s32 %s417, 1
      %s419 = scalar_select %p416, %s417, %s418
      %p422 = pneg %p416
      %p423 = scmp.eq.s32.totalorder %s36, 3
      %p424 = por %p422, %p423
      %p425 = scmp.ne.s32.totalorder %s417, %s420
      %p426 = scmp.eq.s32.totalorder %s36, 0
      %p427 = por %p425, %p426
      %p428 = scmp.ne.s32.totalorder %s417, %s420
      %p429 = scmp.eq.s32.totalorder %s41, 3
      %p430 = por %p428, %p429
      %p431 = scmp.ne.s32.totalorder %s420, %s421
      %p432 = scmp.eq.s32.totalorder %s41, 0
      %p433 = por %p431, %p432
      %p434 = scmp.ne.s32.totalorder %s420, %s421
      %p435 = scmp.eq.s32.totalorder %s42, 3
      %p436 = por %p434, %p435
      %p438 = scmp.ne.s32.totalorder %s421, %s437
      %p439 = scmp.eq.s32.totalorder %s42, 0
      %p440 = por %p438, %p439
      %s441 = ssub.s32 %s43, %s55
      %p442 = scmp.eq.s32.totalorder %s441, 0
      %s444 = sadd.s32 %s443, 1
      %s445 = scalar_select %p442, %s443, %s444
      %p448 = pneg %p442
      %p449 = scmp.eq.s32.totalorder %s36, 3
      %p450 = por %p448, %p449
      %p451 = scmp.ne.s32.totalorder %s443, %s446
      %p452 = scmp.eq.s32.totalorder %s36, 0
      %p453 = por %p451, %p452
      %p454 = scmp.ne.s32.totalorder %s443, %s446
      %p455 = scmp.eq.s32.totalorder %s41, 3
      %p456 = por %p454, %p455
      %p457 = scmp.ne.s32.totalorder %s446, %s447
      %p458 = scmp.eq.s32.totalorder %s41, 0
      %p459 = por %p457, %p458
      %p460 = scmp.ne.s32.totalorder %s446, %s447
      %p461 = scmp.eq.s32.totalorder %s42, 3
      %p462 = por %p460, %p461
      %p464 = scmp.ne.s32.totalorder %s447, %s463
      %p465 = scmp.eq.s32.totalorder %s42, 0
      %p466 = por %p464, %p465
      %s467 = ssub.s32 %s44, %s51
      %s468 = ssub.s32 %s43, %s55
      %s469 = sor.u32 %s467, %s468
      %p470 = scmp.eq.s32.totalorder %s469, 0
      %s472 = sadd.s32 %s471, 1
      %s473 = scalar_select %p470, %s471, %s472
      %p476 = pneg %p470
      %p477 = scmp.eq.s32.totalorder %s36, 3
      %p478 = por %p476, %p477
      %p479 = scmp.ne.s32.totalorder %s471, %s474
      %p480 = scmp.eq.s32.totalorder %s36, 0
      %p481 = por %p479, %p480
      %p482 = scmp.ne.s32.totalorder %s471, %s474
      %p483 = scmp.eq.s32.totalorder %s41, 3
      %p484 = por %p482, %p483
      %p485 = scmp.ne.s32.totalorder %s474, %s475
      %p486 = scmp.eq.s32.totalorder %s41, 0
      %p487 = por %p485, %p486
      %p488 = scmp.ne.s32.totalorder %s474, %s475
      %p489 = scmp.eq.s32.totalorder %s42, 3
      %p490 = por %p488, %p489
      %p492 = scmp.ne.s32.totalorder %s475, %s491
      %p493 = scmp.eq.s32.totalorder %s42, 0
      %p494 = por %p492, %p493
      %s495 = ssub.s32 %s44, %s51
      %s496 = ssub.s32 %s43, %s55
      %s497 = sor.u32 %s495, %s496
      %p498 = scmp.eq.s32.totalorder %s497, 0
      %s500 = sadd.s32 %s499, 1
      %s501 = scalar_select %p498, %s499, %s500
      %p504 = pneg %p498
      %p505 = scmp.eq.s32.totalorder %s36, 3
      %p506 = por %p504, %p505
      %p507 = scmp.ne.s32.totalorder %s499, %s502
      %p508 = scmp.eq.s32.totalorder %s36, 0
      %p509 = por %p507, %p508
      %p510 = scmp.ne.s32.totalorder %s499, %s502
      %p511 = scmp.eq.s32.totalorder %s41, 3
      %p512 = por %p510, %p511
      %p513 = scmp.ne.s32.totalorder %s502, %s503
      %p514 = scmp.eq.s32.totalorder %s41, 0
      %p515 = por %p513, %p514
      %p516 = scmp.ne.s32.totalorder %s502, %s503
      %p517 = scmp.eq.s32.totalorder %s42, 3
      %p518 = por %p516, %p517
      %p520 = scmp.ne.s32.totalorder %s503, %s519
      %p521 = scmp.eq.s32.totalorder %s42, 0
      %p522 = por %p520, %p521
      %p523 = scmp.le.s32.totalorder 1, %s36
      %p524 = scmp.lt.s32.totalorder %s36, 5
      %p525 = pnand %p523, %p524
      %p526 = pneg %p525
      // Predicated region
      $region9: #{tpu_custom_call.1} parent=5 // pred_check
        _
      $region10: #{tpu_custom_call.1} parent=5 // pred_check_branch
        %528 = sbr.rel (%p525) target = $region12
      $region11: #{tpu_custom_call.1} parent=5 // pred_region
        %s529 = ssub.s32 %s36, 1
        // Predicated region
        $region13: #{tpu_custom_call.1} parent=11 // pred_check
          %p530 = pneg %p121
        $region14: #{tpu_custom_call.1} parent=11 // pred_check_branch
          %532 = sbr.rel (%p530) target = $region16
        $region15: #{tpu_custom_call.1} parent=11 // pred_region
          %s534 = ssub.s32 256, 256
          %535 = vsyncadd [#allocation7], %s534
          %s536 = sshll.u32 [#allocation8], 4
          %s537 = int_to_ptr.vmem [resolvable:$true] %s536
          %542 = dma.hbm_to_vmem [thread:$0]  %s2, 256, %s537, [#allocation7], 128, 128, 8
        $region16: #{tpu_custom_call.1} parent=11 // pred_fallthru
          _
      $region12: #{tpu_custom_call.1} parent=5 // pred_fallthru
        _
      %p543 = scmp.lt.s32.totalorder %s36, 4
      // Predicated region
      $region17: #{tpu_custom_call.1} parent=5 // pred_check
        %p544 = pneg %p543
      $region18: #{tpu_custom_call.1} parent=5 // pred_check_branch
        %546 = sbr.rel (%p544) target = $region20
      $region19: #{tpu_custom_call.1} parent=5 // pred_region
        // Predicated region
        $region21: #{tpu_custom_call.1} parent=19 // pred_check
          %p547 = pneg %p68
        $region22: #{tpu_custom_call.1} parent=19 // pred_check_branch
          %549 = sbr.rel (%p547) target = $region24
        $region23: #{tpu_custom_call.1} parent=19 // pred_region
          %s550 = sand.u32 %s58, 1
          %s551 = scalar_lea.sflag [#allocation4], %s550
          %s552 = sand.u32 %s58, 1
          %s553 = smul.addr %s552, 8
          %s554 = scalar_lea.vmem [#allocation3], %s553
          %s556 = ssub.s32 128, 128
          %557 = vsyncadd %s551, %s556
          %s558 = smul.addr %s43, 128
          %s559 = scalar_lea.hbm %s0, %s558
          %s561 = sshll.u32 %s554, 4
          %s562 = int_to_ptr.vmem [resolvable:$true] %s561
          %564 = dma.hbm_to_vmem [thread:$0]  %s559, 128, %s562, %s551
        $region24: #{tpu_custom_call.1} parent=19 // pred_fallthru
          _
        // Predicated region
        $region25: #{tpu_custom_call.1} parent=19 // pred_check
          %p565 = pneg %p94
        $region26: #{tpu_custom_call.1} parent=19 // pred_check_branch
          %567 = sbr.rel (%p565) target = $region28
        $region27: #{tpu_custom_call.1} parent=19 // pred_region
          %s568 = sand.u32 %s36, 1
          %s569 = scalar_lea.sflag [#allocation7], %s568
          %s570 = sand.u32 %s84, 1
          %s571 = smul.addr %s570, 8
          %s572 = scalar_lea.vmem [#allocation6], %s571
          %s574 = ssub.s32 128, 128
          %575 = vsyncadd %s569, %s574
          %s576 = smul.addr %s43, 128
          %s577 = scalar_lea.hbm %s1, %s576
          %s579 = sshll.u32 %s572, 4
          %s580 = int_to_ptr.vmem [resolvable:$true] %s579
          %582 = dma.hbm_to_vmem [thread:$0]  %s577, 128, %s580, %s569
        $region28: #{tpu_custom_call.1} parent=19 // pred_fallthru
          _
        // Predicated region
        $region29: #{tpu_custom_call.1} parent=19 // pred_check
          %p583 = pneg %p141
        $region30: #{tpu_custom_call.1} parent=19 // pred_check_branch
          %585 = sbr.rel (%p583) target = $region32
        $region31: #{tpu_custom_call.1} parent=19 // pred_region
          %p586 = scmp.lt.s32.totalorder %s44, 1
          %s587 = scalar_select %p586, %s44, 1
          %s588 = smul.addr %s587, 4
          %s589 = smul.addr %s588, 8
          %s590 = scalar_lea.vmem %s3, %s589
        $region32: #{tpu_custom_call.1} parent=19 // pred_fallthru
          _
        // Predicated region
        $region33: #{tpu_custom_call.1} parent=19 // pred_check
          %p591 = pneg %p167
        $region34: #{tpu_custom_call.1} parent=19 // pred_check_branch
          %593 = sbr.rel (%p591) target = $region36
        $region35: #{tpu_custom_call.1} parent=19 // pred_region
          %p594 = scmp.lt.s32.totalorder %s44, 1
          %s595 = scalar_select %p594, %s44, 1
          %s596 = scalar_lea.vmem %s4, %s595
        $region36: #{tpu_custom_call.1} parent=19 // pred_fallthru
          _
        // Predicated region
        $region37: #{tpu_custom_call.1} parent=19 // pred_check
          %p597 = pneg %p193
        $region38: #{tpu_custom_call.1} parent=19 // pred_check_branch
          %599 = sbr.rel (%p597) target = $region40
        $region39: #{tpu_custom_call.1} parent=19 // pred_region
          %p600 = scmp.lt.s32.totalorder %s44, 1
          %s601 = scalar_select %p600, %s44, 1
          %s602 = smul.addr %s601, 4
          %s603 = smul.addr %s602, 8
          %s604 = scalar_lea.vmem %s5, %s603
        $region40: #{tpu_custom_call.1} parent=19 // pred_fallthru
          _
        // Predicated region
        $region41: #{tpu_custom_call.1} parent=19 // pred_check
          %p605 = pneg %p219
        $region42: #{tpu_custom_call.1} parent=19 // pred_check_branch
          %607 = sbr.rel (%p605) target = $region44
        $region43: #{tpu_custom_call.1} parent=19 // pred_region
          %p608 = scmp.lt.s32.totalorder %s44, 1
          %s609 = scalar_select %p608, %s44, 1
          %s610 = scalar_lea.vmem %s6, %s609
        $region44: #{tpu_custom_call.1} parent=19 // pred_fallthru
          _
        // Predicated region
        $region45: #{tpu_custom_call.1} parent=19 // pred_check
          %p611 = pneg %p245
        $region46: #{tpu_custom_call.1} parent=19 // pred_check_branch
          %613 = sbr.rel (%p611) target = $region48
        $region47: #{tpu_custom_call.1} parent=19 // pred_region
          %p614 = scmp.lt.s32.totalorder %s44, 1
          %s615 = scalar_select %p614, %s44, 1
          %s616 = scalar_lea.vmem %s7, %s615
        $region48: #{tpu_custom_call.1} parent=19 // pred_fallthru
          _
        // Predicated region
        $region49: #{tpu_custom_call.1} parent=19 // pred_check
          %p617 = pneg %p271
        $region50: #{tpu_custom_call.1} parent=19 // pred_check_branch
          %619 = sbr.rel (%p617) target = $region52
        $region51: #{tpu_custom_call.1} parent=19 // pred_region
          %p620 = scmp.lt.s32.totalorder %s44, 1
          %s621 = scalar_select %p620, %s44, 1
          %s622 = scalar_lea.vmem %s8, %s621
        $region52: #{tpu_custom_call.1} parent=19 // pred_fallthru
          _
        // Predicated region
        $region53: #{tpu_custom_call.1} parent=19 // pred_check
          %p623 = pneg %p297
        $region54: #{tpu_custom_call.1} parent=19 // pred_check_branch
          %625 = sbr.rel (%p623) target = $region56
        $region55: #{tpu_custom_call.1} parent=19 // pred_region
          %p626 = scmp.lt.s32.totalorder %s44, 1
          %s627 = scalar_select %p626, %s44, 1
          %s628 = smul.addr %s627, 4
          %s629 = smul.addr %s628, 8
          %s630 = scalar_lea.vmem %s9, %s629
        $region56: #{tpu_custom_call.1} parent=19 // pred_fallthru
          _
        // Predicated region
        $region57: #{tpu_custom_call.1} parent=19 // pred_check
          %p631 = pneg %p323
        $region58: #{tpu_custom_call.1} parent=19 // pred_check_branch
          %633 = sbr.rel (%p631) target = $region60
        $region59: #{tpu_custom_call.1} parent=19 // pred_region
          %p634 = scmp.lt.s32.totalorder %s44, 1
          %s635 = scalar_select %p634, %s44, 1
          %s636 = scalar_lea.vmem %s10, %s635
        $region60: #{tpu_custom_call.1} parent=19 // pred_fallthru
          _
        // Predicated region
        $region61: #{tpu_custom_call.1} parent=19 // pred_check
          %p637 = pneg %p349
        $region62: #{tpu_custom_call.1} parent=19 // pred_check_branch
          %639 = sbr.rel (%p637) target = $region64
        $region63: #{tpu_custom_call.1} parent=19 // pred_region
          %p640 = scmp.lt.s32.totalorder %s44, 1
          %s641 = scalar_select %p640, %s44, 1
          %s642 = smul.addr %s641, 8
          %s643 = smul.addr %s642, 8
          %s644 = scalar_lea.vmem %s11, %s643
        $region64: #{tpu_custom_call.1} parent=19 // pred_fallthru
          _
        // Predicated region
        $region65: #{tpu_custom_call.1} parent=19 // pred_check
          %p645 = pneg %p375
        $region66: #{tpu_custom_call.1} parent=19 // pred_check_branch
          %647 = sbr.rel (%p645) target = $region68
        $region67: #{tpu_custom_call.1} parent=19 // pred_region
          %p648 = scmp.lt.s32.totalorder %s44, 1
          %s649 = scalar_select %p648, %s44, 1
          %s650 = scalar_lea.vmem %s12, %s649
        $region68: #{tpu_custom_call.1} parent=19 // pred_fallthru
          _
        // Predicated region
        $region69: #{tpu_custom_call.1} parent=19 // pred_check
          %p651 = pneg %p401
        $region70: #{tpu_custom_call.1} parent=19 // pred_check_branch
          %653 = sbr.rel (%p651) target = $region72
        $region71: #{tpu_custom_call.1} parent=19 // pred_region
          %p654 = scmp.lt.s32.totalorder %s44, 1
          %s655 = scalar_select %p654, %s44, 1
          %s656 = scalar_lea.vmem %s13, %s655
        $region72: #{tpu_custom_call.1} parent=19 // pred_fallthru
          _
        // Predicated region
        $region73: #{tpu_custom_call.1} parent=19 // pred_check
          %p657 = pneg %p427
        $region74: #{tpu_custom_call.1} parent=19 // pred_check_branch
          %659 = sbr.rel (%p657) target = $region76
        $region75: #{tpu_custom_call.1} parent=19 // pred_region
          %p660 = scmp.lt.s32.totalorder %s44, 1
          %s661 = scalar_select %p660, %s44, 1
          %s662 = scalar_lea.vmem %s14, %s661
        $region76: #{tpu_custom_call.1} parent=19 // pred_fallthru
          _
      $region20: #{tpu_custom_call.1} parent=5 // pred_fallthru
        _
      %p663 = scmp.le.s32.totalorder 1, %s36
      %p664 = scmp.lt.s32.totalorder %s36, 5
      %p665 = pnand %p663, %p664
      %p666 = pneg %p665
      // Predicated region
      $region77: #{tpu_custom_call.1} parent=5 // pred_check
        _
      $region78: #{tpu_custom_call.1} parent=5 // pred_check_branch
        %668 = sbr.rel (%p665) target = $region80
      $region79: #{tpu_custom_call.1} parent=5 // pred_region
        %s669 = ssub.s32 %s36, 1
        %s670 = sand.u32 %s61, 1
        %s671 = scalar_lea.sflag [#allocation4], %s670
        %s672 = sand.u32 %s61, 1
        %s673 = smul.addr %s672, 8
        %s674 = scalar_lea.vmem [#allocation3], %s673
        // Predicated region
        $region81: #{tpu_custom_call.1} parent=79 // pred_check
          %p675 = pneg %p74
        $region82: #{tpu_custom_call.1} parent=79 // pred_check_branch
          %677 = sbr.rel (%p675) target = $region84
        $region83: #{tpu_custom_call.1} parent=79 // pred_region
          %678 = dma.done %s671, 128
        $region84: #{tpu_custom_call.1} parent=79 // pred_fallthru
          _
        %s679 = sand.u32 %s41, 1
        %s680 = scalar_lea.sflag [#allocation7], %s679
        %s681 = sand.u32 %s87, 1
        %s682 = smul.addr %s681, 8
        %s683 = scalar_lea.vmem [#allocation6], %s682
        // Predicated region
        $region85: #{tpu_custom_call.1} parent=79 // pred_check
          %p684 = pneg %p100
        $region86: #{tpu_custom_call.1} parent=79 // pred_check_branch
          %686 = sbr.rel (%p684) target = $region88
        $region87: #{tpu_custom_call.1} parent=79 // pred_region
          %687 = dma.done %s680, 128
        $region88: #{tpu_custom_call.1} parent=79 // pred_fallthru
          _
        // Predicated region
        $region89: #{tpu_custom_call.1} parent=79 // pred_check
          %p688 = pneg %p121
        $region90: #{tpu_custom_call.1} parent=79 // pred_check_branch
          %690 = sbr.rel (%p688) target = $region92
        $region91: #{tpu_custom_call.1} parent=79 // pred_region
          %691 = dma.done [#allocation7], 256
        $region92: #{tpu_custom_call.1} parent=79 // pred_fallthru
          _
        %s692 = sand.u32 %s61, 1
        %s693 = scalar_lea.sflag [#allocation4], %s692
        %s694 = sand.u32 %s61, 1
        %s695 = smul.addr %s694, 8
        %s696 = scalar_lea.vmem [#allocation3], %s695
        %p697 = pneg %p74
        %p698 = pneg %p71
        %s699 = sand.u32 %s41, 1
        %s700 = scalar_lea.sflag [#allocation7], %s699
        %s701 = sand.u32 %s87, 1
        %s702 = smul.addr %s701, 8
        %s703 = scalar_lea.vmem [#allocation6], %s702
        %p704 = pneg %p100
        %p705 = pneg %p97
        %p706 = pneg %p121
        %p707 = pneg %p118
        %p708 = scmp.lt.s32.totalorder %s46, 1
        %s709 = scalar_select %p708, %s46, 1
        %s710 = smul.addr %s709, 4
        %s711 = smul.addr %s710, 8
        %s712 = scalar_lea.vmem %s3, %s711
        %p713 = pneg %p147
        %p714 = pneg %p144
        %p715 = scmp.lt.s32.totalorder %s46, 1
        %s716 = scalar_select %p715, %s46, 1
        %s717 = scalar_lea.vmem %s4, %s716
        %p718 = pneg %p173
        %p719 = pneg %p170
        %p720 = scmp.lt.s32.totalorder %s46, 1
        %s721 = scalar_select %p720, %s46, 1
        %s722 = smul.addr %s721, 4
        %s723 = smul.addr %s722, 8
        %s724 = scalar_lea.vmem %s5, %s723
        %p725 = pneg %p199
        %p726 = pneg %p196
        %p727 = scmp.lt.s32.totalorder %s46, 1
        %s728 = scalar_select %p727, %s46, 1
        %s729 = scalar_lea.vmem %s6, %s728
        %p730 = pneg %p225
        %p731 = pneg %p222
        %p732 = scmp.lt.s32.totalorder %s46, 1
        %s733 = scalar_select %p732, %s46, 1
        %s734 = scalar_lea.vmem %s7, %s733
        %p735 = pneg %p251
        %p736 = pneg %p248
        %p737 = scmp.lt.s32.totalorder %s46, 1
        %s738 = scalar_select %p737, %s46, 1
        %s739 = scalar_lea.vmem %s8, %s738
        %p740 = pneg %p277
        %p741 = pneg %p274
        %p742 = scmp.lt.s32.totalorder %s46, 1
        %s743 = scalar_select %p742, %s46, 1
        %s744 = smul.addr %s743, 4
        %s745 = smul.addr %s744, 8
        %s746 = scalar_lea.vmem %s9, %s745
        %p747 = pneg %p303
        %p748 = pneg %p300
        %p749 = scmp.lt.s32.totalorder %s46, 1
        %s750 = scalar_select %p749, %s46, 1
        %s751 = scalar_lea.vmem %s10, %s750
        %p752 = pneg %p329
        %p753 = pneg %p326
        %p754 = scmp.lt.s32.totalorder %s46, 1
        %s755 = scalar_select %p754, %s46, 1
        %s756 = smul.addr %s755, 8
        %s757 = smul.addr %s756, 8
        %s758 = scalar_lea.vmem %s11, %s757
        %p759 = pneg %p355
        %p760 = pneg %p352
        %p761 = scmp.lt.s32.totalorder %s46, 1
        %s762 = scalar_select %p761, %s46, 1
        %s763 = scalar_lea.vmem %s12, %s762
        %p764 = pneg %p381
        %p765 = pneg %p378
        %p766 = scmp.lt.s32.totalorder %s46, 1
        %s767 = scalar_select %p766, %s46, 1
        %s768 = scalar_lea.vmem %s13, %s767
        %p769 = pneg %p407
        %p770 = pneg %p404
        %p771 = scmp.lt.s32.totalorder %s46, 1
        %s772 = scalar_select %p771, %s46, 1
        %s773 = scalar_lea.vmem %s14, %s772
        %p774 = pneg %p433
        %p775 = pneg %p430
        %p776 = pneg %p459
        %p777 = pneg %p456
        %s778 = sand.u32 %s446, 1
        %s779 = scalar_lea.sflag [#allocation5], %s778
        %s780 = sand.u32 %s446, 1
        %s781 = smul.addr %s780, 8
        %s782 = scalar_lea.vmem [#allocation9], %s781
        %p783 = pneg %p487
        %p784 = pneg %p484
        %s785 = sand.u32 %s41, 1
        %s786 = scalar_lea.sflag [#allocation11], %s785
        %s787 = sand.u32 %s474, 1
        %s788 = smul.addr %s787, 32
        %s789 = scalar_lea.vmem [#allocation10], %s788
        %p790 = pneg %p515
        %p791 = pneg %p512
        %s792 = sand.u32 %s41, 1
        %s793 = scalar_lea.sflag [#allocation11], %s792
        %s794 = sand.u32 %s502, 1
        %s795 = smul.addr %s794, 32
        %s796 = scalar_lea.vmem [#allocation12], %s795
        %p797 = scmp.lt.s32.totalorder %s46, 1
        %s798 = scalar_select %p797, %s46, 1
        %s799 = smul.addr %s798, 4
        %s800 = smul.addr %s799, 8
        %s801 = scalar_lea.vmem %s3, %s800
        %p802 = scmp.lt.s32.totalorder %s46, 1
        %s803 = scalar_select %p802, %s46, 1
        %s804 = scalar_lea.vmem %s4, %s803
        %p805 = scmp.lt.s32.totalorder %s46, 1
        %s806 = scalar_select %p805, %s46, 1
        %s807 = smul.addr %s806, 4
        %s808 = smul.addr %s807, 8
        %s809 = scalar_lea.vmem %s5, %s808
        %p810 = scmp.lt.s32.totalorder %s46, 1
        %s811 = scalar_select %p810, %s46, 1
        %s812 = scalar_lea.vmem %s6, %s811
        %p813 = scmp.lt.s32.totalorder %s46, 1
        %s814 = scalar_select %p813, %s46, 1
        %s815 = scalar_lea.vmem %s7, %s814
        %p816 = scmp.lt.s32.totalorder %s46, 1
        %s817 = scalar_select %p816, %s46, 1
        %s818 = scalar_lea.vmem %s8, %s817
        %p819 = scmp.lt.s32.totalorder %s46, 1
        %s820 = scalar_select %p819, %s46, 1
        %s821 = smul.addr %s820, 4
        %s822 = smul.addr %s821, 8
        %s823 = scalar_lea.vmem %s9, %s822
        %p824 = scmp.lt.s32.totalorder %s46, 1
        %s825 = scalar_select %p824, %s46, 1
        %s826 = scalar_lea.vmem %s10, %s825
        %p827 = scmp.lt.s32.totalorder %s46, 1
        %s828 = scalar_select %p827, %s46, 1
        %s829 = smul.addr %s828, 8
        %s830 = smul.addr %s829, 8
        %s831 = scalar_lea.vmem %s11, %s830
        %p832 = scmp.lt.s32.totalorder %s46, 1
        %s833 = scalar_select %p832, %s46, 1
        %s834 = scalar_lea.vmem %s12, %s833
        %p835 = scmp.lt.s32.totalorder %s46, 1
        %s836 = scalar_select %p835, %s46, 1
        %s837 = scalar_lea.vmem %s13, %s836
        %p838 = scmp.lt.s32.totalorder %s46, 1
        %s839 = scalar_select %p838, %s46, 1
        %s840 = scalar_lea.vmem %s14, %s839
        %s841 = smul.u32 4, %s45
        %s842 = smul.u32 4, %s45
        %p843 = scmp.eq.s32.totalorder %s46, 0
        // Predicated region
        $region93: #{tpu_custom_call.1} parent=79 // pred_check
          %p844 = pneg %p843
        $region94: #{tpu_custom_call.1} parent=79 // pred_check_branch
          %846 = sbr.rel (%p844) target = $region96
        $region95: #{tpu_custom_call.1} parent=79 // pred_region
          %v847 = vld [vmem:[%s674] sm:$0xff]
          %vm848 = vcmask 261120
          %849 = vst.msk [vmem:[#allocation2] sm:$0xff] %vm848, %v847
        $region96: #{tpu_custom_call.1} parent=79 // pred_fallthru
          _
        %s850 = smul.u32 %s45, 4
        %p851 = scmp.lt.s32.totalorder %s850, 0
        %s852 = ssub.s32 0, %s850
        %s853 = scalar_select %p851, %s852, %s850
        %s854 = sand.u32 %s853, 1
        %s855 = ssub.s32 0, %s854
        %s856 = scalar_select %p851, %s855, %s854
        %p857 = scmp.ne.s32.totalorder %s856, 0
        %p858 = scmp.lt.s32.totalorder %s856, 0
        %p859 = pnand %p858, %p857
        %p860 = pneg %p859
        %s861 = sadd.s32 %s856, 2
        %s862 = scalar_select %p860, %s861, %s856
        %s863 = smul.u32 %s862, 8
        %s864 = scalar_lea.vmem [#allocation8], %s863
        %v865 = vld [vmem:[%s864] sm:$0xff]
        %v866 = vsub.f32 1.0, %v865
        %s867 = sadd.s32 %s850, 1
        %p868 = scmp.lt.s32.totalorder %s867, 0
        %s869 = ssub.s32 0, %s867
        %s870 = scalar_select %p868, %s869, %s867
        %s871 = sand.u32 %s870, 1
        %s872 = ssub.s32 0, %s871
        %s873 = scalar_select %p868, %s872, %s871
        %p874 = scmp.ne.s32.totalorder %s873, 0
        %p875 = scmp.lt.s32.totalorder %s873, 0
        %p876 = pnand %p875, %p874
        %p877 = pneg %p876
        %s878 = sadd.s32 %s873, 2
        %s879 = scalar_select %p877, %s878, %s873
        %s880 = smul.u32 %s879, 8
        %s881 = scalar_lea.vmem [#allocation8], %s880
        %v882 = vld [vmem:[%s881] sm:$0xff]
        %v883 = vsub.f32 1.0, %v882
        %s884 = sadd.s32 %s850, 2
        %p885 = scmp.lt.s32.totalorder %s884, 0
        %s886 = ssub.s32 0, %s884
        %s887 = scalar_select %p885, %s886, %s884
        %s888 = sand.u32 %s887, 1
        %s889 = ssub.s32 0, %s888
        %s890 = scalar_select %p885, %s889, %s888
        %p891 = scmp.ne.s32.totalorder %s890, 0
        %p892 = scmp.lt.s32.totalorder %s890, 0
        %p893 = pnand %p892, %p891
        %p894 = pneg %p893
        %s895 = sadd.s32 %s890, 2
        %s896 = scalar_select %p894, %s895, %s890
        %s897 = smul.u32 %s896, 8
        %s898 = scalar_lea.vmem [#allocation8], %s897
        %v899 = vld [vmem:[%s898] sm:$0xff]
        %v900 = vsub.f32 1.0, %v899
        %s901 = sadd.s32 %s850, 3
        %p902 = scmp.lt.s32.totalorder %s901, 0
        %s903 = ssub.s32 0, %s901
        %s904 = scalar_select %p902, %s903, %s901
        %s905 = sand.u32 %s904, 1
        %s906 = ssub.s32 0, %s905
        %s907 = scalar_select %p902, %s906, %s905
        %p908 = scmp.ne.s32.totalorder %s907, 0
        %p909 = scmp.lt.s32.totalorder %s907, 0
        %p910 = pnand %p909, %p908
        %p911 = pneg %p910
        %s912 = sadd.s32 %s907, 2
        %s913 = scalar_select %p911, %s912, %s907
        %s914 = smul.u32 %s913, 8
        %s915 = scalar_lea.vmem [#allocation8], %s914
        %v916 = vld [vmem:[%s915] sm:$0xff]
        %v917 = vsub.f32 1.0, %v916
        %v918 = vld [vmem:[%s801] sm:$0xff]
        %v919 = vld [vmem:[%s801 + $0x8] sm:$0xff]
        %v920 = vld [vmem:[%s801 + $0x10] sm:$0xff]
        %v921 = vld [vmem:[%s801 + $0x18] sm:$0xff]
        %v922 = vld [vmem:[%s804] sm:$0x1]
        %v923 = vld [vmem:[%s809] sm:$0xff]
        %v924 = vld [vmem:[%s809 + $0x8] sm:$0xff]
        %v925 = vld [vmem:[%s809 + $0x10] sm:$0xff]
        %v926 = vld [vmem:[%s809 + $0x18] sm:$0xff]
        %v927 = vld [vmem:[%s812] sm:$0x1]
        %v928 = vld [vmem:[%s815] sm:$0x1]
        %v929 = vld [vmem:[%s818] sm:$0x1]
        %v930 = vld [vmem:[#allocation2] sm:$0xff]
        %v931 = vld [vmem:[%s683] sm:$0xff]
        %v933 = vlaneseq
        %v934 = vshrl.u32 %v933, 7
        %v935 = vsub.s32 0, %v934
        %v936 = vrot.slane %v922, %v935
        %vm938 = vcmask 261120
        %v940 = vsel %vm938, %v930, 0
        %942 = vmatprep.subr.mxu0 0.0
        %943 = vmatpush1.msra.mxu0 %v918
        %944 = vmatprep.subr.mxu0 0.0
        %945 = vmatpush1.msra.mxu0 %v919
        %946 = vmatprep.subr.mxu0 0.0
        %947 = vmatpush1.msra.mxu0 %v920
        %948 = vmatprep.subr.mxu0 0.0
        %949 = vmatpush1.msra.mxu0 %v921
        %950 = vmatprep.subr.mxu0 0.0
        %951 = vmatpush1.msra.mxu0 0.0
        %952 = vmatprep.subr.mxu0 0.0
        %953 = vmatpush1.msra.mxu0 0.0
        %954 = vmatprep.subr.mxu0 0.0
        %955 = vmatpush1.msra.mxu0 0.0
        %956 = vmatprep.subr.mxu0 0.0
        %957 = vmatpush1.msra.mxu0 0.0
        %958 = vmatprep.subr.mxu0 0.0
        %959 = vmatpush1.msra.mxu0 0.0
        %960 = vmatprep.subr.mxu0 0.0
        %961 = vmatpush1.msra.mxu0 0.0
        %962 = vmatprep.subr.mxu0 0.0
        %963 = vmatpush1.msra.mxu0 0.0
        %964 = vmatprep.subr.mxu0 0.0
        %965 = vmatpush1.msra.mxu0 0.0
        %966 = vmatprep.subr.mxu0 0.0
        %967 = vmatpush1.msra.mxu0 0.0
        %968 = vmatprep.subr.mxu0 0.0
        %969 = vmatpush1.msra.mxu0 0.0
        %970 = vmatprep.subr.mxu0 0.0
        %971 = vmatpush1.msra.mxu0 0.0
        %972 = vmatprep.subr.mxu0 0.0
        %973 = vmatpush1.msra.mxu0 0.0
        %974 = vmatprep.subr.mxu0 0.0
        %975 = vmatpush1.msra.mxu0 0.0
        %976 = vmatprep.subr.mxu0 0.0
        %977 = vmatpush1.msra.mxu0 0.0
        %978 = vmatprep.subr.mxu0 0.0
        %979 = vmatpush1.msra.mxu0 0.0
        %980 = vmatprep.subr.mxu0 0.0
        %981 = vmatpush1.msra.mxu0 0.0
        %982 = vmatprep.subr.mxu0 0.0
        %983 = vmatpush1.msra.mxu0 0.0
        %984 = vmatprep.subr.mxu0 0.0
        %985 = vmatpush1.msra.mxu0 0.0
        %986 = vmatprep.subr.mxu0 0.0
        %987 = vmatpush1.msra.mxu0 0.0
        %988 = vmatprep.subr.mxu0 0.0
        %989 = vmatpush1.msra.mxu0 0.0
        %990 = vmatprep.subr.mxu0 0.0
        %991 = vmatpush1.msra.mxu0 0.0
        %992 = vmatprep.subr.mxu0 0.0
        %993 = vmatpush1.msra.mxu0 0.0
        %994 = vmatprep.subr.mxu0 0.0
        %995 = vmatpush1.msra.mxu0 0.0
        %996 = vmatprep.subr.mxu0 0.0
        %997 = vmatpush1.msra.mxu0 0.0
        %998 = vmatprep.subr.mxu0 0.0
        %999 = vmatpush1.msra.mxu0 0.0
        %1000 = vmatprep.subr.mxu0 0.0
        %1001 = vmatpush1.msra.mxu0 0.0
        %1002 = vmatprep.subr.mxu0 0.0
        %1003 = vmatpush1.msra.mxu0 0.0
        %1004 = vmatprep.subr.mxu0 0.0
        %1005 = vmatpush1.msra.mxu0 0.0
        %1006 = vmatprep.mubr.f32.mxu0 0.0
        %1007 = vmatmul.mubr.f32.gmra.mrb[0].mxu0 %v940
        %v1008 = vpop.f32.mrb[0].mxu0
        %v1009 = vadd.f32 %v936, %v1008
        %v1010 = vpop.f32.mrb[0].mxu0
        %1011 = vdwg.mxu0
        %v1013 = vrot.slane %v1009, 7
        %1014 = vrot.lane.b32.xlu0 %v1013, 120
        %v1015 = vpop.permute.xlu0 %1014
        %v1017 = vrot.slane %v1009, 6
        %1018 = vrot.lane.b32.xlu0 %v1017, 112
        %v1019 = vpop.permute.xlu0 %1018
        %v1021 = vrot.slane %v1009, 5
        %1022 = vrot.lane.b32.xlu0 %v1021, 104
        %v1023 = vpop.permute.xlu0 %1022
        %v1026 = vrot.slane %v1009, 4
        %1027 = vrot.lane.b32.xlu0 %v1026, 120
        %v1028 = vpop.permute.xlu0 %1027
        %v1030 = vrot.slane %v1009, 3
        %1031 = vrot.lane.b32.xlu0 %v1030, 112
        %v1032 = vpop.permute.xlu0 %1031
        %v1034 = vrot.slane %v1009, 2
        %1035 = vrot.lane.b32.xlu0 %v1034, 104
        %v1036 = vpop.permute.xlu0 %1035
        %vm1038 = vcmask 1040384
        %v1039 = vsel %vm1038, %v1009, %v1015
        %vm1040 = vcmask 1041408
        %v1041 = vsel %vm1040, %v1039, %v1019
        %vm1042 = vcmask 1042432
        %v1043 = vsel %vm1042, %v1041, %v1023
        %vm1044 = vcmask 1043456
        %v1045 = vsel %vm1044, %v1043, %v1021
        %vm1046 = vcmask 1044480
        %v1047 = vsel %vm1046, %v1045, %v1028
        %vm1048 = vcmask 1045504
        %v1049 = vsel %vm1048, %v1047, %v1032
        %vm1050 = vcmask 1046528
        %v1051 = vsel %vm1050, %v1049, %v1036
        %v1053 = vrot.slane %v1009, 1
        %1054 = vrot.lane.b32.xlu0 %v1053, 120
        %v1055 = vpop.permute.xlu0 %1054
        %1057 = vrot.lane.b32.xlu0 %v1009, 112
        %v1058 = vpop.permute.xlu0 %1057
        %1060 = vrot.lane.b32.xlu0 %v1013, 104
        %v1061 = vpop.permute.xlu0 %1060
        %1064 = vrot.lane.b32.xlu0 %v1017, 120
        %v1065 = vpop.permute.xlu0 %1064
        %1067 = vrot.lane.b32.xlu0 %v1021, 112
        %v1068 = vpop.permute.xlu0 %1067
        %1070 = vrot.lane.b32.xlu0 %v1026, 104
        %v1071 = vpop.permute.xlu0 %1070
        %v1073 = vsel %vm1038, %v1034, %v1055
        %v1074 = vsel %vm1040, %v1073, %v1058
        %v1075 = vsel %vm1042, %v1074, %v1061
        %v1076 = vsel %vm1044, %v1075, %v1013
        %v1077 = vsel %vm1046, %v1076, %v1065
        %v1078 = vsel %vm1048, %v1077, %v1068
        %v1079 = vsel %vm1050, %v1078, %v1071
        %1081 = vrot.lane.b32.xlu0 %v1030, 120
        %v1082 = vpop.permute.xlu0 %1081
        %1084 = vrot.lane.b32.xlu0 %v1034, 112
        %v1085 = vpop.permute.xlu0 %1084
        %1087 = vrot.lane.b32.xlu0 %v1053, 104
        %v1088 = vpop.permute.xlu0 %1087
        %1091 = vrot.lane.b32.xlu0 %v1009, 120
        %v1092 = vpop.permute.xlu0 %1091
        %1094 = vrot.lane.b32.xlu0 %v1013, 112
        %v1095 = vpop.permute.xlu0 %1094
        %1097 = vrot.lane.b32.xlu0 %v1017, 104
        %v1098 = vpop.permute.xlu0 %1097
        %v1100 = vsel %vm1038, %v1026, %v1082
        %v1101 = vsel %vm1040, %v1100, %v1085
        %v1102 = vsel %vm1042, %v1101, %v1088
        %v1103 = vsel %vm1044, %v1102, %v1053
        %v1104 = vsel %vm1046, %v1103, %v1092
        %v1105 = vsel %vm1048, %v1104, %v1095
        %v1106 = vsel %vm1050, %v1105, %v1098
        %1108 = vrot.lane.b32.xlu0 %v1021, 120
        %v1109 = vpop.permute.xlu0 %1108
        %1111 = vrot.lane.b32.xlu0 %v1026, 112
        %v1112 = vpop.permute.xlu0 %1111
        %1114 = vrot.lane.b32.xlu0 %v1030, 104
        %v1115 = vpop.permute.xlu0 %1114
        %1118 = vrot.lane.b32.xlu0 %v1034, 120
        %v1119 = vpop.permute.xlu0 %1118
        %1121 = vrot.lane.b32.xlu0 %v1053, 112
        %v1122 = vpop.permute.xlu0 %1121
        %1124 = vrot.lane.b32.xlu0 %v1009, 104
        %v1125 = vpop.permute.xlu0 %1124
        %v1127 = vsel %vm1038, %v1017, %v1109
        %v1128 = vsel %vm1040, %v1127, %v1112
        %v1129 = vsel %vm1042, %v1128, %v1115
        %v1130 = vsel %vm1044, %v1129, %v1030
        %v1131 = vsel %vm1046, %v1130, %v1119
        %v1132 = vsel %vm1048, %v1131, %v1122
        %v1133 = vsel %vm1050, %v1132, %v1125
        %1135 = vrot.lane.b32.xlu0 %v1051, 64
        %v1136 = vpop.permute.xlu0 %1135
        %vm1137 = vcmask 64512
        %v1138 = vsel %vm1137, %v1136, 0
        %v1140 = vsel %vm1137, %v1051, 0
        %1142 = vmatprep.subr.mxu0 0.0
        %1143 = vmatpush1.xpose.msra.mxu0 %v1140
        %1144 = vmatprep.subr.mxu0 0.0
        %1145 = vmatpush1.xpose.msra.mxu0 0.0
        %1146 = vmatprep.subr.mxu0 0.0
        %1147 = vmatpush1.xpose.msra.mxu0 0.0
        %1148 = vmatprep.subr.mxu0 0.0
        %1149 = vmatpush1.xpose.msra.mxu0 0.0
        %1150 = vmatprep.subr.mxu0 0.0
        %1151 = vmatpush1.xpose.msra.mxu0 0.0
        %1152 = vmatprep.subr.mxu0 0.0
        %1153 = vmatpush1.xpose.msra.mxu0 0.0
        %1154 = vmatprep.subr.mxu0 0.0
        %1155 = vmatpush1.xpose.msra.mxu0 0.0
        %1156 = vmatprep.subr.mxu0 0.0
        %1157 = vmatpush1.xpose.msra.mxu0 0.0
        %1158 = vmatprep.subr.mxu0 0.0
        %1159 = vmatpush1.xpose.msra.mxu0 0.0
        %1160 = vmatprep.subr.mxu0 0.0
        %1161 = vmatpush1.xpose.msra.mxu0 0.0
        %1162 = vmatprep.subr.mxu0 0.0
        %1163 = vmatpush1.xpose.msra.mxu0 0.0
        %1164 = vmatprep.subr.mxu0 0.0
        %1165 = vmatpush1.xpose.msra.mxu0 0.0
        %1166 = vmatprep.subr.mxu0 0.0
        %1167 = vmatpush1.xpose.msra.mxu0 0.0
        %1168 = vmatprep.subr.mxu0 0.0
        %1169 = vmatpush1.xpose.msra.mxu0 0.0
        %1170 = vmatprep.subr.mxu0 0.0
        %1171 = vmatpush1.xpose.msra.mxu0 0.0
        %1172 = vmatprep.subr.mxu0 0.0
        %1173 = vmatpush1.xpose.msra.mxu0 0.0
        %1174 = vmatprep.subr.mxu0 0.0
        %1175 = vmatpush1.xpose.msra.mxu0 0.0
        %1176 = vmatprep.subr.mxu0 0.0
        %1177 = vmatpush1.xpose.msra.mxu0 0.0
        %1178 = vmatprep.subr.mxu0 0.0
        %1179 = vmatpush1.xpose.msra.mxu0 0.0
        %1180 = vmatprep.subr.mxu0 0.0
        %1181 = vmatpush1.xpose.msra.mxu0 0.0
        %1182 = vmatprep.subr.mxu0 0.0
        %1183 = vmatpush1.xpose.msra.mxu0 0.0
        %1184 = vmatprep.subr.mxu0 0.0
        %1185 = vmatpush1.xpose.msra.mxu0 0.0
        %1186 = vmatprep.subr.mxu0 0.0
        %1187 = vmatpush1.xpose.msra.mxu0 0.0
        %1188 = vmatprep.subr.mxu0 0.0
        %1189 = vmatpush1.xpose.msra.mxu0 0.0
        %1190 = vmatprep.subr.mxu0 0.0
        %1191 = vmatpush1.xpose.msra.mxu0 0.0
        %1192 = vmatprep.subr.mxu0 0.0
        %1193 = vmatpush1.xpose.msra.mxu0 0.0
        %1194 = vmatprep.subr.mxu0 0.0
        %1195 = vmatpush1.xpose.msra.mxu0 0.0
        %1196 = vmatprep.subr.mxu0 0.0
        %1197 = vmatpush1.xpose.msra.mxu0 0.0
        %1198 = vmatprep.subr.mxu0 0.0
        %1199 = vmatpush1.xpose.msra.mxu0 0.0
        %1200 = vmatprep.subr.mxu0 0.0
        %1201 = vmatpush1.xpose.msra.mxu0 0.0
        %1202 = vmatprep.subr.mxu0 0.0
        %1203 = vmatpush1.xpose.msra.mxu0 0.0
        %1204 = vmatprep.subr.mxu0 0.0
        %1205 = vmatpush1.xpose.msra.mxu0 0.0
        %1206 = vmatprep.mubr.f32.mxu0 0.0
        %1207 = vmatmul.mubr.f32.gmra.mrb[0].mxu0 %v1138
        %v1208 = vpop.f32.mrb[0].mxu0
        %v1209 = vadd.f32 0.0, %v1208
        %v1210 = vpop.f32.mrb[0].mxu0
        %1211 = vdwg.mxu0
        %v1212 = vmul.f32 %v1209, 0.35355338
        %v1213 = vmul.f32 %v1212, %v866
        %v1214 = vsel %vm1137, %v1213, -inf
        %1215 = vmax.xlane.f32.xlu0 %v1214
        %v1216 = vpop.xlane.xlu0 %1215
        %v1217 = vsub.f32 %v1213, %v1216
        %v1218 = vmul.f32 %v1217, 1.442695
        %v1219 = vpow.pop %v1218
        %v1220 = vsel %vm1137, %v1219, 0.0
        %1221 = vadd.xlane.f32.xlu0 %v1220
        %v1222 = vpop.xlane.xlu0 %1221
        %v1223 = vrcp.pop %v1222
        %v1224 = vmul.f32 %v1219, %v1223
        %v1225 = vmul.f32 %v1224, %v866
        %1226 = vst.msk [vmem:[%s789] sm:$0xff] %vm1137, %v1225
        %1227 = vrot.lane.b32.xlu0 %v1051, 96
        %v1228 = vpop.permute.xlu0 %1227
        %v1231 = vsel %vm1137, %v1225, 0
        %1233 = vmatprep.subr.mxu0 0.0
        %1234 = vmatpush1.msra.mxu0 %v1228
        %1235 = vmatprep.subr.mxu0 0.0
        %1236 = vmatpush1.msra.mxu0 0.0
        %1237 = vmatprep.subr.mxu0 0.0
        %1238 = vmatpush1.msra.mxu0 0.0
        %1239 = vmatprep.subr.mxu0 0.0
        %1240 = vmatpush1.msra.mxu0 0.0
        %1241 = vmatprep.subr.mxu0 0.0
        %1242 = vmatpush1.msra.mxu0 0.0
        %1243 = vmatprep.subr.mxu0 0.0
        %1244 = vmatpush1.msra.mxu0 0.0
        %1245 = vmatprep.subr.mxu0 0.0
        %1246 = vmatpush1.msra.mxu0 0.0
        %1247 = vmatprep.subr.mxu0 0.0
        %1248 = vmatpush1.msra.mxu0 0.0
        %1249 = vmatprep.subr.mxu0 0.0
        %1250 = vmatpush1.msra.mxu0 0.0
        %1251 = vmatprep.subr.mxu0 0.0
        %1252 = vmatpush1.msra.mxu0 0.0
        %1253 = vmatprep.subr.mxu0 0.0
        %1254 = vmatpush1.msra.mxu0 0.0
        %1255 = vmatprep.subr.mxu0 0.0
        %1256 = vmatpush1.msra.mxu0 0.0
        %1257 = vmatprep.subr.mxu0 0.0
        %1258 = vmatpush1.msra.mxu0 0.0
        %1259 = vmatprep.subr.mxu0 0.0
        %1260 = vmatpush1.msra.mxu0 0.0
        %1261 = vmatprep.subr.mxu0 0.0
        %1262 = vmatpush1.msra.mxu0 0.0
        %1263 = vmatprep.subr.mxu0 0.0
        %1264 = vmatpush1.msra.mxu0 0.0
        %1265 = vmatprep.subr.mxu0 0.0
        %1266 = vmatpush1.msra.mxu0 0.0
        %1267 = vmatprep.subr.mxu0 0.0
        %1268 = vmatpush1.msra.mxu0 0.0
        %1269 = vmatprep.subr.mxu0 0.0
        %1270 = vmatpush1.msra.mxu0 0.0
        %1271 = vmatprep.subr.mxu0 0.0
        %1272 = vmatpush1.msra.mxu0 0.0
        %1273 = vmatprep.subr.mxu0 0.0
        %1274 = vmatpush1.msra.mxu0 0.0
        %1275 = vmatprep.subr.mxu0 0.0
        %1276 = vmatpush1.msra.mxu0 0.0
        %1277 = vmatprep.subr.mxu0 0.0
        %1278 = vmatpush1.msra.mxu0 0.0
        %1279 = vmatprep.subr.mxu0 0.0
        %1280 = vmatpush1.msra.mxu0 0.0
        %1281 = vmatprep.subr.mxu0 0.0
        %1282 = vmatpush1.msra.mxu0 0.0
        %1283 = vmatprep.subr.mxu0 0.0
        %1284 = vmatpush1.msra.mxu0 0.0
        %1285 = vmatprep.subr.mxu0 0.0
        %1286 = vmatpush1.msra.mxu0 0.0
        %1287 = vmatprep.subr.mxu0 0.0
        %1288 = vmatpush1.msra.mxu0 0.0
        %1289 = vmatprep.subr.mxu0 0.0
        %1290 = vmatpush1.msra.mxu0 0.0
        %1291 = vmatprep.subr.mxu0 0.0
        %1292 = vmatpush1.msra.mxu0 0.0
        %1293 = vmatprep.subr.mxu0 0.0
        %1294 = vmatpush1.msra.mxu0 0.0
        %1295 = vmatprep.subr.mxu0 0.0
        %1296 = vmatpush1.msra.mxu0 0.0
        %1297 = vmatprep.mubr.f32.mxu0 0.0
        %1298 = vmatmul.mubr.f32.gmra.mrb[0].mxu0 %v1231
        %v1299 = vpop.f32.mrb[0].mxu0
        %v1300 = vadd.f32 0.0, %v1299
        %v1301 = vpop.f32.mrb[0].mxu0
        %1302 = vdwg.mxu0
        %1304 = vrot.lane.b32.xlu0 %v1079, 64
        %v1305 = vpop.permute.xlu0 %1304
        %v1306 = vsel %vm1137, %v1305, 0
        %v1308 = vsel %vm1137, %v1079, 0
        %1310 = vmatprep.subr.mxu0 0.0
        %1311 = vmatpush1.xpose.msra.mxu0 %v1308
        %1312 = vmatprep.subr.mxu0 0.0
        %1313 = vmatpush1.xpose.msra.mxu0 0.0
        %1314 = vmatprep.subr.mxu0 0.0
        %1315 = vmatpush1.xpose.msra.mxu0 0.0
        %1316 = vmatprep.subr.mxu0 0.0
        %1317 = vmatpush1.xpose.msra.mxu0 0.0
        %1318 = vmatprep.subr.mxu0 0.0
        %1319 = vmatpush1.xpose.msra.mxu0 0.0
        %1320 = vmatprep.subr.mxu0 0.0
        %1321 = vmatpush1.xpose.msra.mxu0 0.0
        %1322 = vmatprep.subr.mxu0 0.0
        %1323 = vmatpush1.xpose.msra.mxu0 0.0
        %1324 = vmatprep.subr.mxu0 0.0
        %1325 = vmatpush1.xpose.msra.mxu0 0.0
        %1326 = vmatprep.subr.mxu0 0.0
        %1327 = vmatpush1.xpose.msra.mxu0 0.0
        %1328 = vmatprep.subr.mxu0 0.0
        %1329 = vmatpush1.xpose.msra.mxu0 0.0
        %1330 = vmatprep.subr.mxu0 0.0
        %1331 = vmatpush1.xpose.msra.mxu0 0.0
        %1332 = vmatprep.subr.mxu0 0.0
        %1333 = vmatpush1.xpose.msra.mxu0 0.0
        %1334 = vmatprep.subr.mxu0 0.0
        %1335 = vmatpush1.xpose.msra.mxu0 0.0
        %1336 = vmatprep.subr.mxu0 0.0
        %1337 = vmatpush1.xpose.msra.mxu0 0.0
        %1338 = vmatprep.subr.mxu0 0.0
        %1339 = vmatpush1.xpose.msra.mxu0 0.0
        %1340 = vmatprep.subr.mxu0 0.0
        %1341 = vmatpush1.xpose.msra.mxu0 0.0
        %1342 = vmatprep.subr.mxu0 0.0
        %1343 = vmatpush1.xpose.msra.mxu0 0.0
        %1344 = vmatprep.subr.mxu0 0.0
        %1345 = vmatpush1.xpose.msra.mxu0 0.0
        %1346 = vmatprep.subr.mxu0 0.0
        %1347 = vmatpush1.xpose.msra.mxu0 0.0
        %1348 = vmatprep.subr.mxu0 0.0
        %1349 = vmatpush1.xpose.msra.mxu0 0.0
        %1350 = vmatprep.subr.mxu0 0.0
        %1351 = vmatpush1.xpose.msra.mxu0 0.0
        %1352 = vmatprep.subr.mxu0 0.0
        %1353 = vmatpush1.xpose.msra.mxu0 0.0
        %1354 = vmatprep.subr.mxu0 0.0
        %1355 = vmatpush1.xpose.msra.mxu0 0.0
        %1356 = vmatprep.subr.mxu0 0.0
        %1357 = vmatpush1.xpose.msra.mxu0 0.0
        %1358 = vmatprep.subr.mxu0 0.0
        %1359 = vmatpush1.xpose.msra.mxu0 0.0
        %1360 = vmatprep.subr.mxu0 0.0
        %1361 = vmatpush1.xpose.msra.mxu0 0.0
        %1362 = vmatprep.subr.mxu0 0.0
        %1363 = vmatpush1.xpose.msra.mxu0 0.0
        %1364 = vmatprep.subr.mxu0 0.0
        %1365 = vmatpush1.xpose.msra.mxu0 0.0
        %1366 = vmatprep.subr.mxu0 0.0
        %1367 = vmatpush1.xpose.msra.mxu0 0.0
        %1368 = vmatprep.subr.mxu0 0.0
        %1369 = vmatpush1.xpose.msra.mxu0 0.0
        %1370 = vmatprep.subr.mxu0 0.0
        %1371 = vmatpush1.xpose.msra.mxu0 0.0
        %1372 = vmatprep.subr.mxu0 0.0
        %1373 = vmatpush1.xpose.msra.mxu0 0.0
        %1374 = vmatprep.mubr.f32.mxu0 0.0
        %1375 = vmatmul.mubr.f32.gmra.mrb[0].mxu0 %v1306
        %v1376 = vpop.f32.mrb[0].mxu0
        %v1377 = vadd.f32 0.0, %v1376
        %v1378 = vpop.f32.mrb[0].mxu0
        %1379 = vdwg.mxu0
        %v1380 = vmul.f32 %v1377, 0.35355338
        %v1381 = vmul.f32 %v1380, %v883
        %v1382 = vsel %vm1137, %v1381, -inf
        %1383 = vmax.xlane.f32.xlu0 %v1382
        %v1384 = vpop.xlane.xlu0 %1383
        %v1385 = vsub.f32 %v1381, %v1384
        %v1386 = vmul.f32 %v1385, 1.442695
        %v1387 = vpow.pop %v1386
        %v1388 = vsel %vm1137, %v1387, 0.0
        %1389 = vadd.xlane.f32.xlu0 %v1388
        %v1390 = vpop.xlane.xlu0 %1389
        %v1391 = vrcp.pop %v1390
        %v1392 = vmul.f32 %v1387, %v1391
        %v1393 = vmul.f32 %v1392, %v883
        %s1394 = scalar_lea.vmem %s789, 8 [#allocation10]
        %1395 = vst.msk [vmem:[%s1394] sm:$0xff] %vm1137, %v1393
        %1396 = vrot.lane.b32.xlu0 %v1079, 96
        %v1397 = vpop.permute.xlu0 %1396
        %v1400 = vsel %vm1137, %v1393, 0
        %1402 = vmatprep.subr.mxu0 0.0
        %1403 = vmatpush1.msra.mxu0 %v1397
        %1404 = vmatprep.subr.mxu0 0.0
        %1405 = vmatpush1.msra.mxu0 0.0
        %1406 = vmatprep.subr.mxu0 0.0
        %1407 = vmatpush1.msra.mxu0 0.0
        %1408 = vmatprep.subr.mxu0 0.0
        %1409 = vmatpush1.msra.mxu0 0.0
        %1410 = vmatprep.subr.mxu0 0.0
        %1411 = vmatpush1.msra.mxu0 0.0
        %1412 = vmatprep.subr.mxu0 0.0
        %1413 = vmatpush1.msra.mxu0 0.0
        %1414 = vmatprep.subr.mxu0 0.0
        %1415 = vmatpush1.msra.mxu0 0.0
        %1416 = vmatprep.subr.mxu0 0.0
        %1417 = vmatpush1.msra.mxu0 0.0
        %1418 = vmatprep.subr.mxu0 0.0
        %1419 = vmatpush1.msra.mxu0 0.0
        %1420 = vmatprep.subr.mxu0 0.0
        %1421 = vmatpush1.msra.mxu0 0.0
        %1422 = vmatprep.subr.mxu0 0.0
        %1423 = vmatpush1.msra.mxu0 0.0
        %1424 = vmatprep.subr.mxu0 0.0
        %1425 = vmatpush1.msra.mxu0 0.0
        %1426 = vmatprep.subr.mxu0 0.0
        %1427 = vmatpush1.msra.mxu0 0.0
        %1428 = vmatprep.subr.mxu0 0.0
        %1429 = vmatpush1.msra.mxu0 0.0
        %1430 = vmatprep.subr.mxu0 0.0
        %1431 = vmatpush1.msra.mxu0 0.0
        %1432 = vmatprep.subr.mxu0 0.0
        %1433 = vmatpush1.msra.mxu0 0.0
        %1434 = vmatprep.subr.mxu0 0.0
        %1435 = vmatpush1.msra.mxu0 0.0
        %1436 = vmatprep.subr.mxu0 0.0
        %1437 = vmatpush1.msra.mxu0 0.0
        %1438 = vmatprep.subr.mxu0 0.0
        %1439 = vmatpush1.msra.mxu0 0.0
        %1440 = vmatprep.subr.mxu0 0.0
        %1441 = vmatpush1.msra.mxu0 0.0
        %1442 = vmatprep.subr.mxu0 0.0
        %1443 = vmatpush1.msra.mxu0 0.0
        %1444 = vmatprep.subr.mxu0 0.0
        %1445 = vmatpush1.msra.mxu0 0.0
        %1446 = vmatprep.subr.mxu0 0.0
        %1447 = vmatpush1.msra.mxu0 0.0
        %1448 = vmatprep.subr.mxu0 0.0
        %1449 = vmatpush1.msra.mxu0 0.0
        %1450 = vmatprep.subr.mxu0 0.0
        %1451 = vmatpush1.msra.mxu0 0.0
        %1452 = vmatprep.subr.mxu0 0.0
        %1453 = vmatpush1.msra.mxu0 0.0
        %1454 = vmatprep.subr.mxu0 0.0
        %1455 = vmatpush1.msra.mxu0 0.0
        %1456 = vmatprep.subr.mxu0 0.0
        %1457 = vmatpush1.msra.mxu0 0.0
        %1458 = vmatprep.subr.mxu0 0.0
        %1459 = vmatpush1.msra.mxu0 0.0
        %1460 = vmatprep.subr.mxu0 0.0
        %1461 = vmatpush1.msra.mxu0 0.0
        %1462 = vmatprep.subr.mxu0 0.0
        %1463 = vmatpush1.msra.mxu0 0.0
        %1464 = vmatprep.subr.mxu0 0.0
        %1465 = vmatpush1.msra.mxu0 0.0
        %1466 = vmatprep.mubr.f32.mxu0 0.0
        %1467 = vmatmul.mubr.f32.gmra.mrb[0].mxu0 %v1400
        %v1468 = vpop.f32.mrb[0].mxu0
        %v1469 = vadd.f32 0.0, %v1468
        %v1470 = vpop.f32.mrb[0].mxu0
        %1471 = vdwg.mxu0
        %1473 = vrot.lane.b32.xlu0 %v1106, 64
        %v1474 = vpop.permute.xlu0 %1473
        %v1475 = vsel %vm1137, %v1474, 0
        %v1477 = vsel %vm1137, %v1106, 0
        %1479 = vmatprep.subr.mxu0 0.0
        %1480 = vmatpush1.xpose.msra.mxu0 %v1477
        %1481 = vmatprep.subr.mxu0 0.0
        %1482 = vmatpush1.xpose.msra.mxu0 0.0
        %1483 = vmatprep.subr.mxu0 0.0
        %1484 = vmatpush1.xpose.msra.mxu0 0.0
        %1485 = vmatprep.subr.mxu0 0.0
        %1486 = vmatpush1.xpose.msra.mxu0 0.0
        %1487 = vmatprep.subr.mxu0 0.0
        %1488 = vmatpush1.xpose.msra.mxu0 0.0
        %1489 = vmatprep.subr.mxu0 0.0
        %1490 = vmatpush1.xpose.msra.mxu0 0.0
        %1491 = vmatprep.subr.mxu0 0.0
        %1492 = vmatpush1.xpose.msra.mxu0 0.0
        %1493 = vmatprep.subr.mxu0 0.0
        %1494 = vmatpush1.xpose.msra.mxu0 0.0
        %1495 = vmatprep.subr.mxu0 0.0
        %1496 = vmatpush1.xpose.msra.mxu0 0.0
        %1497 = vmatprep.subr.mxu0 0.0
        %1498 = vmatpush1.xpose.msra.mxu0 0.0
        %1499 = vmatprep.subr.mxu0 0.0
        %1500 = vmatpush1.xpose.msra.mxu0 0.0
        %1501 = vmatprep.subr.mxu0 0.0
        %1502 = vmatpush1.xpose.msra.mxu0 0.0
        %1503 = vmatprep.subr.mxu0 0.0
        %1504 = vmatpush1.xpose.msra.mxu0 0.0
        %1505 = vmatprep.subr.mxu0 0.0
        %1506 = vmatpush1.xpose.msra.mxu0 0.0
        %1507 = vmatprep.subr.mxu0 0.0
        %1508 = vmatpush1.xpose.msra.mxu0 0.0
        %1509 = vmatprep.subr.mxu0 0.0
        %1510 = vmatpush1.xpose.msra.mxu0 0.0
        %1511 = vmatprep.subr.mxu0 0.0
        %1512 = vmatpush1.xpose.msra.mxu0 0.0
        %1513 = vmatprep.subr.mxu0 0.0
        %1514 = vmatpush1.xpose.msra.mxu0 0.0
        %1515 = vmatprep.subr.mxu0 0.0
        %1516 = vmatpush1.xpose.msra.mxu0 0.0
        %1517 = vmatprep.subr.mxu0 0.0
        %1518 = vmatpush1.xpose.msra.mxu0 0.0
        %1519 = vmatprep.subr.mxu0 0.0
        %1520 = vmatpush1.xpose.msra.mxu0 0.0
        %1521 = vmatprep.subr.mxu0 0.0
        %1522 = vmatpush1.xpose.msra.mxu0 0.0
        %1523 = vmatprep.subr.mxu0 0.0
        %1524 = vmatpush1.xpose.msra.mxu0 0.0
        %1525 = vmatprep.subr.mxu0 0.0
        %1526 = vmatpush1.xpose.msra.mxu0 0.0
        %1527 = vmatprep.subr.mxu0 0.0
        %1528 = vmatpush1.xpose.msra.mxu0 0.0
        %1529 = vmatprep.subr.mxu0 0.0
        %1530 = vmatpush1.xpose.msra.mxu0 0.0
        %1531 = vmatprep.subr.mxu0 0.0
        %1532 = vmatpush1.xpose.msra.mxu0 0.0
        %1533 = vmatprep.subr.mxu0 0.0
        %1534 = vmatpush1.xpose.msra.mxu0 0.0
        %1535 = vmatprep.subr.mxu0 0.0
        %1536 = vmatpush1.xpose.msra.mxu0 0.0
        %1537 = vmatprep.subr.mxu0 0.0
        %1538 = vmatpush1.xpose.msra.mxu0 0.0
        %1539 = vmatprep.subr.mxu0 0.0
        %1540 = vmatpush1.xpose.msra.mxu0 0.0
        %1541 = vmatprep.subr.mxu0 0.0
        %1542 = vmatpush1.xpose.msra.mxu0 0.0
        %1543 = vmatprep.mubr.f32.mxu0 0.0
        %1544 = vmatmul.mubr.f32.gmra.mrb[0].mxu0 %v1475
        %v1545 = vpop.f32.mrb[0].mxu0
        %v1546 = vadd.f32 0.0, %v1545
        %v1547 = vpop.f32.mrb[0].mxu0
        %1548 = vdwg.mxu0
        %v1549 = vmul.f32 %v1546, 0.35355338
        %v1550 = vmul.f32 %v1549, %v900
        %v1551 = vsel %vm1137, %v1550, -inf
        %1552 = vmax.xlane.f32.xlu0 %v1551
        %v1553 = vpop.xlane.xlu0 %1552
        %v1554 = vsub.f32 %v1550, %v1553
        %v1555 = vmul.f32 %v1554, 1.442695
        %v1556 = vpow.pop %v1555
        %v1557 = vsel %vm1137, %v1556, 0.0
        %1558 = vadd.xlane.f32.xlu0 %v1557
        %v1559 = vpop.xlane.xlu0 %1558
        %v1560 = vrcp.pop %v1559
        %v1561 = vmul.f32 %v1556, %v1560
        %v1562 = vmul.f32 %v1561, %v900
        %s1563 = scalar_lea.vmem %s789, 16 [#allocation10]
        %1564 = vst.msk [vmem:[%s1563] sm:$0xff] %vm1137, %v1562
        %1565 = vrot.lane.b32.xlu0 %v1106, 96
        %v1566 = vpop.permute.xlu0 %1565
        %v1569 = vsel %vm1137, %v1562, 0
        %1571 = vmatprep.subr.mxu0 0.0
        %1572 = vmatpush1.msra.mxu0 %v1566
        %1573 = vmatprep.subr.mxu0 0.0
        %1574 = vmatpush1.msra.mxu0 0.0
        %1575 = vmatprep.subr.mxu0 0.0
        %1576 = vmatpush1.msra.mxu0 0.0
        %1577 = vmatprep.subr.mxu0 0.0
        %1578 = vmatpush1.msra.mxu0 0.0
        %1579 = vmatprep.subr.mxu0 0.0
        %1580 = vmatpush1.msra.mxu0 0.0
        %1581 = vmatprep.subr.mxu0 0.0
        %1582 = vmatpush1.msra.mxu0 0.0
        %1583 = vmatprep.subr.mxu0 0.0
        %1584 = vmatpush1.msra.mxu0 0.0
        %1585 = vmatprep.subr.mxu0 0.0
        %1586 = vmatpush1.msra.mxu0 0.0
        %1587 = vmatprep.subr.mxu0 0.0
        %1588 = vmatpush1.msra.mxu0 0.0
        %1589 = vmatprep.subr.mxu0 0.0
        %1590 = vmatpush1.msra.mxu0 0.0
        %1591 = vmatprep.subr.mxu0 0.0
        %1592 = vmatpush1.msra.mxu0 0.0
        %1593 = vmatprep.subr.mxu0 0.0
        %1594 = vmatpush1.msra.mxu0 0.0
        %1595 = vmatprep.subr.mxu0 0.0
        %1596 = vmatpush1.msra.mxu0 0.0
        %1597 = vmatprep.subr.mxu0 0.0
        %1598 = vmatpush1.msra.mxu0 0.0
        %1599 = vmatprep.subr.mxu0 0.0
        %1600 = vmatpush1.msra.mxu0 0.0
        %1601 = vmatprep.subr.mxu0 0.0
        %1602 = vmatpush1.msra.mxu0 0.0
        %1603 = vmatprep.subr.mxu0 0.0
        %1604 = vmatpush1.msra.mxu0 0.0
        %1605 = vmatprep.subr.mxu0 0.0
        %1606 = vmatpush1.msra.mxu0 0.0
        %1607 = vmatprep.subr.mxu0 0.0
        %1608 = vmatpush1.msra.mxu0 0.0
        %1609 = vmatprep.subr.mxu0 0.0
        %1610 = vmatpush1.msra.mxu0 0.0
        %1611 = vmatprep.subr.mxu0 0.0
        %1612 = vmatpush1.msra.mxu0 0.0
        %1613 = vmatprep.subr.mxu0 0.0
        %1614 = vmatpush1.msra.mxu0 0.0
        %1615 = vmatprep.subr.mxu0 0.0
        %1616 = vmatpush1.msra.mxu0 0.0
        %1617 = vmatprep.subr.mxu0 0.0
        %1618 = vmatpush1.msra.mxu0 0.0
        %1619 = vmatprep.subr.mxu0 0.0
        %1620 = vmatpush1.msra.mxu0 0.0
        %1621 = vmatprep.subr.mxu0 0.0
        %1622 = vmatpush1.msra.mxu0 0.0
        %1623 = vmatprep.subr.mxu0 0.0
        %1624 = vmatpush1.msra.mxu0 0.0
        %1625 = vmatprep.subr.mxu0 0.0
        %1626 = vmatpush1.msra.mxu0 0.0
        %1627 = vmatprep.subr.mxu0 0.0
        %1628 = vmatpush1.msra.mxu0 0.0
        %1629 = vmatprep.subr.mxu0 0.0
        %1630 = vmatpush1.msra.mxu0 0.0
        %1631 = vmatprep.subr.mxu0 0.0
        %1632 = vmatpush1.msra.mxu0 0.0
        %1633 = vmatprep.subr.mxu0 0.0
        %1634 = vmatpush1.msra.mxu0 0.0
        %1635 = vmatprep.mubr.f32.mxu0 0.0
        %1636 = vmatmul.mubr.f32.gmra.mrb[0].mxu0 %v1569
        %v1637 = vpop.f32.mrb[0].mxu0
        %v1638 = vadd.f32 0.0, %v1637
        %v1639 = vpop.f32.mrb[0].mxu0
        %1640 = vdwg.mxu0
        %1642 = vrot.lane.b32.xlu0 %v1133, 64
        %v1643 = vpop.permute.xlu0 %1642
        %v1644 = vsel %vm1137, %v1643, 0
        %v1646 = vsel %vm1137, %v1133, 0
        %1648 = vmatprep.subr.mxu0 0.0
        %1649 = vmatpush1.xpose.msra.mxu0 %v1646
        %1650 = vmatprep.subr.mxu0 0.0
        %1651 = vmatpush1.xpose.msra.mxu0 0.0
        %1652 = vmatprep.subr.mxu0 0.0
        %1653 = vmatpush1.xpose.msra.mxu0 0.0
        %1654 = vmatprep.subr.mxu0 0.0
        %1655 = vmatpush1.xpose.msra.mxu0 0.0
        %1656 = vmatprep.subr.mxu0 0.0
        %1657 = vmatpush1.xpose.msra.mxu0 0.0
        %1658 = vmatprep.subr.mxu0 0.0
        %1659 = vmatpush1.xpose.msra.mxu0 0.0
        %1660 = vmatprep.subr.mxu0 0.0
        %1661 = vmatpush1.xpose.msra.mxu0 0.0
        %1662 = vmatprep.subr.mxu0 0.0
        %1663 = vmatpush1.xpose.msra.mxu0 0.0
        %1664 = vmatprep.subr.mxu0 0.0
        %1665 = vmatpush1.xpose.msra.mxu0 0.0
        %1666 = vmatprep.subr.mxu0 0.0
        %1667 = vmatpush1.xpose.msra.mxu0 0.0
        %1668 = vmatprep.subr.mxu0 0.0
        %1669 = vmatpush1.xpose.msra.mxu0 0.0
        %1670 = vmatprep.subr.mxu0 0.0
        %1671 = vmatpush1.xpose.msra.mxu0 0.0
        %1672 = vmatprep.subr.mxu0 0.0
        %1673 = vmatpush1.xpose.msra.mxu0 0.0
        %1674 = vmatprep.subr.mxu0 0.0
        %1675 = vmatpush1.xpose.msra.mxu0 0.0
        %1676 = vmatprep.subr.mxu0 0.0
        %1677 = vmatpush1.xpose.msra.mxu0 0.0
        %1678 = vmatprep.subr.mxu0 0.0
        %1679 = vmatpush1.xpose.msra.mxu0 0.0
        %1680 = vmatprep.subr.mxu0 0.0
        %1681 = vmatpush1.xpose.msra.mxu0 0.0
        %1682 = vmatprep.subr.mxu0 0.0
        %1683 = vmatpush1.xpose.msra.mxu0 0.0
        %1684 = vmatprep.subr.mxu0 0.0
        %1685 = vmatpush1.xpose.msra.mxu0 0.0
        %1686 = vmatprep.subr.mxu0 0.0
        %1687 = vmatpush1.xpose.msra.mxu0 0.0
        %1688 = vmatprep.subr.mxu0 0.0
        %1689 = vmatpush1.xpose.msra.mxu0 0.0
        %1690 = vmatprep.subr.mxu0 0.0
        %1691 = vmatpush1.xpose.msra.mxu0 0.0
        %1692 = vmatprep.subr.mxu0 0.0
        %1693 = vmatpush1.xpose.msra.mxu0 0.0
        %1694 = vmatprep.subr.mxu0 0.0
        %1695 = vmatpush1.xpose.msra.mxu0 0.0
        %1696 = vmatprep.subr.mxu0 0.0
        %1697 = vmatpush1.xpose.msra.mxu0 0.0
        %1698 = vmatprep.subr.mxu0 0.0
        %1699 = vmatpush1.xpose.msra.mxu0 0.0
        %1700 = vmatprep.subr.mxu0 0.0
        %1701 = vmatpush1.xpose.msra.mxu0 0.0
        %1702 = vmatprep.subr.mxu0 0.0
        %1703 = vmatpush1.xpose.msra.mxu0 0.0
        %1704 = vmatprep.subr.mxu0 0.0
        %1705 = vmatpush1.xpose.msra.mxu0 0.0
        %1706 = vmatprep.subr.mxu0 0.0
        %1707 = vmatpush1.xpose.msra.mxu0 0.0
        %1708 = vmatprep.subr.mxu0 0.0
        %1709 = vmatpush1.xpose.msra.mxu0 0.0
        %1710 = vmatprep.subr.mxu0 0.0
        %1711 = vmatpush1.xpose.msra.mxu0 0.0
        %1712 = vmatprep.mubr.f32.mxu0 0.0
        %1713 = vmatmul.mubr.f32.gmra.mrb[0].mxu0 %v1644
        %v1714 = vpop.f32.mrb[0].mxu0
        %v1715 = vadd.f32 0.0, %v1714
        %v1716 = vpop.f32.mrb[0].mxu0
        %1717 = vdwg.mxu0
        %v1718 = vmul.f32 %v1715, 0.35355338
        %v1719 = vmul.f32 %v1718, %v917
        %v1720 = vsel %vm1137, %v1719, -inf
        %1721 = vmax.xlane.f32.xlu0 %v1720
        %v1722 = vpop.xlane.xlu0 %1721
        %v1723 = vsub.f32 %v1719, %v1722
        %v1724 = vmul.f32 %v1723, 1.442695
        %v1725 = vpow.pop %v1724
        %v1726 = vsel %vm1137, %v1725, 0.0
        %1727 = vadd.xlane.f32.xlu0 %v1726
        %v1728 = vpop.xlane.xlu0 %1727
        %v1729 = vrcp.pop %v1728
        %v1730 = vmul.f32 %v1725, %v1729
        %v1731 = vmul.f32 %v1730, %v917
        %s1732 = scalar_lea.vmem %s789, 24 [#allocation10]
        %1733 = vst.msk [vmem:[%s1732] sm:$0xff] %vm1137, %v1731
        %1734 = vrot.lane.b32.xlu0 %v1133, 96
        %v1735 = vpop.permute.xlu0 %1734
        %v1738 = vsel %vm1137, %v1731, 0
        %1740 = vmatprep.subr.mxu0 0.0
        %1741 = vmatpush1.msra.mxu0 %v1735
        %1742 = vmatprep.subr.mxu0 0.0
        %1743 = vmatpush1.msra.mxu0 0.0
        %1744 = vmatprep.subr.mxu0 0.0
        %1745 = vmatpush1.msra.mxu0 0.0
        %1746 = vmatprep.subr.mxu0 0.0
        %1747 = vmatpush1.msra.mxu0 0.0
        %1748 = vmatprep.subr.mxu0 0.0
        %1749 = vmatpush1.msra.mxu0 0.0
        %1750 = vmatprep.subr.mxu0 0.0
        %1751 = vmatpush1.msra.mxu0 0.0
        %1752 = vmatprep.subr.mxu0 0.0
        %1753 = vmatpush1.msra.mxu0 0.0
        %1754 = vmatprep.subr.mxu0 0.0
        %1755 = vmatpush1.msra.mxu0 0.0
        %1756 = vmatprep.subr.mxu0 0.0
        %1757 = vmatpush1.msra.mxu0 0.0
        %1758 = vmatprep.subr.mxu0 0.0
        %1759 = vmatpush1.msra.mxu0 0.0
        %1760 = vmatprep.subr.mxu0 0.0
        %1761 = vmatpush1.msra.mxu0 0.0
        %1762 = vmatprep.subr.mxu0 0.0
        %1763 = vmatpush1.msra.mxu0 0.0
        %1764 = vmatprep.subr.mxu0 0.0
        %1765 = vmatpush1.msra.mxu0 0.0
        %1766 = vmatprep.subr.mxu0 0.0
        %1767 = vmatpush1.msra.mxu0 0.0
        %1768 = vmatprep.subr.mxu0 0.0
        %1769 = vmatpush1.msra.mxu0 0.0
        %1770 = vmatprep.subr.mxu0 0.0
        %1771 = vmatpush1.msra.mxu0 0.0
        %1772 = vmatprep.subr.mxu0 0.0
        %1773 = vmatpush1.msra.mxu0 0.0
        %1774 = vmatprep.subr.mxu0 0.0
        %1775 = vmatpush1.msra.mxu0 0.0
        %1776 = vmatprep.subr.mxu0 0.0
        %1777 = vmatpush1.msra.mxu0 0.0
        %1778 = vmatprep.subr.mxu0 0.0
        %1779 = vmatpush1.msra.mxu0 0.0
        %1780 = vmatprep.subr.mxu0 0.0
        %1781 = vmatpush1.msra.mxu0 0.0
        %1782 = vmatprep.subr.mxu0 0.0
        %1783 = vmatpush1.msra.mxu0 0.0
        %1784 = vmatprep.subr.mxu0 0.0
        %1785 = vmatpush1.msra.mxu0 0.0
        %1786 = vmatprep.subr.mxu0 0.0
        %1787 = vmatpush1.msra.mxu0 0.0
        %1788 = vmatprep.subr.mxu0 0.0
        %1789 = vmatpush1.msra.mxu0 0.0
        %1790 = vmatprep.subr.mxu0 0.0
        %1791 = vmatpush1.msra.mxu0 0.0
        %1792 = vmatprep.subr.mxu0 0.0
        %1793 = vmatpush1.msra.mxu0 0.0
        %1794 = vmatprep.subr.mxu0 0.0
        %1795 = vmatpush1.msra.mxu0 0.0
        %1796 = vmatprep.subr.mxu0 0.0
        %1797 = vmatpush1.msra.mxu0 0.0
        %1798 = vmatprep.subr.mxu0 0.0
        %1799 = vmatpush1.msra.mxu0 0.0
        %1800 = vmatprep.subr.mxu0 0.0
        %1801 = vmatpush1.msra.mxu0 0.0
        %1802 = vmatprep.subr.mxu0 0.0
        %1803 = vmatpush1.msra.mxu0 0.0
        %1804 = vmatprep.mubr.f32.mxu0 0.0
        %1805 = vmatmul.mubr.f32.gmra.mrb[0].mxu0 %v1738
        %v1806 = vpop.f32.mrb[0].mxu0
        %v1807 = vadd.f32 0.0, %v1806
        %v1808 = vpop.f32.mrb[0].mxu0
        %1809 = vdwg.mxu0
        %v1811 = vrot.slane %v1300, 1
        %1812 = vrot.lane.b32.xlu0 %v1811, 8
        %v1813 = vpop.permute.xlu0 %1812
        %v1815 = vrot.slane %v1300, 2
        %1816 = vrot.lane.b32.xlu0 %v1815, 16
        %v1817 = vpop.permute.xlu0 %1816
        %v1819 = vrot.slane %v1300, 3
        %1820 = vrot.lane.b32.xlu0 %v1819, 24
        %v1821 = vpop.permute.xlu0 %1820
        %v1823 = vsel %vm1137, %v1300, %v1813
        %vm1824 = vcmask 130048
        %v1825 = vsel %vm1824, %v1823, %v1817
        %vm1826 = vcmask 195584
        %v1827 = vsel %vm1826, %v1825, %v1821
        %v1829 = vrot.slane %v1469, 1
        %1830 = vrot.lane.b32.xlu0 %v1829, 8
        %v1831 = vpop.permute.xlu0 %1830
        %v1833 = vrot.slane %v1469, 2
        %1834 = vrot.lane.b32.xlu0 %v1833, 16
        %v1835 = vpop.permute.xlu0 %1834
        %v1837 = vrot.slane %v1469, 3
        %1838 = vrot.lane.b32.xlu0 %v1837, 24
        %v1839 = vpop.permute.xlu0 %1838
        %v1841 = vsel %vm1137, %v1469, %v1831
        %v1842 = vsel %vm1824, %v1841, %v1835
        %v1843 = vsel %vm1826, %v1842, %v1839
        %v1845 = vrot.slane %v1638, 1
        %1846 = vrot.lane.b32.xlu0 %v1845, 8
        %v1847 = vpop.permute.xlu0 %1846
        %v1849 = vrot.slane %v1638, 2
        %1850 = vrot.lane.b32.xlu0 %v1849, 16
        %v1851 = vpop.permute.xlu0 %1850
        %v1853 = vrot.slane %v1638, 3
        %1854 = vrot.lane.b32.xlu0 %v1853, 24
        %v1855 = vpop.permute.xlu0 %1854
        %v1857 = vsel %vm1137, %v1638, %v1847
        %v1858 = vsel %vm1824, %v1857, %v1851
        %v1859 = vsel %vm1826, %v1858, %v1855
        %v1861 = vrot.slane %v1807, 1
        %1862 = vrot.lane.b32.xlu0 %v1861, 8
        %v1863 = vpop.permute.xlu0 %1862
        %v1865 = vrot.slane %v1807, 2
        %1866 = vrot.lane.b32.xlu0 %v1865, 16
        %v1867 = vpop.permute.xlu0 %1866
        %v1869 = vrot.slane %v1807, 3
        %1870 = vrot.lane.b32.xlu0 %v1869, 24
        %v1871 = vpop.permute.xlu0 %1870
        %v1873 = vsel %vm1137, %v1807, %v1863
        %v1874 = vsel %vm1824, %v1873, %v1867
        %v1875 = vsel %vm1826, %v1874, %v1871
        %v1877 = vrot.slane %v1827, 3
        %v1880 = vrot.slane %v1843, 6
        %v1882 = vrot.slane %v1843, 1
        %v1885 = vrot.slane %v1859, 4
        %v1887 = vrot.slane %v1859, 7
        %v1890 = vrot.slane %v1875, 2
        %v1892 = vrot.slane %v1875, 5
        %v1894 = vsel %vm1038, %v1827, %v1877
        %v1895 = vsel %vm1040, %v1894, %v1880
        %v1896 = vsel %vm1042, %v1895, %v1882
        %v1897 = vsel %vm1044, %v1896, %v1885
        %v1898 = vsel %vm1046, %v1897, %v1887
        %v1899 = vsel %vm1048, %v1898, %v1890
        %v1900 = vsel %vm1050, %v1899, %v1892
        %v1902 = vlaneseq
        %v1903 = vshrl.u32 %v1902, 7
        %v1904 = vsub.s32 0, %v1903
        %v1905 = vrot.slane %v927, %v1904
        %v1908 = vsel %vm938, %v1900, 0
        %1910 = vmatprep.subr.mxu0 0.0
        %1911 = vmatpush1.msra.mxu0 %v923
        %1912 = vmatprep.subr.mxu0 0.0
        %1913 = vmatpush1.msra.mxu0 %v924
        %1914 = vmatprep.subr.mxu0 0.0
        %1915 = vmatpush1.msra.mxu0 %v925
        %1916 = vmatprep.subr.mxu0 0.0
        %1917 = vmatpush1.msra.mxu0 %v926
        %1918 = vmatprep.subr.mxu0 0.0
        %1919 = vmatpush1.msra.mxu0 0.0
        %1920 = vmatprep.subr.mxu0 0.0
        %1921 = vmatpush1.msra.mxu0 0.0
        %1922 = vmatprep.subr.mxu0 0.0
        %1923 = vmatpush1.msra.mxu0 0.0
        %1924 = vmatprep.subr.mxu0 0.0
        %1925 = vmatpush1.msra.mxu0 0.0
        %1926 = vmatprep.subr.mxu0 0.0
        %1927 = vmatpush1.msra.mxu0 0.0
        %1928 = vmatprep.subr.mxu0 0.0
        %1929 = vmatpush1.msra.mxu0 0.0
        %1930 = vmatprep.subr.mxu0 0.0
        %1931 = vmatpush1.msra.mxu0 0.0
        %1932 = vmatprep.subr.mxu0 0.0
        %1933 = vmatpush1.msra.mxu0 0.0
        %1934 = vmatprep.subr.mxu0 0.0
        %1935 = vmatpush1.msra.mxu0 0.0
        %1936 = vmatprep.subr.mxu0 0.0
        %1937 = vmatpush1.msra.mxu0 0.0
        %1938 = vmatprep.subr.mxu0 0.0
        %1939 = vmatpush1.msra.mxu0 0.0
        %1940 = vmatprep.subr.mxu0 0.0
        %1941 = vmatpush1.msra.mxu0 0.0
        %1942 = vmatprep.subr.mxu0 0.0
        %1943 = vmatpush1.msra.mxu0 0.0
        %1944 = vmatprep.subr.mxu0 0.0
        %1945 = vmatpush1.msra.mxu0 0.0
        %1946 = vmatprep.subr.mxu0 0.0
        %1947 = vmatpush1.msra.mxu0 0.0
        %1948 = vmatprep.subr.mxu0 0.0
        %1949 = vmatpush1.msra.mxu0 0.0
        %1950 = vmatprep.subr.mxu0 0.0
        %1951 = vmatpush1.msra.mxu0 0.0
        %1952 = vmatprep.subr.mxu0 0.0
        %1953 = vmatpush1.msra.mxu0 0.0
        %1954 = vmatprep.subr.mxu0 0.0
        %1955 = vmatpush1.msra.mxu0 0.0
        %1956 = vmatprep.subr.mxu0 0.0
        %1957 = vmatpush1.msra.mxu0 0.0
        %1958 = vmatprep.subr.mxu0 0.0
        %1959 = vmatpush1.msra.mxu0 0.0
        %1960 = vmatprep.subr.mxu0 0.0
        %1961 = vmatpush1.msra.mxu0 0.0
        %1962 = vmatprep.subr.mxu0 0.0
        %1963 = vmatpush1.msra.mxu0 0.0
        %1964 = vmatprep.subr.mxu0 0.0
        %1965 = vmatpush1.msra.mxu0 0.0
        %1966 = vmatprep.subr.mxu0 0.0
        %1967 = vmatpush1.msra.mxu0 0.0
        %1968 = vmatprep.subr.mxu0 0.0
        %1969 = vmatpush1.msra.mxu0 0.0
        %1970 = vmatprep.subr.mxu0 0.0
        %1971 = vmatpush1.msra.mxu0 0.0
        %1972 = vmatprep.subr.mxu0 0.0
        %1973 = vmatpush1.msra.mxu0 0.0
        %1974 = vmatprep.mubr.f32.mxu0 0.0
        %1975 = vmatmul.mubr.f32.gmra.mrb[0].mxu0 %v1908
        %v1976 = vpop.f32.mrb[0].mxu0
        %v1977 = vadd.f32 %v1905, %v1976
        %v1978 = vpop.f32.mrb[0].mxu0
        %1979 = vdwg.mxu0
        %v1980 = vadd.f32 %v930, %v1977
        %v1981 = vsel %vm938, %v1980, 0.0
        %1982 = vadd.xlane.f32.xlu0 %v1981
        %v1983 = vpop.xlane.xlu0 %1982
        %v1984 = vrcp.pop 32.0
        %v1985 = vmul.f32 %v1983, %v1984
        %v1986 = vsub.f32 %v1980, %v1985
        %v1987 = vmul.f32 %v1986, %v1986
        %v1988 = vsel %vm938, %v1987, 0.0
        %1989 = vadd.xlane.f32.xlu0 %v1988
        %v1990 = vpop.xlane.xlu0 %1989
        %v1991 = vmul.f32 %v1990, %v1984
        %v1992 = vadd.f32 %v1991, 1e-05
        %v1993 = vrsqrt.pop %v1992
        %v1994 = vmul.f32 %v1986, %v1993
        %v1996 = vlaneseq
        %v1997 = vshrl.u32 %v1996, 7
        %v1998 = vsub.s32 0, %v1997
        %v1999 = vrot.slane %v928, %v1998
        %v2001 = vmul.f32 %v1994, %v1999
        %v2003 = vlaneseq
        %v2004 = vshrl.u32 %v2003, 7
        %v2005 = vsub.s32 0, %v2004
        %v2006 = vrot.slane %v929, %v2005
        %v2008 = vadd.f32 %v2001, %v2006
        %v2010 = vsel %vm938, %v931, 0
        %2012 = vmatprep.subr.mxu0 0.0
        %2013 = vmatpush1.msra.mxu0 %v918
        %2014 = vmatprep.subr.mxu0 0.0
        %2015 = vmatpush1.msra.mxu0 %v919
        %2016 = vmatprep.subr.mxu0 0.0
        %2017 = vmatpush1.msra.mxu0 %v920
        %2018 = vmatprep.subr.mxu0 0.0
        %2019 = vmatpush1.msra.mxu0 %v921
        %2020 = vmatprep.subr.mxu0 0.0
        %2021 = vmatpush1.msra.mxu0 0.0
        %2022 = vmatprep.subr.mxu0 0.0
        %2023 = vmatpush1.msra.mxu0 0.0
        %2024 = vmatprep.subr.mxu0 0.0
        %2025 = vmatpush1.msra.mxu0 0.0
        %2026 = vmatprep.subr.mxu0 0.0
        %2027 = vmatpush1.msra.mxu0 0.0
        %2028 = vmatprep.subr.mxu0 0.0
        %2029 = vmatpush1.msra.mxu0 0.0
        %2030 = vmatprep.subr.mxu0 0.0
        %2031 = vmatpush1.msra.mxu0 0.0
        %2032 = vmatprep.subr.mxu0 0.0
        %2033 = vmatpush1.msra.mxu0 0.0
        %2034 = vmatprep.subr.mxu0 0.0
        %2035 = vmatpush1.msra.mxu0 0.0
        %2036 = vmatprep.subr.mxu0 0.0
        %2037 = vmatpush1.msra.mxu0 0.0
        %2038 = vmatprep.subr.mxu0 0.0
        %2039 = vmatpush1.msra.mxu0 0.0
        %2040 = vmatprep.subr.mxu0 0.0
        %2041 = vmatpush1.msra.mxu0 0.0
        %2042 = vmatprep.subr.mxu0 0.0
        %2043 = vmatpush1.msra.mxu0 0.0
        %2044 = vmatprep.subr.mxu0 0.0
        %2045 = vmatpush1.msra.mxu0 0.0
        %2046 = vmatprep.subr.mxu0 0.0
        %2047 = vmatpush1.msra.mxu0 0.0
        %2048 = vmatprep.subr.mxu0 0.0
        %2049 = vmatpush1.msra.mxu0 0.0
        %2050 = vmatprep.subr.mxu0 0.0
        %2051 = vmatpush1.msra.mxu0 0.0
        %2052 = vmatprep.subr.mxu0 0.0
        %2053 = vmatpush1.msra.mxu0 0.0
        %2054 = vmatprep.subr.mxu0 0.0
        %2055 = vmatpush1.msra.mxu0 0.0
        %2056 = vmatprep.subr.mxu0 0.0
        %2057 = vmatpush1.msra.mxu0 0.0
        %2058 = vmatprep.subr.mxu0 0.0
        %2059 = vmatpush1.msra.mxu0 0.0
        %2060 = vmatprep.subr.mxu0 0.0
        %2061 = vmatpush1.msra.mxu0 0.0
        %2062 = vmatprep.subr.mxu0 0.0
        %2063 = vmatpush1.msra.mxu0 0.0
        %2064 = vmatprep.subr.mxu0 0.0
        %2065 = vmatpush1.msra.mxu0 0.0
        %2066 = vmatprep.subr.mxu0 0.0
        %2067 = vmatpush1.msra.mxu0 0.0
        %2068 = vmatprep.subr.mxu0 0.0
        %2069 = vmatpush1.msra.mxu0 0.0
        %2070 = vmatprep.subr.mxu0 0.0
        %2071 = vmatpush1.msra.mxu0 0.0
        %2072 = vmatprep.subr.mxu0 0.0
        %2073 = vmatpush1.msra.mxu0 0.0
        %2074 = vmatprep.subr.mxu0 0.0
        %2075 = vmatpush1.msra.mxu0 0.0
        %2076 = vmatprep.mubr.f32.mxu0 0.0
        %2077 = vmatmul.mubr.f32.gmra.mrb[0].mxu0 %v2010
        %v2078 = vpop.f32.mrb[0].mxu0
        %v2079 = vadd.f32 %v936, %v2078
        %v2080 = vpop.f32.mrb[0].mxu0
        %2081 = vdwg.mxu0
        %2086 = vrot.lane.b32.xlu0 %v918, 64
        %v2087 = vpop.permute.xlu0 %2086
        %2088 = vrot.lane.b32.xlu0 %v919, 64
        %v2089 = vpop.permute.xlu0 %2088
        %2090 = vrot.lane.b32.xlu0 %v920, 64
        %v2091 = vpop.permute.xlu0 %2090
        %2092 = vrot.lane.b32.xlu0 %v921, 64
        %v2093 = vpop.permute.xlu0 %2092
        %2098 = vrot.lane.b32.xlu0 %v936, 64
        %v2099 = vpop.permute.xlu0 %2098
        %v2102 = vsel %vm938, %v2008, 0
        %2104 = vmatprep.subr.mxu0 0.0
        %2105 = vmatpush1.msra.mxu0 %v2087
        %2106 = vmatprep.subr.mxu0 0.0
        %2107 = vmatpush1.msra.mxu0 %v2089
        %2108 = vmatprep.subr.mxu0 0.0
        %2109 = vmatpush1.msra.mxu0 %v2091
        %2110 = vmatprep.subr.mxu0 0.0
        %2111 = vmatpush1.msra.mxu0 %v2093
        %2112 = vmatprep.subr.mxu0 0.0
        %2113 = vmatpush1.msra.mxu0 0.0
        %2114 = vmatprep.subr.mxu0 0.0
        %2115 = vmatpush1.msra.mxu0 0.0
        %2116 = vmatprep.subr.mxu0 0.0
        %2117 = vmatpush1.msra.mxu0 0.0
        %2118 = vmatprep.subr.mxu0 0.0
        %2119 = vmatpush1.msra.mxu0 0.0
        %2120 = vmatprep.subr.mxu0 0.0
        %2121 = vmatpush1.msra.mxu0 0.0
        %2122 = vmatprep.subr.mxu0 0.0
        %2123 = vmatpush1.msra.mxu0 0.0
        %2124 = vmatprep.subr.mxu0 0.0
        %2125 = vmatpush1.msra.mxu0 0.0
        %2126 = vmatprep.subr.mxu0 0.0
        %2127 = vmatpush1.msra.mxu0 0.0
        %2128 = vmatprep.subr.mxu0 0.0
        %2129 = vmatpush1.msra.mxu0 0.0
        %2130 = vmatprep.subr.mxu0 0.0
        %2131 = vmatpush1.msra.mxu0 0.0
        %2132 = vmatprep.subr.mxu0 0.0
        %2133 = vmatpush1.msra.mxu0 0.0
        %2134 = vmatprep.subr.mxu0 0.0
        %2135 = vmatpush1.msra.mxu0 0.0
        %2136 = vmatprep.subr.mxu0 0.0
        %2137 = vmatpush1.msra.mxu0 0.0
        %2138 = vmatprep.subr.mxu0 0.0
        %2139 = vmatpush1.msra.mxu0 0.0
        %2140 = vmatprep.subr.mxu0 0.0
        %2141 = vmatpush1.msra.mxu0 0.0
        %2142 = vmatprep.subr.mxu0 0.0
        %2143 = vmatpush1.msra.mxu0 0.0
        %2144 = vmatprep.subr.mxu0 0.0
        %2145 = vmatpush1.msra.mxu0 0.0
        %2146 = vmatprep.subr.mxu0 0.0
        %2147 = vmatpush1.msra.mxu0 0.0
        %2148 = vmatprep.subr.mxu0 0.0
        %2149 = vmatpush1.msra.mxu0 0.0
        %2150 = vmatprep.subr.mxu0 0.0
        %2151 = vmatpush1.msra.mxu0 0.0
        %2152 = vmatprep.subr.mxu0 0.0
        %2153 = vmatpush1.msra.mxu0 0.0
        %2154 = vmatprep.subr.mxu0 0.0
        %2155 = vmatpush1.msra.mxu0 0.0
        %2156 = vmatprep.subr.mxu0 0.0
        %2157 = vmatpush1.msra.mxu0 0.0
        %2158 = vmatprep.subr.mxu0 0.0
        %2159 = vmatpush1.msra.mxu0 0.0
        %2160 = vmatprep.subr.mxu0 0.0
        %2161 = vmatpush1.msra.mxu0 0.0
        %2162 = vmatprep.subr.mxu0 0.0
        %2163 = vmatpush1.msra.mxu0 0.0
        %2164 = vmatprep.subr.mxu0 0.0
        %2165 = vmatpush1.msra.mxu0 0.0
        %2166 = vmatprep.subr.mxu0 0.0
        %2167 = vmatpush1.msra.mxu0 0.0
        %2168 = vmatprep.mubr.f32.mxu0 0.0
        %2169 = vmatmul.mubr.f32.gmra.mrb[0].mxu0 %v2102
        %v2170 = vpop.f32.mrb[0].mxu0
        %v2171 = vadd.f32 %v2099, %v2170
        %v2172 = vpop.f32.mrb[0].mxu0
        %2173 = vdwg.mxu0
        %v2175 = vrot.slane %v2079, 7
        %2176 = vrot.lane.b32.xlu0 %v2175, 120
        %v2177 = vpop.permute.xlu0 %2176
        %v2179 = vrot.slane %v2079, 6
        %2180 = vrot.lane.b32.xlu0 %v2179, 112
        %v2181 = vpop.permute.xlu0 %2180
        %v2183 = vrot.slane %v2079, 5
        %2184 = vrot.lane.b32.xlu0 %v2183, 104
        %v2185 = vpop.permute.xlu0 %2184
        %v2188 = vrot.slane %v2079, 4
        %2189 = vrot.lane.b32.xlu0 %v2188, 120
        %v2190 = vpop.permute.xlu0 %2189
        %v2192 = vrot.slane %v2079, 3
        %2193 = vrot.lane.b32.xlu0 %v2192, 112
        %v2194 = vpop.permute.xlu0 %2193
        %v2196 = vrot.slane %v2079, 2
        %2197 = vrot.lane.b32.xlu0 %v2196, 104
        %v2198 = vpop.permute.xlu0 %2197
        %v2200 = vsel %vm1038, %v2079, %v2177
        %v2201 = vsel %vm1040, %v2200, %v2181
        %v2202 = vsel %vm1042, %v2201, %v2185
        %v2203 = vsel %vm1044, %v2202, %v2183
        %v2204 = vsel %vm1046, %v2203, %v2190
        %v2205 = vsel %vm1048, %v2204, %v2194
        %v2206 = vsel %vm1050, %v2205, %v2198
        %v2208 = vrot.slane %v2079, 1
        %2209 = vrot.lane.b32.xlu0 %v2208, 120
        %v2210 = vpop.permute.xlu0 %2209
        %2212 = vrot.lane.b32.xlu0 %v2079, 112
        %v2213 = vpop.permute.xlu0 %2212
        %2215 = vrot.lane.b32.xlu0 %v2175, 104
        %v2216 = vpop.permute.xlu0 %2215
        %2219 = vrot.lane.b32.xlu0 %v2179, 120
        %v2220 = vpop.permute.xlu0 %2219
        %2222 = vrot.lane.b32.xlu0 %v2183, 112
        %v2223 = vpop.permute.xlu0 %2222
        %2225 = vrot.lane.b32.xlu0 %v2188, 104
        %v2226 = vpop.permute.xlu0 %2225
        %v2228 = vsel %vm1038, %v2196, %v2210
        %v2229 = vsel %vm1040, %v2228, %v2213
        %v2230 = vsel %vm1042, %v2229, %v2216
        %v2231 = vsel %vm1044, %v2230, %v2175
        %v2232 = vsel %vm1046, %v2231, %v2220
        %v2233 = vsel %vm1048, %v2232, %v2223
        %v2234 = vsel %vm1050, %v2233, %v2226
        %2236 = vrot.lane.b32.xlu0 %v2192, 120
        %v2237 = vpop.permute.xlu0 %2236
        %2239 = vrot.lane.b32.xlu0 %v2196, 112
        %v2240 = vpop.permute.xlu0 %2239
        %2242 = vrot.lane.b32.xlu0 %v2208, 104
        %v2243 = vpop.permute.xlu0 %2242
        %2246 = vrot.lane.b32.xlu0 %v2079, 120
        %v2247 = vpop.permute.xlu0 %2246
        %2249 = vrot.lane.b32.xlu0 %v2175, 112
        %v2250 = vpop.permute.xlu0 %2249
        %2252 = vrot.lane.b32.xlu0 %v2179, 104
        %v2253 = vpop.permute.xlu0 %2252
        %v2255 = vsel %vm1038, %v2188, %v2237
        %v2256 = vsel %vm1040, %v2255, %v2240
        %v2257 = vsel %vm1042, %v2256, %v2243
        %v2258 = vsel %vm1044, %v2257, %v2208
        %v2259 = vsel %vm1046, %v2258, %v2247
        %v2260 = vsel %vm1048, %v2259, %v2250
        %v2261 = vsel %vm1050, %v2260, %v2253
        %2263 = vrot.lane.b32.xlu0 %v2183, 120
        %v2264 = vpop.permute.xlu0 %2263
        %2266 = vrot.lane.b32.xlu0 %v2188, 112
        %v2267 = vpop.permute.xlu0 %2266
        %2269 = vrot.lane.b32.xlu0 %v2192, 104
        %v2270 = vpop.permute.xlu0 %2269
        %2273 = vrot.lane.b32.xlu0 %v2196, 120
        %v2274 = vpop.permute.xlu0 %2273
        %2276 = vrot.lane.b32.xlu0 %v2208, 112
        %v2277 = vpop.permute.xlu0 %2276
        %2279 = vrot.lane.b32.xlu0 %v2079, 104
        %v2280 = vpop.permute.xlu0 %2279
        %v2282 = vsel %vm1038, %v2179, %v2264
        %v2283 = vsel %vm1040, %v2282, %v2267
        %v2284 = vsel %vm1042, %v2283, %v2270
        %v2285 = vsel %vm1044, %v2284, %v2192
        %v2286 = vsel %vm1046, %v2285, %v2274
        %v2287 = vsel %vm1048, %v2286, %v2277
        %v2288 = vsel %vm1050, %v2287, %v2280
        %v2290 = vrot.slane %v2171, 7
        %2291 = vrot.lane.b32.xlu0 %v2290, 120
        %v2292 = vpop.permute.xlu0 %2291
        %v2294 = vrot.slane %v2171, 6
        %2295 = vrot.lane.b32.xlu0 %v2294, 112
        %v2296 = vpop.permute.xlu0 %2295
        %v2298 = vrot.slane %v2171, 5
        %2299 = vrot.lane.b32.xlu0 %v2298, 104
        %v2300 = vpop.permute.xlu0 %2299
        %v2303 = vrot.slane %v2171, 4
        %2304 = vrot.lane.b32.xlu0 %v2303, 120
        %v2305 = vpop.permute.xlu0 %2304
        %v2307 = vrot.slane %v2171, 3
        %2308 = vrot.lane.b32.xlu0 %v2307, 112
        %v2309 = vpop.permute.xlu0 %2308
        %v2311 = vrot.slane %v2171, 2
        %2312 = vrot.lane.b32.xlu0 %v2311, 104
        %v2313 = vpop.permute.xlu0 %2312
        %v2315 = vsel %vm1038, %v2171, %v2292
        %v2316 = vsel %vm1040, %v2315, %v2296
        %v2317 = vsel %vm1042, %v2316, %v2300
        %v2318 = vsel %vm1044, %v2317, %v2298
        %v2319 = vsel %vm1046, %v2318, %v2305
        %v2320 = vsel %vm1048, %v2319, %v2309
        %v2321 = vsel %vm1050, %v2320, %v2313
        %v2323 = vrot.slane %v2171, 1
        %2324 = vrot.lane.b32.xlu0 %v2323, 120
        %v2325 = vpop.permute.xlu0 %2324
        %2327 = vrot.lane.b32.xlu0 %v2171, 112
        %v2328 = vpop.permute.xlu0 %2327
        %2330 = vrot.lane.b32.xlu0 %v2290, 104
        %v2331 = vpop.permute.xlu0 %2330
        %2334 = vrot.lane.b32.xlu0 %v2294, 120
        %v2335 = vpop.permute.xlu0 %2334
        %2337 = vrot.lane.b32.xlu0 %v2298, 112
        %v2338 = vpop.permute.xlu0 %2337
        %2340 = vrot.lane.b32.xlu0 %v2303, 104
        %v2341 = vpop.permute.xlu0 %2340
        %v2343 = vsel %vm1038, %v2311, %v2325
        %v2344 = vsel %vm1040, %v2343, %v2328
        %v2345 = vsel %vm1042, %v2344, %v2331
        %v2346 = vsel %vm1044, %v2345, %v2290
        %v2347 = vsel %vm1046, %v2346, %v2335
        %v2348 = vsel %vm1048, %v2347, %v2338
        %v2349 = vsel %vm1050, %v2348, %v2341
        %2351 = vrot.lane.b32.xlu0 %v2307, 120
        %v2352 = vpop.permute.xlu0 %2351
        %2354 = vrot.lane.b32.xlu0 %v2311, 112
        %v2355 = vpop.permute.xlu0 %2354
        %2357 = vrot.lane.b32.xlu0 %v2323, 104
        %v2358 = vpop.permute.xlu0 %2357
        %2361 = vrot.lane.b32.xlu0 %v2171, 120
        %v2362 = vpop.permute.xlu0 %2361
        %2364 = vrot.lane.b32.xlu0 %v2290, 112
        %v2365 = vpop.permute.xlu0 %2364
        %2367 = vrot.lane.b32.xlu0 %v2294, 104
        %v2368 = vpop.permute.xlu0 %2367
        %v2370 = vsel %vm1038, %v2303, %v2352
        %v2371 = vsel %vm1040, %v2370, %v2355
        %v2372 = vsel %vm1042, %v2371, %v2358
        %v2373 = vsel %vm1044, %v2372, %v2323
        %v2374 = vsel %vm1046, %v2373, %v2362
        %v2375 = vsel %vm1048, %v2374, %v2365
        %v2376 = vsel %vm1050, %v2375, %v2368
        %2378 = vrot.lane.b32.xlu0 %v2298, 120
        %v2379 = vpop.permute.xlu0 %2378
        %2381 = vrot.lane.b32.xlu0 %v2303, 112
        %v2382 = vpop.permute.xlu0 %2381
        %2384 = vrot.lane.b32.xlu0 %v2307, 104
        %v2385 = vpop.permute.xlu0 %2384
        %2388 = vrot.lane.b32.xlu0 %v2311, 120
        %v2389 = vpop.permute.xlu0 %2388
        %2391 = vrot.lane.b32.xlu0 %v2323, 112
        %v2392 = vpop.permute.xlu0 %2391
        %2394 = vrot.lane.b32.xlu0 %v2171, 104
        %v2395 = vpop.permute.xlu0 %2394
        %v2397 = vsel %vm1038, %v2294, %v2379
        %v2398 = vsel %vm1040, %v2397, %v2382
        %v2399 = vsel %vm1042, %v2398, %v2385
        %v2400 = vsel %vm1044, %v2399, %v2307
        %v2401 = vsel %vm1046, %v2400, %v2389
        %v2402 = vsel %vm1048, %v2401, %v2392
        %v2403 = vsel %vm1050, %v2402, %v2395
        %v2405 = vsel %vm1137, %v2321, 0
        %v2408 = vsel %vm1137, %v2206, 0
        %2410 = vmatprep.subr.mxu0 0.0
        %2411 = vmatpush1.xpose.msra.mxu0 %v2408
        %2412 = vmatprep.subr.mxu0 0.0
        %2413 = vmatpush1.xpose.msra.mxu0 0.0
        %2414 = vmatprep.subr.mxu0 0.0
        %2415 = vmatpush1.xpose.msra.mxu0 0.0
        %2416 = vmatprep.subr.mxu0 0.0
        %2417 = vmatpush1.xpose.msra.mxu0 0.0
        %2418 = vmatprep.subr.mxu0 0.0
        %2419 = vmatpush1.xpose.msra.mxu0 0.0
        %2420 = vmatprep.subr.mxu0 0.0
        %2421 = vmatpush1.xpose.msra.mxu0 0.0
        %2422 = vmatprep.subr.mxu0 0.0
        %2423 = vmatpush1.xpose.msra.mxu0 0.0
        %2424 = vmatprep.subr.mxu0 0.0
        %2425 = vmatpush1.xpose.msra.mxu0 0.0
        %2426 = vmatprep.subr.mxu0 0.0
        %2427 = vmatpush1.xpose.msra.mxu0 0.0
        %2428 = vmatprep.subr.mxu0 0.0
        %2429 = vmatpush1.xpose.msra.mxu0 0.0
        %2430 = vmatprep.subr.mxu0 0.0
        %2431 = vmatpush1.xpose.msra.mxu0 0.0
        %2432 = vmatprep.subr.mxu0 0.0
        %2433 = vmatpush1.xpose.msra.mxu0 0.0
        %2434 = vmatprep.subr.mxu0 0.0
        %2435 = vmatpush1.xpose.msra.mxu0 0.0
        %2436 = vmatprep.subr.mxu0 0.0
        %2437 = vmatpush1.xpose.msra.mxu0 0.0
        %2438 = vmatprep.subr.mxu0 0.0
        %2439 = vmatpush1.xpose.msra.mxu0 0.0
        %2440 = vmatprep.subr.mxu0 0.0
        %2441 = vmatpush1.xpose.msra.mxu0 0.0
        %2442 = vmatprep.subr.mxu0 0.0
        %2443 = vmatpush1.xpose.msra.mxu0 0.0
        %2444 = vmatprep.subr.mxu0 0.0
        %2445 = vmatpush1.xpose.msra.mxu0 0.0
        %2446 = vmatprep.subr.mxu0 0.0
        %2447 = vmatpush1.xpose.msra.mxu0 0.0
        %2448 = vmatprep.subr.mxu0 0.0
        %2449 = vmatpush1.xpose.msra.mxu0 0.0
        %2450 = vmatprep.subr.mxu0 0.0
        %2451 = vmatpush1.xpose.msra.mxu0 0.0
        %2452 = vmatprep.subr.mxu0 0.0
        %2453 = vmatpush1.xpose.msra.mxu0 0.0
        %2454 = vmatprep.subr.mxu0 0.0
        %2455 = vmatpush1.xpose.msra.mxu0 0.0
        %2456 = vmatprep.subr.mxu0 0.0
        %2457 = vmatpush1.xpose.msra.mxu0 0.0
        %2458 = vmatprep.subr.mxu0 0.0
        %2459 = vmatpush1.xpose.msra.mxu0 0.0
        %2460 = vmatprep.subr.mxu0 0.0
        %2461 = vmatpush1.xpose.msra.mxu0 0.0
        %2462 = vmatprep.subr.mxu0 0.0
        %2463 = vmatpush1.xpose.msra.mxu0 0.0
        %2464 = vmatprep.subr.mxu0 0.0
        %2465 = vmatpush1.xpose.msra.mxu0 0.0
        %2466 = vmatprep.subr.mxu0 0.0
        %2467 = vmatpush1.xpose.msra.mxu0 0.0
        %2468 = vmatprep.subr.mxu0 0.0
        %2469 = vmatpush1.xpose.msra.mxu0 0.0
        %2470 = vmatprep.subr.mxu0 0.0
        %2471 = vmatpush1.xpose.msra.mxu0 0.0
        %2472 = vmatprep.subr.mxu0 0.0
        %2473 = vmatpush1.xpose.msra.mxu0 0.0
        %2474 = vmatprep.mubr.f32.mxu0 0.0
        %2475 = vmatmul.mubr.f32.gmra.mrb[0].mxu0 %v2405
        %v2476 = vpop.f32.mrb[0].mxu0
        %v2477 = vadd.f32 0.0, %v2476
        %v2478 = vpop.f32.mrb[0].mxu0
        %2479 = vdwg.mxu0
        %v2480 = vmul.f32 %v2477, 0.35355338
        %v2481 = vmul.f32 %v2480, %v866
        %v2482 = vsel %vm1137, %v2481, -inf
        %2483 = vmax.xlane.f32.xlu0 %v2482
        %v2484 = vpop.xlane.xlu0 %2483
        %v2485 = vsub.f32 %v2481, %v2484
        %v2486 = vmul.f32 %v2485, 1.442695
        %v2487 = vpow.pop %v2486
        %v2488 = vsel %vm1137, %v2487, 0.0
        %2489 = vadd.xlane.f32.xlu0 %v2488
        %v2490 = vpop.xlane.xlu0 %2489
        %v2491 = vrcp.pop %v2490
        %v2492 = vmul.f32 %v2487, %v2491
        %v2493 = vmul.f32 %v2492, %v866
        %2494 = vst.msk [vmem:[%s796] sm:$0xff] %vm1137, %v2493
        %2495 = vrot.lane.b32.xlu0 %v2206, 96
        %v2496 = vpop.permute.xlu0 %2495
        %v2499 = vsel %vm1137, %v2493, 0
        %2501 = vmatprep.subr.mxu0 0.0
        %2502 = vmatpush1.msra.mxu0 %v2496
        %2503 = vmatprep.subr.mxu0 0.0
        %2504 = vmatpush1.msra.mxu0 0.0
        %2505 = vmatprep.subr.mxu0 0.0
        %2506 = vmatpush1.msra.mxu0 0.0
        %2507 = vmatprep.subr.mxu0 0.0
        %2508 = vmatpush1.msra.mxu0 0.0
        %2509 = vmatprep.subr.mxu0 0.0
        %2510 = vmatpush1.msra.mxu0 0.0
        %2511 = vmatprep.subr.mxu0 0.0
        %2512 = vmatpush1.msra.mxu0 0.0
        %2513 = vmatprep.subr.mxu0 0.0
        %2514 = vmatpush1.msra.mxu0 0.0
        %2515 = vmatprep.subr.mxu0 0.0
        %2516 = vmatpush1.msra.mxu0 0.0
        %2517 = vmatprep.subr.mxu0 0.0
        %2518 = vmatpush1.msra.mxu0 0.0
        %2519 = vmatprep.subr.mxu0 0.0
        %2520 = vmatpush1.msra.mxu0 0.0
        %2521 = vmatprep.subr.mxu0 0.0
        %2522 = vmatpush1.msra.mxu0 0.0
        %2523 = vmatprep.subr.mxu0 0.0
        %2524 = vmatpush1.msra.mxu0 0.0
        %2525 = vmatprep.subr.mxu0 0.0
        %2526 = vmatpush1.msra.mxu0 0.0
        %2527 = vmatprep.subr.mxu0 0.0
        %2528 = vmatpush1.msra.mxu0 0.0
        %2529 = vmatprep.subr.mxu0 0.0
        %2530 = vmatpush1.msra.mxu0 0.0
        %2531 = vmatprep.subr.mxu0 0.0
        %2532 = vmatpush1.msra.mxu0 0.0
        %2533 = vmatprep.subr.mxu0 0.0
        %2534 = vmatpush1.msra.mxu0 0.0
        %2535 = vmatprep.subr.mxu0 0.0
        %2536 = vmatpush1.msra.mxu0 0.0
        %2537 = vmatprep.subr.mxu0 0.0
        %2538 = vmatpush1.msra.mxu0 0.0
        %2539 = vmatprep.subr.mxu0 0.0
        %2540 = vmatpush1.msra.mxu0 0.0
        %2541 = vmatprep.subr.mxu0 0.0
        %2542 = vmatpush1.msra.mxu0 0.0
        %2543 = vmatprep.subr.mxu0 0.0
        %2544 = vmatpush1.msra.mxu0 0.0
        %2545 = vmatprep.subr.mxu0 0.0
        %2546 = vmatpush1.msra.mxu0 0.0
        %2547 = vmatprep.subr.mxu0 0.0
        %2548 = vmatpush1.msra.mxu0 0.0
        %2549 = vmatprep.subr.mxu0 0.0
        %2550 = vmatpush1.msra.mxu0 0.0
        %2551 = vmatprep.subr.mxu0 0.0
        %2552 = vmatpush1.msra.mxu0 0.0
        %2553 = vmatprep.subr.mxu0 0.0
        %2554 = vmatpush1.msra.mxu0 0.0
        %2555 = vmatprep.subr.mxu0 0.0
        %2556 = vmatpush1.msra.mxu0 0.0
        %2557 = vmatprep.subr.mxu0 0.0
        %2558 = vmatpush1.msra.mxu0 0.0
        %2559 = vmatprep.subr.mxu0 0.0
        %2560 = vmatpush1.msra.mxu0 0.0
        %2561 = vmatprep.subr.mxu0 0.0
        %2562 = vmatpush1.msra.mxu0 0.0
        %2563 = vmatprep.subr.mxu0 0.0
        %2564 = vmatpush1.msra.mxu0 0.0
        %2565 = vmatprep.mubr.f32.mxu0 0.0
        %2566 = vmatmul.mubr.f32.gmra.mrb[0].mxu0 %v2499
        %v2567 = vpop.f32.mrb[0].mxu0
        %v2568 = vadd.f32 0.0, %v2567
        %v2569 = vpop.f32.mrb[0].mxu0
        %2570 = vdwg.mxu0
        %v2572 = vsel %vm1137, %v2349, 0
        %v2575 = vsel %vm1137, %v2234, 0
        %2577 = vmatprep.subr.mxu0 0.0
        %2578 = vmatpush1.xpose.msra.mxu0 %v2575
        %2579 = vmatprep.subr.mxu0 0.0
        %2580 = vmatpush1.xpose.msra.mxu0 0.0
        %2581 = vmatprep.subr.mxu0 0.0
        %2582 = vmatpush1.xpose.msra.mxu0 0.0
        %2583 = vmatprep.subr.mxu0 0.0
        %2584 = vmatpush1.xpose.msra.mxu0 0.0
        %2585 = vmatprep.subr.mxu0 0.0
        %2586 = vmatpush1.xpose.msra.mxu0 0.0
        %2587 = vmatprep.subr.mxu0 0.0
        %2588 = vmatpush1.xpose.msra.mxu0 0.0
        %2589 = vmatprep.subr.mxu0 0.0
        %2590 = vmatpush1.xpose.msra.mxu0 0.0
        %2591 = vmatprep.subr.mxu0 0.0
        %2592 = vmatpush1.xpose.msra.mxu0 0.0
        %2593 = vmatprep.subr.mxu0 0.0
        %2594 = vmatpush1.xpose.msra.mxu0 0.0
        %2595 = vmatprep.subr.mxu0 0.0
        %2596 = vmatpush1.xpose.msra.mxu0 0.0
        %2597 = vmatprep.subr.mxu0 0.0
        %2598 = vmatpush1.xpose.msra.mxu0 0.0
        %2599 = vmatprep.subr.mxu0 0.0
        %2600 = vmatpush1.xpose.msra.mxu0 0.0
        %2601 = vmatprep.subr.mxu0 0.0
        %2602 = vmatpush1.xpose.msra.mxu0 0.0
        %2603 = vmatprep.subr.mxu0 0.0
        %2604 = vmatpush1.xpose.msra.mxu0 0.0
        %2605 = vmatprep.subr.mxu0 0.0
        %2606 = vmatpush1.xpose.msra.mxu0 0.0
        %2607 = vmatprep.subr.mxu0 0.0
        %2608 = vmatpush1.xpose.msra.mxu0 0.0
        %2609 = vmatprep.subr.mxu0 0.0
        %2610 = vmatpush1.xpose.msra.mxu0 0.0
        %2611 = vmatprep.subr.mxu0 0.0
        %2612 = vmatpush1.xpose.msra.mxu0 0.0
        %2613 = vmatprep.subr.mxu0 0.0
        %2614 = vmatpush1.xpose.msra.mxu0 0.0
        %2615 = vmatprep.subr.mxu0 0.0
        %2616 = vmatpush1.xpose.msra.mxu0 0.0
        %2617 = vmatprep.subr.mxu0 0.0
        %2618 = vmatpush1.xpose.msra.mxu0 0.0
        %2619 = vmatprep.subr.mxu0 0.0
        %2620 = vmatpush1.xpose.msra.mxu0 0.0
        %2621 = vmatprep.subr.mxu0 0.0
        %2622 = vmatpush1.xpose.msra.mxu0 0.0
        %2623 = vmatprep.subr.mxu0 0.0
        %2624 = vmatpush1.xpose.msra.mxu0 0.0
        %2625 = vmatprep.subr.mxu0 0.0
        %2626 = vmatpush1.xpose.msra.mxu0 0.0
        %2627 = vmatprep.subr.mxu0 0.0
        %2628 = vmatpush1.xpose.msra.mxu0 0.0
        %2629 = vmatprep.subr.mxu0 0.0
        %2630 = vmatpush1.xpose.msra.mxu0 0.0
        %2631 = vmatprep.subr.mxu0 0.0
        %2632 = vmatpush1.xpose.msra.mxu0 0.0
        %2633 = vmatprep.subr.mxu0 0.0
        %2634 = vmatpush1.xpose.msra.mxu0 0.0
        %2635 = vmatprep.subr.mxu0 0.0
        %2636 = vmatpush1.xpose.msra.mxu0 0.0
        %2637 = vmatprep.subr.mxu0 0.0
        %2638 = vmatpush1.xpose.msra.mxu0 0.0
        %2639 = vmatprep.subr.mxu0 0.0
        %2640 = vmatpush1.xpose.msra.mxu0 0.0
        %2641 = vmatprep.mubr.f32.mxu0 0.0
        %2642 = vmatmul.mubr.f32.gmra.mrb[0].mxu0 %v2572
        %v2643 = vpop.f32.mrb[0].mxu0
        %v2644 = vadd.f32 0.0, %v2643
        %v2645 = vpop.f32.mrb[0].mxu0
        %2646 = vdwg.mxu0
        %v2647 = vmul.f32 %v2644, 0.35355338
        %v2648 = vmul.f32 %v2647, %v883
        %v2649 = vsel %vm1137, %v2648, -inf
        %2650 = vmax.xlane.f32.xlu0 %v2649
        %v2651 = vpop.xlane.xlu0 %2650
        %v2652 = vsub.f32 %v2648, %v2651
        %v2653 = vmul.f32 %v2652, 1.442695
        %v2654 = vpow.pop %v2653
        %v2655 = vsel %vm1137, %v2654, 0.0
        %2656 = vadd.xlane.f32.xlu0 %v2655
        %v2657 = vpop.xlane.xlu0 %2656
        %v2658 = vrcp.pop %v2657
        %v2659 = vmul.f32 %v2654, %v2658
        %v2660 = vmul.f32 %v2659, %v883
        %s2661 = scalar_lea.vmem %s796, 8 [#allocation12]
        %2662 = vst.msk [vmem:[%s2661] sm:$0xff] %vm1137, %v2660
        %2663 = vrot.lane.b32.xlu0 %v2234, 96
        %v2664 = vpop.permute.xlu0 %2663
        %v2667 = vsel %vm1137, %v2660, 0
        %2669 = vmatprep.subr.mxu0 0.0
        %2670 = vmatpush1.msra.mxu0 %v2664
        %2671 = vmatprep.subr.mxu0 0.0
        %2672 = vmatpush1.msra.mxu0 0.0
        %2673 = vmatprep.subr.mxu0 0.0
        %2674 = vmatpush1.msra.mxu0 0.0
        %2675 = vmatprep.subr.mxu0 0.0
        %2676 = vmatpush1.msra.mxu0 0.0
        %2677 = vmatprep.subr.mxu0 0.0
        %2678 = vmatpush1.msra.mxu0 0.0
        %2679 = vmatprep.subr.mxu0 0.0
        %2680 = vmatpush1.msra.mxu0 0.0
        %2681 = vmatprep.subr.mxu0 0.0
        %2682 = vmatpush1.msra.mxu0 0.0
        %2683 = vmatprep.subr.mxu0 0.0
        %2684 = vmatpush1.msra.mxu0 0.0
        %2685 = vmatprep.subr.mxu0 0.0
        %2686 = vmatpush1.msra.mxu0 0.0
        %2687 = vmatprep.subr.mxu0 0.0
        %2688 = vmatpush1.msra.mxu0 0.0
        %2689 = vmatprep.subr.mxu0 0.0
        %2690 = vmatpush1.msra.mxu0 0.0
        %2691 = vmatprep.subr.mxu0 0.0
        %2692 = vmatpush1.msra.mxu0 0.0
        %2693 = vmatprep.subr.mxu0 0.0
        %2694 = vmatpush1.msra.mxu0 0.0
        %2695 = vmatprep.subr.mxu0 0.0
        %2696 = vmatpush1.msra.mxu0 0.0
        %2697 = vmatprep.subr.mxu0 0.0
        %2698 = vmatpush1.msra.mxu0 0.0
        %2699 = vmatprep.subr.mxu0 0.0
        %2700 = vmatpush1.msra.mxu0 0.0
        %2701 = vmatprep.subr.mxu0 0.0
        %2702 = vmatpush1.msra.mxu0 0.0
        %2703 = vmatprep.subr.mxu0 0.0
        %2704 = vmatpush1.msra.mxu0 0.0
        %2705 = vmatprep.subr.mxu0 0.0
        %2706 = vmatpush1.msra.mxu0 0.0
        %2707 = vmatprep.subr.mxu0 0.0
        %2708 = vmatpush1.msra.mxu0 0.0
        %2709 = vmatprep.subr.mxu0 0.0
        %2710 = vmatpush1.msra.mxu0 0.0
        %2711 = vmatprep.subr.mxu0 0.0
        %2712 = vmatpush1.msra.mxu0 0.0
        %2713 = vmatprep.subr.mxu0 0.0
        %2714 = vmatpush1.msra.mxu0 0.0
        %2715 = vmatprep.subr.mxu0 0.0
        %2716 = vmatpush1.msra.mxu0 0.0
        %2717 = vmatprep.subr.mxu0 0.0
        %2718 = vmatpush1.msra.mxu0 0.0
        %2719 = vmatprep.subr.mxu0 0.0
        %2720 = vmatpush1.msra.mxu0 0.0
        %2721 = vmatprep.subr.mxu0 0.0
        %2722 = vmatpush1.msra.mxu0 0.0
        %2723 = vmatprep.subr.mxu0 0.0
        %2724 = vmatpush1.msra.mxu0 0.0
        %2725 = vmatprep.subr.mxu0 0.0
        %2726 = vmatpush1.msra.mxu0 0.0
        %2727 = vmatprep.subr.mxu0 0.0
        %2728 = vmatpush1.msra.mxu0 0.0
        %2729 = vmatprep.subr.mxu0 0.0
        %2730 = vmatpush1.msra.mxu0 0.0
        %2731 = vmatprep.subr.mxu0 0.0
        %2732 = vmatpush1.msra.mxu0 0.0
        %2733 = vmatprep.mubr.f32.mxu0 0.0
        %2734 = vmatmul.mubr.f32.gmra.mrb[0].mxu0 %v2667
        %v2735 = vpop.f32.mrb[0].mxu0
        %v2736 = vadd.f32 0.0, %v2735
        %v2737 = vpop.f32.mrb[0].mxu0
        %2738 = vdwg.mxu0
        %v2740 = vsel %vm1137, %v2376, 0
        %v2743 = vsel %vm1137, %v2261, 0
        %2745 = vmatprep.subr.mxu0 0.0
        %2746 = vmatpush1.xpose.msra.mxu0 %v2743
        %2747 = vmatprep.subr.mxu0 0.0
        %2748 = vmatpush1.xpose.msra.mxu0 0.0
        %2749 = vmatprep.subr.mxu0 0.0
        %2750 = vmatpush1.xpose.msra.mxu0 0.0
        %2751 = vmatprep.subr.mxu0 0.0
        %2752 = vmatpush1.xpose.msra.mxu0 0.0
        %2753 = vmatprep.subr.mxu0 0.0
        %2754 = vmatpush1.xpose.msra.mxu0 0.0
        %2755 = vmatprep.subr.mxu0 0.0
        %2756 = vmatpush1.xpose.msra.mxu0 0.0
        %2757 = vmatprep.subr.mxu0 0.0
        %2758 = vmatpush1.xpose.msra.mxu0 0.0
        %2759 = vmatprep.subr.mxu0 0.0
        %2760 = vmatpush1.xpose.msra.mxu0 0.0
        %2761 = vmatprep.subr.mxu0 0.0
        %2762 = vmatpush1.xpose.msra.mxu0 0.0
        %2763 = vmatprep.subr.mxu0 0.0
        %2764 = vmatpush1.xpose.msra.mxu0 0.0
        %2765 = vmatprep.subr.mxu0 0.0
        %2766 = vmatpush1.xpose.msra.mxu0 0.0
        %2767 = vmatprep.subr.mxu0 0.0
        %2768 = vmatpush1.xpose.msra.mxu0 0.0
        %2769 = vmatprep.subr.mxu0 0.0
        %2770 = vmatpush1.xpose.msra.mxu0 0.0
        %2771 = vmatprep.subr.mxu0 0.0
        %2772 = vmatpush1.xpose.msra.mxu0 0.0
        %2773 = vmatprep.subr.mxu0 0.0
        %2774 = vmatpush1.xpose.msra.mxu0 0.0
        %2775 = vmatprep.subr.mxu0 0.0
        %2776 = vmatpush1.xpose.msra.mxu0 0.0
        %2777 = vmatprep.subr.mxu0 0.0
        %2778 = vmatpush1.xpose.msra.mxu0 0.0
        %2779 = vmatprep.subr.mxu0 0.0
        %2780 = vmatpush1.xpose.msra.mxu0 0.0
        %2781 = vmatprep.subr.mxu0 0.0
        %2782 = vmatpush1.xpose.msra.mxu0 0.0
        %2783 = vmatprep.subr.mxu0 0.0
        %2784 = vmatpush1.xpose.msra.mxu0 0.0
        %2785 = vmatprep.subr.mxu0 0.0
        %2786 = vmatpush1.xpose.msra.mxu0 0.0
        %2787 = vmatprep.subr.mxu0 0.0
        %2788 = vmatpush1.xpose.msra.mxu0 0.0
        %2789 = vmatprep.subr.mxu0 0.0
        %2790 = vmatpush1.xpose.msra.mxu0 0.0
        %2791 = vmatprep.subr.mxu0 0.0
        %2792 = vmatpush1.xpose.msra.mxu0 0.0
        %2793 = vmatprep.subr.mxu0 0.0
        %2794 = vmatpush1.xpose.msra.mxu0 0.0
        %2795 = vmatprep.subr.mxu0 0.0
        %2796 = vmatpush1.xpose.msra.mxu0 0.0
        %2797 = vmatprep.subr.mxu0 0.0
        %2798 = vmatpush1.xpose.msra.mxu0 0.0
        %2799 = vmatprep.subr.mxu0 0.0
        %2800 = vmatpush1.xpose.msra.mxu0 0.0
        %2801 = vmatprep.subr.mxu0 0.0
        %2802 = vmatpush1.xpose.msra.mxu0 0.0
        %2803 = vmatprep.subr.mxu0 0.0
        %2804 = vmatpush1.xpose.msra.mxu0 0.0
        %2805 = vmatprep.subr.mxu0 0.0
        %2806 = vmatpush1.xpose.msra.mxu0 0.0
        %2807 = vmatprep.subr.mxu0 0.0
        %2808 = vmatpush1.xpose.msra.mxu0 0.0
        %2809 = vmatprep.mubr.f32.mxu0 0.0
        %2810 = vmatmul.mubr.f32.gmra.mrb[0].mxu0 %v2740
        %v2811 = vpop.f32.mrb[0].mxu0
        %v2812 = vadd.f32 0.0, %v2811
        %v2813 = vpop.f32.mrb[0].mxu0
        %2814 = vdwg.mxu0
        %v2815 = vmul.f32 %v2812, 0.35355338
        %v2816 = vmul.f32 %v2815, %v900
        %v2817 = vsel %vm1137, %v2816, -inf
        %2818 = vmax.xlane.f32.xlu0 %v2817
        %v2819 = vpop.xlane.xlu0 %2818
        %v2820 = vsub.f32 %v2816, %v2819
        %v2821 = vmul.f32 %v2820, 1.442695
        %v2822 = vpow.pop %v2821
        %v2823 = vsel %vm1137, %v2822, 0.0
        %2824 = vadd.xlane.f32.xlu0 %v2823
        %v2825 = vpop.xlane.xlu0 %2824
        %v2826 = vrcp.pop %v2825
        %v2827 = vmul.f32 %v2822, %v2826
        %v2828 = vmul.f32 %v2827, %v900
        %s2829 = scalar_lea.vmem %s796, 16 [#allocation12]
        %2830 = vst.msk [vmem:[%s2829] sm:$0xff] %vm1137, %v2828
        %2831 = vrot.lane.b32.xlu0 %v2261, 96
        %v2832 = vpop.permute.xlu0 %2831
        %v2835 = vsel %vm1137, %v2828, 0
        %2837 = vmatprep.subr.mxu0 0.0
        %2838 = vmatpush1.msra.mxu0 %v2832
        %2839 = vmatprep.subr.mxu0 0.0
        %2840 = vmatpush1.msra.mxu0 0.0
        %2841 = vmatprep.subr.mxu0 0.0
        %2842 = vmatpush1.msra.mxu0 0.0
        %2843 = vmatprep.subr.mxu0 0.0
        %2844 = vmatpush1.msra.mxu0 0.0
        %2845 = vmatprep.subr.mxu0 0.0
        %2846 = vmatpush1.msra.mxu0 0.0
        %2847 = vmatprep.subr.mxu0 0.0
        %2848 = vmatpush1.msra.mxu0 0.0
        %2849 = vmatprep.subr.mxu0 0.0
        %2850 = vmatpush1.msra.mxu0 0.0
        %2851 = vmatprep.subr.mxu0 0.0
        %2852 = vmatpush1.msra.mxu0 0.0
        %2853 = vmatprep.subr.mxu0 0.0
        %2854 = vmatpush1.msra.mxu0 0.0
        %2855 = vmatprep.subr.mxu0 0.0
        %2856 = vmatpush1.msra.mxu0 0.0
        %2857 = vmatprep.subr.mxu0 0.0
        %2858 = vmatpush1.msra.mxu0 0.0
        %2859 = vmatprep.subr.mxu0 0.0
        %2860 = vmatpush1.msra.mxu0 0.0
        %2861 = vmatprep.subr.mxu0 0.0
        %2862 = vmatpush1.msra.mxu0 0.0
        %2863 = vmatprep.subr.mxu0 0.0
        %2864 = vmatpush1.msra.mxu0 0.0
        %2865 = vmatprep.subr.mxu0 0.0
        %2866 = vmatpush1.msra.mxu0 0.0
        %2867 = vmatprep.subr.mxu0 0.0
        %2868 = vmatpush1.msra.mxu0 0.0
        %2869 = vmatprep.subr.mxu0 0.0
        %2870 = vmatpush1.msra.mxu0 0.0
        %2871 = vmatprep.subr.mxu0 0.0
        %2872 = vmatpush1.msra.mxu0 0.0
        %2873 = vmatprep.subr.mxu0 0.0
        %2874 = vmatpush1.msra.mxu0 0.0
        %2875 = vmatprep.subr.mxu0 0.0
        %2876 = vmatpush1.msra.mxu0 0.0
        %2877 = vmatprep.subr.mxu0 0.0
        %2878 = vmatpush1.msra.mxu0 0.0
        %2879 = vmatprep.subr.mxu0 0.0
        %2880 = vmatpush1.msra.mxu0 0.0
        %2881 = vmatprep.subr.mxu0 0.0
        %2882 = vmatpush1.msra.mxu0 0.0
        %2883 = vmatprep.subr.mxu0 0.0
        %2884 = vmatpush1.msra.mxu0 0.0
        %2885 = vmatprep.subr.mxu0 0.0
        %2886 = vmatpush1.msra.mxu0 0.0
        %2887 = vmatprep.subr.mxu0 0.0
        %2888 = vmatpush1.msra.mxu0 0.0
        %2889 = vmatprep.subr.mxu0 0.0
        %2890 = vmatpush1.msra.mxu0 0.0
        %2891 = vmatprep.subr.mxu0 0.0
        %2892 = vmatpush1.msra.mxu0 0.0
        %2893 = vmatprep.subr.mxu0 0.0
        %2894 = vmatpush1.msra.mxu0 0.0
        %2895 = vmatprep.subr.mxu0 0.0
        %2896 = vmatpush1.msra.mxu0 0.0
        %2897 = vmatprep.subr.mxu0 0.0
        %2898 = vmatpush1.msra.mxu0 0.0
        %2899 = vmatprep.subr.mxu0 0.0
        %2900 = vmatpush1.msra.mxu0 0.0
        %2901 = vmatprep.mubr.f32.mxu0 0.0
        %2902 = vmatmul.mubr.f32.gmra.mrb[0].mxu0 %v2835
        %v2903 = vpop.f32.mrb[0].mxu0
        %v2904 = vadd.f32 0.0, %v2903
        %v2905 = vpop.f32.mrb[0].mxu0
        %2906 = vdwg.mxu0
        %v2908 = vsel %vm1137, %v2403, 0
        %v2911 = vsel %vm1137, %v2288, 0
        %2913 = vmatprep.subr.mxu0 0.0
        %2914 = vmatpush1.xpose.msra.mxu0 %v2911
        %2915 = vmatprep.subr.mxu0 0.0
        %2916 = vmatpush1.xpose.msra.mxu0 0.0
        %2917 = vmatprep.subr.mxu0 0.0
        %2918 = vmatpush1.xpose.msra.mxu0 0.0
        %2919 = vmatprep.subr.mxu0 0.0
        %2920 = vmatpush1.xpose.msra.mxu0 0.0
        %2921 = vmatprep.subr.mxu0 0.0
        %2922 = vmatpush1.xpose.msra.mxu0 0.0
        %2923 = vmatprep.subr.mxu0 0.0
        %2924 = vmatpush1.xpose.msra.mxu0 0.0
        %2925 = vmatprep.subr.mxu0 0.0
        %2926 = vmatpush1.xpose.msra.mxu0 0.0
        %2927 = vmatprep.subr.mxu0 0.0
        %2928 = vmatpush1.xpose.msra.mxu0 0.0
        %2929 = vmatprep.subr.mxu0 0.0
        %2930 = vmatpush1.xpose.msra.mxu0 0.0
        %2931 = vmatprep.subr.mxu0 0.0
        %2932 = vmatpush1.xpose.msra.mxu0 0.0
        %2933 = vmatprep.subr.mxu0 0.0
        %2934 = vmatpush1.xpose.msra.mxu0 0.0
        %2935 = vmatprep.subr.mxu0 0.0
        %2936 = vmatpush1.xpose.msra.mxu0 0.0
        %2937 = vmatprep.subr.mxu0 0.0
        %2938 = vmatpush1.xpose.msra.mxu0 0.0
        %2939 = vmatprep.subr.mxu0 0.0
        %2940 = vmatpush1.xpose.msra.mxu0 0.0
        %2941 = vmatprep.subr.mxu0 0.0
        %2942 = vmatpush1.xpose.msra.mxu0 0.0
        %2943 = vmatprep.subr.mxu0 0.0
        %2944 = vmatpush1.xpose.msra.mxu0 0.0
        %2945 = vmatprep.subr.mxu0 0.0
        %2946 = vmatpush1.xpose.msra.mxu0 0.0
        %2947 = vmatprep.subr.mxu0 0.0
        %2948 = vmatpush1.xpose.msra.mxu0 0.0
        %2949 = vmatprep.subr.mxu0 0.0
        %2950 = vmatpush1.xpose.msra.mxu0 0.0
        %2951 = vmatprep.subr.mxu0 0.0
        %2952 = vmatpush1.xpose.msra.mxu0 0.0
        %2953 = vmatprep.subr.mxu0 0.0
        %2954 = vmatpush1.xpose.msra.mxu0 0.0
        %2955 = vmatprep.subr.mxu0 0.0
        %2956 = vmatpush1.xpose.msra.mxu0 0.0
        %2957 = vmatprep.subr.mxu0 0.0
        %2958 = vmatpush1.xpose.msra.mxu0 0.0
        %2959 = vmatprep.subr.mxu0 0.0
        %2960 = vmatpush1.xpose.msra.mxu0 0.0
        %2961 = vmatprep.subr.mxu0 0.0
        %2962 = vmatpush1.xpose.msra.mxu0 0.0
        %2963 = vmatprep.subr.mxu0 0.0
        %2964 = vmatpush1.xpose.msra.mxu0 0.0
        %2965 = vmatprep.subr.mxu0 0.0
        %2966 = vmatpush1.xpose.msra.mxu0 0.0
        %2967 = vmatprep.subr.mxu0 0.0
        %2968 = vmatpush1.xpose.msra.mxu0 0.0
        %2969 = vmatprep.subr.mxu0 0.0
        %2970 = vmatpush1.xpose.msra.mxu0 0.0
        %2971 = vmatprep.subr.mxu0 0.0
        %2972 = vmatpush1.xpose.msra.mxu0 0.0
        %2973 = vmatprep.subr.mxu0 0.0
        %2974 = vmatpush1.xpose.msra.mxu0 0.0
        %2975 = vmatprep.subr.mxu0 0.0
        %2976 = vmatpush1.xpose.msra.mxu0 0.0
        %2977 = vmatprep.mubr.f32.mxu0 0.0
        %2978 = vmatmul.mubr.f32.gmra.mrb[0].mxu0 %v2908
        %v2979 = vpop.f32.mrb[0].mxu0
        %v2980 = vadd.f32 0.0, %v2979
        %v2981 = vpop.f32.mrb[0].mxu0
        %2982 = vdwg.mxu0
        %v2983 = vmul.f32 %v2980, 0.35355338
        %v2984 = vmul.f32 %v2983, %v917
        %v2985 = vsel %vm1137, %v2984, -inf
        %2986 = vmax.xlane.f32.xlu0 %v2985
        %v2987 = vpop.xlane.xlu0 %2986
        %v2988 = vsub.f32 %v2984, %v2987
        %v2989 = vmul.f32 %v2988, 1.442695
        %v2990 = vpow.pop %v2989
        %v2991 = vsel %vm1137, %v2990, 0.0
        %2992 = vadd.xlane.f32.xlu0 %v2991
        %v2993 = vpop.xlane.xlu0 %2992
        %v2994 = vrcp.pop %v2993
        %v2995 = vmul.f32 %v2990, %v2994
        %v2996 = vmul.f32 %v2995, %v917
        %s2997 = scalar_lea.vmem %s796, 24 [#allocation12]
        %2998 = vst.msk [vmem:[%s2997] sm:$0xff] %vm1137, %v2996
        %2999 = vrot.lane.b32.xlu0 %v2288, 96
        %v3000 = vpop.permute.xlu0 %2999
        %v3003 = vsel %vm1137, %v2996, 0
        %3005 = vmatprep.subr.mxu0 0.0
        %3006 = vmatpush1.msra.mxu0 %v3000
        %3007 = vmatprep.subr.mxu0 0.0
        %3008 = vmatpush1.msra.mxu0 0.0
        %3009 = vmatprep.subr.mxu0 0.0
        %3010 = vmatpush1.msra.mxu0 0.0
        %3011 = vmatprep.subr.mxu0 0.0
        %3012 = vmatpush1.msra.mxu0 0.0
        %3013 = vmatprep.subr.mxu0 0.0
        %3014 = vmatpush1.msra.mxu0 0.0
        %3015 = vmatprep.subr.mxu0 0.0
        %3016 = vmatpush1.msra.mxu0 0.0
        %3017 = vmatprep.subr.mxu0 0.0
        %3018 = vmatpush1.msra.mxu0 0.0
        %3019 = vmatprep.subr.mxu0 0.0
        %3020 = vmatpush1.msra.mxu0 0.0
        %3021 = vmatprep.subr.mxu0 0.0
        %3022 = vmatpush1.msra.mxu0 0.0
        %3023 = vmatprep.subr.mxu0 0.0
        %3024 = vmatpush1.msra.mxu0 0.0
        %3025 = vmatprep.subr.mxu0 0.0
        %3026 = vmatpush1.msra.mxu0 0.0
        %3027 = vmatprep.subr.mxu0 0.0
        %3028 = vmatpush1.msra.mxu0 0.0
        %3029 = vmatprep.subr.mxu0 0.0
        %3030 = vmatpush1.msra.mxu0 0.0
        %3031 = vmatprep.subr.mxu0 0.0
        %3032 = vmatpush1.msra.mxu0 0.0
        %3033 = vmatprep.subr.mxu0 0.0
        %3034 = vmatpush1.msra.mxu0 0.0
        %3035 = vmatprep.subr.mxu0 0.0
        %3036 = vmatpush1.msra.mxu0 0.0
        %3037 = vmatprep.subr.mxu0 0.0
        %3038 = vmatpush1.msra.mxu0 0.0
        %3039 = vmatprep.subr.mxu0 0.0
        %3040 = vmatpush1.msra.mxu0 0.0
        %3041 = vmatprep.subr.mxu0 0.0
        %3042 = vmatpush1.msra.mxu0 0.0
        %3043 = vmatprep.subr.mxu0 0.0
        %3044 = vmatpush1.msra.mxu0 0.0
        %3045 = vmatprep.subr.mxu0 0.0
        %3046 = vmatpush1.msra.mxu0 0.0
        %3047 = vmatprep.subr.mxu0 0.0
        %3048 = vmatpush1.msra.mxu0 0.0
        %3049 = vmatprep.subr.mxu0 0.0
        %3050 = vmatpush1.msra.mxu0 0.0
        %3051 = vmatprep.subr.mxu0 0.0
        %3052 = vmatpush1.msra.mxu0 0.0
        %3053 = vmatprep.subr.mxu0 0.0
        %3054 = vmatpush1.msra.mxu0 0.0
        %3055 = vmatprep.subr.mxu0 0.0
        %3056 = vmatpush1.msra.mxu0 0.0
        %3057 = vmatprep.subr.mxu0 0.0
        %3058 = vmatpush1.msra.mxu0 0.0
        %3059 = vmatprep.subr.mxu0 0.0
        %3060 = vmatpush1.msra.mxu0 0.0
        %3061 = vmatprep.subr.mxu0 0.0
        %3062 = vmatpush1.msra.mxu0 0.0
        %3063 = vmatprep.subr.mxu0 0.0
        %3064 = vmatpush1.msra.mxu0 0.0
        %3065 = vmatprep.subr.mxu0 0.0
        %3066 = vmatpush1.msra.mxu0 0.0
        %3067 = vmatprep.subr.mxu0 0.0
        %3068 = vmatpush1.msra.mxu0 0.0
        %3069 = vmatprep.mubr.f32.mxu0 0.0
        %3070 = vmatmul.mubr.f32.gmra.mrb[0].mxu0 %v3003
        %v3071 = vpop.f32.mrb[0].mxu0
        %v3072 = vadd.f32 0.0, %v3071
        %v3073 = vpop.f32.mrb[0].mxu0
        %3074 = vdwg.mxu0
        %v3076 = vrot.slane %v2568, 1
        %3077 = vrot.lane.b32.xlu0 %v3076, 8
        %v3078 = vpop.permute.xlu0 %3077
        %v3080 = vrot.slane %v2568, 2
        %3081 = vrot.lane.b32.xlu0 %v3080, 16
        %v3082 = vpop.permute.xlu0 %3081
        %v3084 = vrot.slane %v2568, 3
        %3085 = vrot.lane.b32.xlu0 %v3084, 24
        %v3086 = vpop.permute.xlu0 %3085
        %v3088 = vsel %vm1137, %v2568, %v3078
        %v3089 = vsel %vm1824, %v3088, %v3082
        %v3090 = vsel %vm1826, %v3089, %v3086
        %v3092 = vrot.slane %v2736, 1
        %3093 = vrot.lane.b32.xlu0 %v3092, 8
        %v3094 = vpop.permute.xlu0 %3093
        %v3096 = vrot.slane %v2736, 2
        %3097 = vrot.lane.b32.xlu0 %v3096, 16
        %v3098 = vpop.permute.xlu0 %3097
        %v3100 = vrot.slane %v2736, 3
        %3101 = vrot.lane.b32.xlu0 %v3100, 24
        %v3102 = vpop.permute.xlu0 %3101
        %v3104 = vsel %vm1137, %v2736, %v3094
        %v3105 = vsel %vm1824, %v3104, %v3098
        %v3106 = vsel %vm1826, %v3105, %v3102
        %v3108 = vrot.slane %v2904, 1
        %3109 = vrot.lane.b32.xlu0 %v3108, 8
        %v3110 = vpop.permute.xlu0 %3109
        %v3112 = vrot.slane %v2904, 2
        %3113 = vrot.lane.b32.xlu0 %v3112, 16
        %v3114 = vpop.permute.xlu0 %3113
        %v3116 = vrot.slane %v2904, 3
        %3117 = vrot.lane.b32.xlu0 %v3116, 24
        %v3118 = vpop.permute.xlu0 %3117
        %v3120 = vsel %vm1137, %v2904, %v3110
        %v3121 = vsel %vm1824, %v3120, %v3114
        %v3122 = vsel %vm1826, %v3121, %v3118
        %v3124 = vrot.slane %v3072, 1
        %3125 = vrot.lane.b32.xlu0 %v3124, 8
        %v3126 = vpop.permute.xlu0 %3125
        %v3128 = vrot.slane %v3072, 2
        %3129 = vrot.lane.b32.xlu0 %v3128, 16
        %v3130 = vpop.permute.xlu0 %3129
        %v3132 = vrot.slane %v3072, 3
        %3133 = vrot.lane.b32.xlu0 %v3132, 24
        %v3134 = vpop.permute.xlu0 %3133
        %v3136 = vsel %vm1137, %v3072, %v3126
        %v3137 = vsel %vm1824, %v3136, %v3130
        %v3138 = vsel %vm1826, %v3137, %v3134
        %v3140 = vrot.slane %v3090, 3
        %v3143 = vrot.slane %v3106, 6
        %v3145 = vrot.slane %v3106, 1
        %v3148 = vrot.slane %v3122, 4
        %v3150 = vrot.slane %v3122, 7
        %v3153 = vrot.slane %v3138, 2
        %v3155 = vrot.slane %v3138, 5
        %v3157 = vsel %vm1038, %v3090, %v3140
        %v3158 = vsel %vm1040, %v3157, %v3143
        %v3159 = vsel %vm1042, %v3158, %v3145
        %v3160 = vsel %vm1044, %v3159, %v3148
        %v3161 = vsel %vm1046, %v3160, %v3150
        %v3162 = vsel %vm1048, %v3161, %v3153
        %v3163 = vsel %vm1050, %v3162, %v3155
        %v3165 = vsel %vm938, %v3163, 0
        %3167 = vmatprep.subr.mxu0 0.0
        %3168 = vmatpush1.msra.mxu0 %v923
        %3169 = vmatprep.subr.mxu0 0.0
        %3170 = vmatpush1.msra.mxu0 %v924
        %3171 = vmatprep.subr.mxu0 0.0
        %3172 = vmatpush1.msra.mxu0 %v925
        %3173 = vmatprep.subr.mxu0 0.0
        %3174 = vmatpush1.msra.mxu0 %v926
        %3175 = vmatprep.subr.mxu0 0.0
        %3176 = vmatpush1.msra.mxu0 0.0
        %3177 = vmatprep.subr.mxu0 0.0
        %3178 = vmatpush1.msra.mxu0 0.0
        %3179 = vmatprep.subr.mxu0 0.0
        %3180 = vmatpush1.msra.mxu0 0.0
        %3181 = vmatprep.subr.mxu0 0.0
        %3182 = vmatpush1.msra.mxu0 0.0
        %3183 = vmatprep.subr.mxu0 0.0
        %3184 = vmatpush1.msra.mxu0 0.0
        %3185 = vmatprep.subr.mxu0 0.0
        %3186 = vmatpush1.msra.mxu0 0.0
        %3187 = vmatprep.subr.mxu0 0.0
        %3188 = vmatpush1.msra.mxu0 0.0
        %3189 = vmatprep.subr.mxu0 0.0
        %3190 = vmatpush1.msra.mxu0 0.0
        %3191 = vmatprep.subr.mxu0 0.0
        %3192 = vmatpush1.msra.mxu0 0.0
        %3193 = vmatprep.subr.mxu0 0.0
        %3194 = vmatpush1.msra.mxu0 0.0
        %3195 = vmatprep.subr.mxu0 0.0
        %3196 = vmatpush1.msra.mxu0 0.0
        %3197 = vmatprep.subr.mxu0 0.0
        %3198 = vmatpush1.msra.mxu0 0.0
        %3199 = vmatprep.subr.mxu0 0.0
        %3200 = vmatpush1.msra.mxu0 0.0
        %3201 = vmatprep.subr.mxu0 0.0
        %3202 = vmatpush1.msra.mxu0 0.0
        %3203 = vmatprep.subr.mxu0 0.0
        %3204 = vmatpush1.msra.mxu0 0.0
        %3205 = vmatprep.subr.mxu0 0.0
        %3206 = vmatpush1.msra.mxu0 0.0
        %3207 = vmatprep.subr.mxu0 0.0
        %3208 = vmatpush1.msra.mxu0 0.0
        %3209 = vmatprep.subr.mxu0 0.0
        %3210 = vmatpush1.msra.mxu0 0.0
        %3211 = vmatprep.subr.mxu0 0.0
        %3212 = vmatpush1.msra.mxu0 0.0
        %3213 = vmatprep.subr.mxu0 0.0
        %3214 = vmatpush1.msra.mxu0 0.0
        %3215 = vmatprep.subr.mxu0 0.0
        %3216 = vmatpush1.msra.mxu0 0.0
        %3217 = vmatprep.subr.mxu0 0.0
        %3218 = vmatpush1.msra.mxu0 0.0
        %3219 = vmatprep.subr.mxu0 0.0
        %3220 = vmatpush1.msra.mxu0 0.0
        %3221 = vmatprep.subr.mxu0 0.0
        %3222 = vmatpush1.msra.mxu0 0.0
        %3223 = vmatprep.subr.mxu0 0.0
        %3224 = vmatpush1.msra.mxu0 0.0
        %3225 = vmatprep.subr.mxu0 0.0
        %3226 = vmatpush1.msra.mxu0 0.0
        %3227 = vmatprep.subr.mxu0 0.0
        %3228 = vmatpush1.msra.mxu0 0.0
        %3229 = vmatprep.subr.mxu0 0.0
        %3230 = vmatpush1.msra.mxu0 0.0
        %3231 = vmatprep.mubr.f32.mxu0 0.0
        %3232 = vmatmul.mubr.f32.gmra.mrb[0].mxu0 %v3165
        %v3233 = vpop.f32.mrb[0].mxu0
        %v3234 = vadd.f32 %v1905, %v3233
        %v3235 = vpop.f32.mrb[0].mxu0
        %3236 = vdwg.mxu0
        %v3237 = vadd.f32 %v2008, %v3234
        %v3238 = vsel %vm938, %v3237, 0.0
        %3239 = vadd.xlane.f32.xlu0 %v3238
        %v3240 = vpop.xlane.xlu0 %3239
        %v3241 = vmul.f32 %v3240, %v1984
        %v3242 = vsub.f32 %v3237, %v3241
        %v3243 = vmul.f32 %v3242, %v3242
        %v3244 = vsel %vm938, %v3243, 0.0
        %3245 = vadd.xlane.f32.xlu0 %v3244
        %v3246 = vpop.xlane.xlu0 %3245
        %v3247 = vmul.f32 %v3246, %v1984
        %v3248 = vadd.f32 %v3247, 1e-05
        %v3249 = vrsqrt.pop %v3248
        %v3250 = vmul.f32 %v3242, %v3249
        %v3251 = vmul.f32 %v3250, %v1999
        %v3252 = vadd.f32 %v3251, %v2006
        %v3253 = vld [vmem:[%s823] sm:$0xff]
        %v3254 = vld [vmem:[%s823 + $0x8] sm:$0xff]
        %v3255 = vld [vmem:[%s823 + $0x10] sm:$0xff]
        %v3256 = vld [vmem:[%s823 + $0x18] sm:$0xff]
        %v3257 = vld [vmem:[%s826] sm:$0x1]
        %v3259 = vlaneseq
        %v3260 = vshrl.u32 %v3259, 7
        %v3261 = vsub.s32 0, %v3260
        %v3262 = vrot.slane %v3257, %v3261
        %v3265 = vsel %vm938, %v3252, 0
        %3267 = vmatprep.subr.mxu0 0.0
        %3268 = vmatpush1.msra.mxu0 %v3253
        %3269 = vmatprep.subr.mxu0 0.0
        %3270 = vmatpush1.msra.mxu0 %v3254
        %3271 = vmatprep.subr.mxu0 0.0
        %3272 = vmatpush1.msra.mxu0 %v3255
        %3273 = vmatprep.subr.mxu0 0.0
        %3274 = vmatpush1.msra.mxu0 %v3256
        %3275 = vmatprep.subr.mxu0 0.0
        %3276 = vmatpush1.msra.mxu0 0.0
        %3277 = vmatprep.subr.mxu0 0.0
        %3278 = vmatpush1.msra.mxu0 0.0
        %3279 = vmatprep.subr.mxu0 0.0
        %3280 = vmatpush1.msra.mxu0 0.0
        %3281 = vmatprep.subr.mxu0 0.0
        %3282 = vmatpush1.msra.mxu0 0.0
        %3283 = vmatprep.subr.mxu0 0.0
        %3284 = vmatpush1.msra.mxu0 0.0
        %3285 = vmatprep.subr.mxu0 0.0
        %3286 = vmatpush1.msra.mxu0 0.0
        %3287 = vmatprep.subr.mxu0 0.0
        %3288 = vmatpush1.msra.mxu0 0.0
        %3289 = vmatprep.subr.mxu0 0.0
        %3290 = vmatpush1.msra.mxu0 0.0
        %3291 = vmatprep.subr.mxu0 0.0
        %3292 = vmatpush1.msra.mxu0 0.0
        %3293 = vmatprep.subr.mxu0 0.0
        %3294 = vmatpush1.msra.mxu0 0.0
        %3295 = vmatprep.subr.mxu0 0.0
        %3296 = vmatpush1.msra.mxu0 0.0
        %3297 = vmatprep.subr.mxu0 0.0
        %3298 = vmatpush1.msra.mxu0 0.0
        %3299 = vmatprep.subr.mxu0 0.0
        %3300 = vmatpush1.msra.mxu0 0.0
        %3301 = vmatprep.subr.mxu0 0.0
        %3302 = vmatpush1.msra.mxu0 0.0
        %3303 = vmatprep.subr.mxu0 0.0
        %3304 = vmatpush1.msra.mxu0 0.0
        %3305 = vmatprep.subr.mxu0 0.0
        %3306 = vmatpush1.msra.mxu0 0.0
        %3307 = vmatprep.subr.mxu0 0.0
        %3308 = vmatpush1.msra.mxu0 0.0
        %3309 = vmatprep.subr.mxu0 0.0
        %3310 = vmatpush1.msra.mxu0 0.0
        %3311 = vmatprep.subr.mxu0 0.0
        %3312 = vmatpush1.msra.mxu0 0.0
        %3313 = vmatprep.subr.mxu0 0.0
        %3314 = vmatpush1.msra.mxu0 0.0
        %3315 = vmatprep.subr.mxu0 0.0
        %3316 = vmatpush1.msra.mxu0 0.0
        %3317 = vmatprep.subr.mxu0 0.0
        %3318 = vmatpush1.msra.mxu0 0.0
        %3319 = vmatprep.subr.mxu0 0.0
        %3320 = vmatpush1.msra.mxu0 0.0
        %3321 = vmatprep.subr.mxu0 0.0
        %3322 = vmatpush1.msra.mxu0 0.0
        %3323 = vmatprep.subr.mxu0 0.0
        %3324 = vmatpush1.msra.mxu0 0.0
        %3325 = vmatprep.subr.mxu0 0.0
        %3326 = vmatpush1.msra.mxu0 0.0
        %3327 = vmatprep.subr.mxu0 0.0
        %3328 = vmatpush1.msra.mxu0 0.0
        %3329 = vmatprep.subr.mxu0 0.0
        %3330 = vmatpush1.msra.mxu0 0.0
        %3331 = vmatprep.mubr.f32.mxu0 0.0
        %3332 = vmatmul.mubr.f32.gmra.mrb[0].mxu0 %v3265
        %v3333 = vpop.f32.mrb[0].mxu0
        %v3334 = vadd.f32 %v3262, %v3333
        %v3335 = vpop.f32.mrb[0].mxu0
        %3336 = vdwg.mxu0
        %v3337 = vmax.f32 %v3334, 0.0
        %v3338 = vld [vmem:[%s831] sm:$0xff]
        %v3339 = vld [vmem:[%s831 + $0x8] sm:$0xff]
        %v3340 = vld [vmem:[%s831 + $0x10] sm:$0xff]
        %v3341 = vld [vmem:[%s831 + $0x18] sm:$0xff]
        %v3342 = vld [vmem:[%s831 + $0x20] sm:$0xff]
        %v3343 = vld [vmem:[%s831 + $0x28] sm:$0xff]
        %v3344 = vld [vmem:[%s831 + $0x30] sm:$0xff]
        %v3345 = vld [vmem:[%s831 + $0x38] sm:$0xff]
        %v3346 = vld [vmem:[%s834] sm:$0x1]
        %v3348 = vlaneseq
        %v3349 = vshrl.u32 %v3348, 7
        %v3350 = vsub.s32 0, %v3349
        %v3351 = vrot.slane %v3346, %v3350
        %vm3353 = vcmask 523264
        %v3355 = vsel %vm3353, %v3337, 0
        %3357 = vmatprep.subr.mxu0 0.0
        %3358 = vmatpush1.msra.mxu0 %v3338
        %3359 = vmatprep.subr.mxu0 0.0
        %3360 = vmatpush1.msra.mxu0 %v3339
        %3361 = vmatprep.subr.mxu0 0.0
        %3362 = vmatpush1.msra.mxu0 %v3340
        %3363 = vmatprep.subr.mxu0 0.0
        %3364 = vmatpush1.msra.mxu0 %v3341
        %3365 = vmatprep.subr.mxu0 0.0
        %3366 = vmatpush1.msra.mxu0 %v3342
        %3367 = vmatprep.subr.mxu0 0.0
        %3368 = vmatpush1.msra.mxu0 %v3343
        %3369 = vmatprep.subr.mxu0 0.0
        %3370 = vmatpush1.msra.mxu0 %v3344
        %3371 = vmatprep.subr.mxu0 0.0
        %3372 = vmatpush1.msra.mxu0 %v3345
        %3373 = vmatprep.subr.mxu0 0.0
        %3374 = vmatpush1.msra.mxu0 0.0
        %3375 = vmatprep.subr.mxu0 0.0
        %3376 = vmatpush1.msra.mxu0 0.0
        %3377 = vmatprep.subr.mxu0 0.0
        %3378 = vmatpush1.msra.mxu0 0.0
        %3379 = vmatprep.subr.mxu0 0.0
        %3380 = vmatpush1.msra.mxu0 0.0
        %3381 = vmatprep.subr.mxu0 0.0
        %3382 = vmatpush1.msra.mxu0 0.0
        %3383 = vmatprep.subr.mxu0 0.0
        %3384 = vmatpush1.msra.mxu0 0.0
        %3385 = vmatprep.subr.mxu0 0.0
        %3386 = vmatpush1.msra.mxu0 0.0
        %3387 = vmatprep.subr.mxu0 0.0
        %3388 = vmatpush1.msra.mxu0 0.0
        %3389 = vmatprep.subr.mxu0 0.0
        %3390 = vmatpush1.msra.mxu0 0.0
        %3391 = vmatprep.subr.mxu0 0.0
        %3392 = vmatpush1.msra.mxu0 0.0
        %3393 = vmatprep.subr.mxu0 0.0
        %3394 = vmatpush1.msra.mxu0 0.0
        %3395 = vmatprep.subr.mxu0 0.0
        %3396 = vmatpush1.msra.mxu0 0.0
        %3397 = vmatprep.subr.mxu0 0.0
        %3398 = vmatpush1.msra.mxu0 0.0
        %3399 = vmatprep.subr.mxu0 0.0
        %3400 = vmatpush1.msra.mxu0 0.0
        %3401 = vmatprep.subr.mxu0 0.0
        %3402 = vmatpush1.msra.mxu0 0.0
        %3403 = vmatprep.subr.mxu0 0.0
        %3404 = vmatpush1.msra.mxu0 0.0
        %3405 = vmatprep.subr.mxu0 0.0
        %3406 = vmatpush1.msra.mxu0 0.0
        %3407 = vmatprep.subr.mxu0 0.0
        %3408 = vmatpush1.msra.mxu0 0.0
        %3409 = vmatprep.subr.mxu0 0.0
        %3410 = vmatpush1.msra.mxu0 0.0
        %3411 = vmatprep.subr.mxu0 0.0
        %3412 = vmatpush1.msra.mxu0 0.0
        %3413 = vmatprep.subr.mxu0 0.0
        %3414 = vmatpush1.msra.mxu0 0.0
        %3415 = vmatprep.subr.mxu0 0.0
        %3416 = vmatpush1.msra.mxu0 0.0
        %3417 = vmatprep.subr.mxu0 0.0
        %3418 = vmatpush1.msra.mxu0 0.0
        %3419 = vmatprep.subr.mxu0 0.0
        %3420 = vmatpush1.msra.mxu0 0.0
        %3421 = vmatprep.mubr.f32.mxu0 0.0
        %3422 = vmatmul.mubr.f32.gmra.mrb[0].mxu0 %v3355
        %v3423 = vpop.f32.mrb[0].mxu0
        %v3424 = vadd.f32 %v3351, %v3423
        %v3425 = vpop.f32.mrb[0].mxu0
        %3426 = vdwg.mxu0
        %v3427 = vadd.f32 %v3252, %v3424
        %v3428 = vld [vmem:[%s837] sm:$0x1]
        %v3429 = vld [vmem:[%s840] sm:$0x1]
        %v3430 = vsel %vm938, %v3427, 0.0
        %3431 = vadd.xlane.f32.xlu0 %v3430
        %v3432 = vpop.xlane.xlu0 %3431
        %v3433 = vmul.f32 %v3432, %v1984
        %v3434 = vsub.f32 %v3427, %v3433
        %v3435 = vmul.f32 %v3434, %v3434
        %v3436 = vsel %vm938, %v3435, 0.0
        %3437 = vadd.xlane.f32.xlu0 %v3436
        %v3438 = vpop.xlane.xlu0 %3437
        %v3439 = vmul.f32 %v3438, %v1984
        %v3440 = vadd.f32 %v3439, 1e-05
        %v3441 = vrsqrt.pop %v3440
        %v3442 = vmul.f32 %v3434, %v3441
        %v3444 = vlaneseq
        %v3445 = vshrl.u32 %v3444, 7
        %v3446 = vsub.s32 0, %v3445
        %v3447 = vrot.slane %v3428, %v3446
        %v3449 = vmul.f32 %v3442, %v3447
        %v3451 = vlaneseq
        %v3452 = vshrl.u32 %v3451, 7
        %v3453 = vsub.s32 0, %v3452
        %v3454 = vrot.slane %v3429, %v3453
        %v3456 = vadd.f32 %v3449, %v3454
        %3457 = vst.msk [vmem:[#allocation2] sm:$0xff] %vm938, %v3456
        %3458 = vst.msk [vmem:[%s782] sm:$0xff] %vm938, %v3456
        %s3459 = sand.u32 %s446, 1
        %s3460 = scalar_lea.sflag [#allocation5], %s3459
        %s3461 = sand.u32 %s446, 1
        %s3462 = smul.addr %s3461, 8
        %s3463 = scalar_lea.vmem [#allocation9], %s3462
        %s3464 = sand.u32 %s41, 1
        %s3465 = scalar_lea.sflag [#allocation11], %s3464
        %s3466 = sand.u32 %s474, 1
        %s3467 = smul.addr %s3466, 32
        %s3468 = scalar_lea.vmem [#allocation10], %s3467
        %s3469 = sand.u32 %s41, 1
        %s3470 = scalar_lea.sflag [#allocation11], %s3469
        %s3471 = sand.u32 %s502, 1
        %s3472 = smul.addr %s3471, 32
        %s3473 = scalar_lea.vmem [#allocation12], %s3472
        // Predicated region
        $region97: #{tpu_custom_call.1} parent=79 // pred_check
          %p3474 = pneg %p456
        $region98: #{tpu_custom_call.1} parent=79 // pred_check_branch
          %3476 = sbr.rel (%p3474) target = $region100
        $region99: #{tpu_custom_call.1} parent=79 // pred_region
          %s3478 = ssub.s32 128, 128
          %3479 = vsyncadd %s3460, %s3478
          %s3480 = smul.addr %s45, 128
          %s3481 = scalar_lea.hbm %s15, %s3480
          %s3483 = sshll.u32 %s3463, 4
          %s3484 = int_to_ptr.vmem [resolvable:$true] %s3483
          %3486 = dma.vmem_to_hbm [thread:$0]  %s3484, 128, %s3481, %s3460
        $region100: #{tpu_custom_call.1} parent=79 // pred_fallthru
          _
        // Predicated region
        $region101: #{tpu_custom_call.1} parent=79 // pred_check
          %p3487 = pneg %p484
        $region102: #{tpu_custom_call.1} parent=79 // pred_check_branch
          %3489 = sbr.rel (%p3487) target = $region104
        $region103: #{tpu_custom_call.1} parent=79 // pred_region
          %s3490 = smul.u32 4, %s45
          %s3492 = ssub.s32 512, 512
          %3493 = vsyncadd %s3465, %s3492
          %s3494 = smul.addr %s46, 8
          %s3495 = sadd.s32 %s3490, %s3494
          %s3496 = smul.addr %s3495, 128
          %s3497 = scalar_lea.hbm %s16, %s3496
          %s3498 = sshll.u32 %s3468, 4
          %s3499 = int_to_ptr.vmem [resolvable:$true] %s3498
          %3504 = dma.vmem_to_hbm [thread:$0]  %s3499, 512, %s3497, %s3465, 128, 128, 8
        $region104: #{tpu_custom_call.1} parent=79 // pred_fallthru
          _
        // Predicated region
        $region105: #{tpu_custom_call.1} parent=79 // pred_check
          %p3505 = pneg %p512
        $region106: #{tpu_custom_call.1} parent=79 // pred_check_branch
          %3507 = sbr.rel (%p3505) target = $region108
        $region107: #{tpu_custom_call.1} parent=79 // pred_region
          %s3508 = smul.u32 4, %s45
          %s3510 = ssub.s32 512, 512
          %3511 = vsyncadd %s3470, %s3510
          %s3512 = smul.addr %s46, 8
          %s3513 = sadd.s32 %s3508, %s3512
          %s3514 = smul.addr %s3513, 128
          %s3515 = scalar_lea.hbm %s17, %s3514
          %s3516 = sshll.u32 %s3473, 4
          %s3517 = int_to_ptr.vmem [resolvable:$true] %s3516
          %3522 = dma.vmem_to_hbm [thread:$0]  %s3517, 512, %s3515, %s3470, 128, 128, 8
        $region108: #{tpu_custom_call.1} parent=79 // pred_fallthru
          _
      $region80: #{tpu_custom_call.1} parent=5 // pred_fallthru
        _
      %p3523 = scmp.le.s32.totalorder 2, %s36
      // Predicated region
      $region109: #{tpu_custom_call.1} parent=5 // pred_check
        %p3524 = pneg %p3523
      $region110: #{tpu_custom_call.1} parent=5 // pred_check_branch
        %3526 = sbr.rel (%p3524) target = $region112
      $region111: #{tpu_custom_call.1} parent=5 // pred_region
        %s3527 = ssub.s32 %s36, 2
        // Predicated region
        $region113: #{tpu_custom_call.1} parent=111 // pred_check
          %p3528 = pneg %p462
        $region114: #{tpu_custom_call.1} parent=111 // pred_check_branch
          %3530 = sbr.rel (%p3528) target = $region116
        $region115: #{tpu_custom_call.1} parent=111 // pred_region
          %s3531 = sand.u32 %s447, 1
          %s3532 = scalar_lea.sflag [#allocation5], %s3531
          %s3533 = sand.u32 %s447, 1
          %s3534 = smul.addr %s3533, 8
          %s3535 = scalar_lea.vmem [#allocation9], %s3534
          %3536 = dma.done %s3532, 128
        $region116: #{tpu_custom_call.1} parent=111 // pred_fallthru
          _
        // Predicated region
        $region117: #{tpu_custom_call.1} parent=111 // pred_check
          %p3537 = pneg %p490
        $region118: #{tpu_custom_call.1} parent=111 // pred_check_branch
          %3539 = sbr.rel (%p3537) target = $region120
        $region119: #{tpu_custom_call.1} parent=111 // pred_region
          %s3540 = sand.u32 %s42, 1
          %s3541 = scalar_lea.sflag [#allocation11], %s3540
          %s3542 = sand.u32 %s475, 1
          %s3543 = smul.addr %s3542, 32
          %s3544 = scalar_lea.vmem [#allocation10], %s3543
          %3545 = dma.done %s3541, 512
        $region120: #{tpu_custom_call.1} parent=111 // pred_fallthru
          _
        // Predicated region
        $region121: #{tpu_custom_call.1} parent=111 // pred_check
          %p3546 = pneg %p518
        $region122: #{tpu_custom_call.1} parent=111 // pred_check_branch
          %3548 = sbr.rel (%p3546) target = $region124
        $region123: #{tpu_custom_call.1} parent=111 // pred_region
          %s3549 = sand.u32 %s42, 1
          %s3550 = scalar_lea.sflag [#allocation11], %s3549
          %s3551 = sand.u32 %s503, 1
          %s3552 = smul.addr %s3551, 32
          %s3553 = scalar_lea.vmem [#allocation12], %s3552
          %3554 = dma.done %s3550, 512
        $region124: #{tpu_custom_call.1} parent=111 // pred_fallthru
          _
      $region112: #{tpu_custom_call.1} parent=5 // pred_fallthru
        _
    $region6: #{tpu_custom_call.1} parent=1 // loop_footer
      %s40 = sadd.s32 1, %s36
    $region7: #{tpu_custom_call.1} parent=1 // loop_footer_branch
      %35 = sbr.rel target = $region3
    $region8: #{tpu_custom_call.1} parent=1 // loop_exit
      _
    %3555 = vsyncpa [#allocation4], 1
    %s3556 = scalar_lea.sflag [#allocation4], 1
    %3557 = vsyncpa %s3556, 1
    %3558 = vsyncpa [#allocation7], 1
    %s3559 = scalar_lea.sflag [#allocation7], 1
    %3560 = vsyncpa %s3559, 1
    %3561 = vsyncpa [#allocation5], 1
    %s3562 = scalar_lea.sflag [#allocation5], 1
    %3563 = vsyncpa %s3562, 1
    %3564 = vsyncpa [#allocation11], 1
    %s3565 = scalar_lea.sflag [#allocation11], 1
    %3566 = vsyncpa %s3565, 1

</llo_original>
